<compile_context>
chip_gen: v7x
topology: tpu7x:2x2x1
jax: 0.10.0
libtpu: 0.0.40
codegen_flags: <defaults>
</compile_context>

<pallas_src>
import functools

import jax
import jax.numpy as jnp
from jax import lax
from jax.experimental import pallas as pl
from jax.experimental.pallas import tpu as pltpu

LN_EPS = 1e-5


def _layernorm(x, gamma, beta):
    mean = jnp.mean(x, axis=-1, keepdims=True)
    var = jnp.mean((x - mean) ** 2, axis=-1, keepdims=True)
    return (x - mean) * lax.rsqrt(var + LN_EPS) * gamma + beta


def _gelu_exact(x):
    # F.gelu default (exact, erf-based); kept in f32 for numerical parity with PyTorch.
    return 0.5 * x * (1.0 + lax.erf(x * (1.0 / jnp.sqrt(2.0).astype(x.dtype))))


def encoder_layer_kernel(
    x_ref,                   # (1, N, H)        input rows for batch b
    g1_ref, be1_ref,         # (1, H)           LayerNorm-1 gamma / beta (f32)
    wqkv_ref,                # (1, H, g*3*d)    fused per-group QKV weights (scale folded into q cols)
    wo_ref,                  # (1, g, d, H)     per-head rows of the output projection for this group
    g2_ref, be2_ref,         # (1, H)           LayerNorm-2 gamma / beta (f32)
    w1_ref, b1_ref,          # (H, M), (1, M)   MLP proj1
    w2_ref, b2_ref,          # (M, H), (1, H)   MLP proj2
    o_ref,                   # (1, N, H)        output rows for batch b
    xn_scr,                  # VMEM scratch: LN1(x) cached across head groups (compute dtype)
    acc_scr,                 # VMEM scratch: f32 attention-output accumulator across head groups
    *, heads_per_group, head_dim, n_groups, mlp_chunk,
):
    grp = pl.program_id(1)
    f32 = jnp.float32
    cd = wqkv_ref.dtype
    approx_recip = cd != jnp.float32          # EUP reciprocal only on the low-precision path
    d = head_dim

    # ------------- LN1: computed once per batch element, reused by every head group -------------
    if n_groups == 1:
        xn = _layernorm(x_ref[0].astype(f32), g1_ref[...], be1_ref[...]).astype(cd)
    else:
        @pl.when(grp == 0)
        def _ln1():
            xn_scr[...] = _layernorm(x_ref[0].astype(f32),
                                     g1_ref[...], be1_ref[...]).astype(cd)
        xn = xn_scr[...]

    # ------------- fused QKV projection for the whole head group: one wide MXU matmul -------------
    qkv = jnp.dot(xn, wqkv_ref[0], preferred_element_type=f32)          # (N, g*3*d)

    # ------------- per-head attention, chained dot+add into the out-projection -------------
    contrib = None
    for j in range(heads_per_group):
        base = j * 3 * d
        q = qkv[:, base:base + d]                                        # (N, d)  (already scaled)
        k = qkv[:, base + d:base + 2 * d]
        v = qkv[:, base + 2 * d:base + 3 * d]
        s = lax.dot_general(q.astype(cd), k.astype(cd),
                            (((1,), (1,)), ((), ())),
                            preferred_element_type=f32)                  # (N, N)  q @ k^T
        s = s - jnp.max(s, axis=-1, keepdims=True)
        p = jnp.exp(s)
        denom = jnp.sum(p, axis=-1, keepdims=True)
        o_h = jnp.dot(p.astype(cd), v.astype(cd), preferred_element_type=f32)   # (N, d)
        # deferred softmax normalization: scale the (N, d) output, not the (N, N) probs
        if approx_recip:
            o_h = o_h * pl.reciprocal(denom, approx=True)
        else:
            o_h = o_h / denom
        c = jnp.dot(o_h.astype(cd), wo_ref[0, j], preferred_element_type=f32)   # (N, H)
        contrib = c if contrib is None else contrib + c

    # ------------- finalize: residual + pre-LN MLP (GELU after BOTH projections) -------------
    def _finalize(attn_out):
        x = x_ref[0].astype(f32)
        x1 = attn_out + x                                                # attention residual
        xn2 = _layernorm(x1, g2_ref[...], be2_ref[...])
        xn2c = xn2.astype(cd)
        M = w1_ref.shape[1]
        if M > mlp_chunk and M % mlp_chunk == 0 and mlp_chunk % 128 == 0:
            # hidden-dim tiling: bounds the (N, M) live intermediate, keeps matmuls MXU-shaped
            h2 = None
            for c0 in range(0, M, mlp_chunk):
                h1c = jnp.dot(xn2c, w1_ref[:, c0:c0 + mlp_chunk],
                              preferred_element_type=f32) + b1_ref[:, c0:c0 + mlp_chunk]
                h1c = _gelu_exact(h1c)
                part = jnp.dot(h1c.astype(cd), w2_ref[c0:c0 + mlp_chunk, :],
                               preferred_element_type=f32)
                h2 = part if h2 is None else h2 + part
        else:
            h1 = jnp.dot(xn2c, w1_ref[...], preferred_element_type=f32) + b1_ref[...]
            h1 = _gelu_exact(h1)
            h2 = jnp.dot(h1.astype(cd), w2_ref[...], preferred_element_type=f32)
        h2 = h2 + b2_ref[...]
        h2 = _gelu_exact(h2)                                             # spec: GELU after proj2 too
        o_ref[0] = (h2 + x1).astype(o_ref.dtype)                         # MLP residual

    if n_groups == 1:
        _finalize(contrib)
    else:
        last = n_groups - 1

        @pl.when(grp == 0)
        def _acc_init():
            acc_scr[...] = contrib                                       # no zero-init + RMW

        @pl.when(jnp.logical_and(grp > 0, grp < last))
        def _acc_add():
            acc_scr[...] = acc_scr[...] + contrib

        @pl.when(grp == last)
        def _fin():
            _finalize(acc_scr[...] + contrib)                            # last group fused into residual


def _pick_head_group(n_heads, head_dim, lane_target):
    """Smallest divisor g of n_heads with g*head_dim >= min(lane_target, H)."""
    target = min(lane_target, n_heads * head_dim)
    for g in range(1, n_heads + 1):
        if n_heads % g == 0 and g * head_dim >= target:
            return g
    return n_heads


def _default_vmem_limit_bytes():
    # ~85% of physical VMEM, leaving headroom for compiler-internal scratch:
    # v5e/v6e (128 MiB) -> ~108 MiB, v7x (64 MiB) -> ~48 MiB.
    try:
        cap = int(pltpu.get_tpu_info().vmem_capacity_bytes)
        return max(32 * 1024 * 1024, min(cap - 16 * 1024 * 1024, int(cap * 0.85)))
    except Exception:
        return 64 * 1024 * 1024


def transformer_encoder_layer(x, params, *, n_heads,
                              compute_dtype=jnp.bfloat16,
                              mxu_lane_target=256,   # 128 suffices on v5e; 256 sizes for v6e/v7x
                              mlp_chunk=1024,
                              vmem_limit_bytes=None):
    B, N, H = x.shape
    M = params["w1"].shape[1]
    assert H % n_heads == 0
    d = H // n_heads
    cd = compute_dtype
    f32 = jnp.float32

    g = _pick_head_group(n_heads, d, mxu_lane_target)
    n_groups = n_heads // g
    if vmem_limit_bytes is None:
        vmem_limit_bytes = _default_vmem_limit_bytes()

    # ---- host/XLA-side (free) weight re-layout: fused per-group QKV with 1/sqrt(d) folded into q ----
    scale = 1.0 / (float(d) ** 0.5)
    wqkv = params["wqkv"].astype(f32)                                    # (H, 3H) = [q | k | v]
    wq = wqkv[:, 0 * H:1 * H].reshape(H, n_heads, d) * scale
    wk = wqkv[:, 1 * H:2 * H].reshape(H, n_heads, d)
    wv = wqkv[:, 2 * H:3 * H].reshape(H, n_heads, d)
    fused = jnp.stack([wq, wk, wv], axis=2)                              # (H, nh, 3, d)
    fused = jnp.transpose(fused, (1, 0, 2, 3))                           # (nh, H, 3, d)
    fused = fused.reshape(n_groups, g, H, 3 * d)
    fused = jnp.transpose(fused, (0, 2, 1, 3)).reshape(n_groups, H, g * 3 * d).astype(cd)

    wo4 = params["wout"].astype(f32).reshape(n_heads, d, H).reshape(n_groups, g, d, H).astype(cd)

    w1 = params["w1"].astype(cd)
    w2 = params["w2"].astype(cd)
    g1 = params["g1"].reshape(1, H).astype(f32)
    be1 = params["be1"].reshape(1, H).astype(f32)
    g2 = params["g2"].reshape(1, H).astype(f32)
    be2 = params["be2"].reshape(1, H).astype(f32)
    b1 = params["b1"].reshape(1, M).astype(f32)
    b2 = params["b2"].reshape(1, H).astype(f32)

    kernel = functools.partial(encoder_layer_kernel,
                               heads_per_group=g, head_dim=d,
                               n_groups=n_groups, mlp_chunk=mlp_chunk)

    # Scratches are only touched when heads span multiple grid steps.
    scr_shape = (N, H) if n_groups > 1 else (8, 128)
    scratch_shapes = [pltpu.VMEM(scr_shape, cd),           # LN1(x) cache
                      pltpu.VMEM(scr_shape, jnp.float32)]  # attention-output accumulator

    def build_and_run(single_buffer_consts):
        if single_buffer_consts and hasattr(pl, "Buffered"):
            def const(shape):
                # grid-invariant operands: single-buffered (halves their VMEM footprint)
                return pl.BlockSpec(shape, lambda b, gi: (0,) * len(shape),
                                    pipeline_mode=pl.Buffered(1))
        else:
            def const(shape):
                return pl.BlockSpec(shape, lambda b, gi: (0,) * len(shape))

        grid_spec = pltpu.PrefetchScalarGridSpec(
            num_scalar_prefetch=0,
            grid=(B, n_groups),   # head-group axis must stay innermost + "arbitrary"
            in_specs=[
                pl.BlockSpec((1, N, H), lambda b, gi: (b, 0, 0)),               # x
                const((1, H)), const((1, H)),                                   # LN1 gamma/beta
                pl.BlockSpec((1, H, g * 3 * d), lambda b, gi: (gi, 0, 0)),      # fused QKV (per group)
                pl.BlockSpec((1, g, d, H), lambda b, gi: (gi, 0, 0, 0)),        # out-proj rows (per group)
                const((1, H)), const((1, H)),                                   # LN2 gamma/beta
                const((H, M)), const((1, M)),                                   # MLP proj1 W, b
                const((M, H)), const((1, H)),                                   # MLP proj2 W, b
            ],
            out_specs=pl.BlockSpec((1, N, H), lambda b, gi: (b, 0, 0)),
            scratch_shapes=scratch_shapes,
        )
        return pl.pallas_call(
            kernel,
            out_shape=jax.ShapeDtypeStruct((B, N, H), x.dtype),
            grid_spec=grid_spec,
            compiler_params=pltpu.CompilerParams(
                dimension_semantics=("parallel", "arbitrary"),
                vmem_limit_bytes=vmem_limit_bytes,
            ),
        )(x, g1, be1, fused, wo4, g2, be2, w1, b1, w2, b2)

    try:
        return build_and_run(True)
    except Exception:
        # Fallback: default double-buffering if this JAX/Mosaic build rejects
        # pipeline_mode=pl.Buffered(1) on pallas_call BlockSpecs.
        return build_and_run(False)


# -------------------- pure-JAX reference for verification --------------------
def reference(x, params, *, n_heads):
    B, N, H = x.shape
    d = H // n_heads

    def ln(v, g, b):
        m = jnp.mean(v, -1, keepdims=True)
        var = jnp.mean((v - m) ** 2, -1, keepdims=True)
        return (v - m) / jnp.sqrt(var + LN_EPS) * g + b

    xn = ln(x, params["g1"], params["be1"])
    qkv = xn @ params["wqkv"]
    q, k, v = jnp.split(qkv, 3, axis=-1)
    rs = lambda t: t.reshape(B, N, n_heads, d).transpose(0, 2, 1, 3)
    q, k, v = rs(q), rs(k), rs(v)
    s = jnp.einsum("bhnd,bhmd->bhnm", q, k) / jnp.sqrt(jnp.float32(d))
    p = jax.nn.softmax(s, axis=-1)
    a = jnp.einsum("bhnm,bhmd->bhnd", p, v).transpose(0, 2, 1, 3).reshape(B, N, H)
    x1 = a @ params["wout"] + x

    xn2 = ln(x1, params["g2"], params["be2"])
    h1 = jax.nn.gelu(xn2 @ params["w1"] + params["b1"], approximate=False)
    h2 = jax.nn.gelu(h1 @ params["w2"] + params["b2"], approximate=False)
    return h2 + x1


if __name__ == "__main__":
    B, N, H, M, n_heads = 2, 16, 128, 256, 4
    key = jax.random.PRNGKey(0)
    ks = jax.random.split(key, 11)

    params = {
        "wqkv": jax.random.normal(ks[0], (H, 3 * H), jnp.float32) * 0.02,
        "wout": jax.random.normal(ks[1], (H, H), jnp.float32) * 0.02,
        "g1": 1.0 + 0.1 * jax.random.normal(ks[2], (H,), jnp.float32),
        "be1": 0.1 * jax.random.normal(ks[3], (H,), jnp.float32),
        "g2": 1.0 + 0.1 * jax.random.normal(ks[4], (H,), jnp.float32),
        "be2": 0.1 * jax.random.normal(ks[5], (H,), jnp.float32),
        "w1": jax.random.normal(ks[6], (H, M), jnp.float32) * 0.02,
        "b1": jax.random.normal(ks[7], (M,), jnp.float32) * 0.02,
        "w2": jax.random.normal(ks[8], (M, H), jnp.float32) * 0.02,
        "b2": jax.random.normal(ks[9], (H,), jnp.float32) * 0.02,
    }
    x = jax.random.normal(ks[10], (B, N, H), jnp.float32)

    ref = reference(x, params, n_heads=n_heads)

    # f32 compute path: tight check against the f32 reference.
    out_f32 = jax.block_until_ready(
        transformer_encoder_layer(x, params, n_heads=n_heads, compute_dtype=jnp.float32))
    assert out_f32.shape == (B, N, H)
    err32 = float(jnp.max(jnp.abs(out_f32 - ref)))
    assert jnp.allclose(out_f32, ref, atol=2e-3, rtol=2e-3), f"f32 max err {err32}"

    # bf16 compute path (default / fast): tolerance consistent with bf16 matmuls.
    out_bf16 = jax.block_until_ready(
        transformer_encoder_layer(x, params, n_heads=n_heads, compute_dtype=jnp.bfloat16))
    errbf = float(jnp.max(jnp.abs(out_bf16 - ref)))
    assert jnp.allclose(out_bf16, ref, atol=3e-2, rtol=3e-2), f"bf16 max err {errbf}"

    print("KERNEL_OK")
</pallas_src>

<mosaic_0001>
module attributes {stable_mosaic.version = 11 : i64} {
  func.func @encoder_layer_kernel(%arg0: i32, %arg1: i32, %arg2: memref<1x16x128xf32, #tpu.memory_space<vmem>>, %arg3: memref<1x128xf32, #tpu.memory_space<vmem>>, %arg4: memref<1x128xf32, #tpu.memory_space<vmem>>, %arg5: memref<1x128x384xf32, #tpu.memory_space<vmem>>, %arg6: memref<1x4x32x128xf32, #tpu.memory_space<vmem>>, %arg7: memref<1x128xf32, #tpu.memory_space<vmem>>, %arg8: memref<1x128xf32, #tpu.memory_space<vmem>>, %arg9: memref<128x256xf32, #tpu.memory_space<vmem>>, %arg10: memref<1x256xf32, #tpu.memory_space<vmem>>, %arg11: memref<256x128xf32, #tpu.memory_space<vmem>>, %arg12: memref<1x128xf32, #tpu.memory_space<vmem>>, %arg13: memref<1x16x128xf32, #tpu.memory_space<vmem>>, %arg14: memref<8x128xf32, #tpu.memory_space<vmem>>, %arg15: memref<8x128xf32, #tpu.memory_space<vmem>>) attributes {dimension_semantics = [#tpu.dimension_semantics<parallel>, #tpu.dimension_semantics<arbitrary>], iteration_bounds = array<i64: 2, 1>, scalar_prefetch = 0 : i64, scratch_operands = 2 : i64, tpu.core_type = #tpu.core_type<tc>, window_params = [{transform_indices = @transform_0, window_bounds = array<i64: 1, 16, 128>}, {pipeline_mode = #tpu.pipeline_mode<synchronous>, transform_indices = @transform_1, window_bounds = array<i64: 1, 128>}, {pipeline_mode = #tpu.pipeline_mode<synchronous>, transform_indices = @transform_2, window_bounds = array<i64: 1, 128>}, {transform_indices = @transform_3, window_bounds = array<i64: 1, 128, 384>}, {transform_indices = @transform_4, window_bounds = array<i64: 1, 4, 32, 128>}, {pipeline_mode = #tpu.pipeline_mode<synchronous>, transform_indices = @transform_5, window_bounds = array<i64: 1, 128>}, {pipeline_mode = #tpu.pipeline_mode<synchronous>, transform_indices = @transform_6, window_bounds = array<i64: 1, 128>}, {pipeline_mode = #tpu.pipeline_mode<synchronous>, transform_indices = @transform_7, window_bounds = array<i64: 128, 256>}, {pipeline_mode = #tpu.pipeline_mode<synchronous>, transform_indices = @transform_8, window_bounds = array<i64: 1, 256>}, {pipeline_mode = #tpu.pipeline_mode<synchronous>, transform_indices = @transform_9, window_bounds = array<i64: 256, 128>}, {pipeline_mode = #tpu.pipeline_mode<synchronous>, transform_indices = @transform_10, window_bounds = array<i64: 1, 128>}, {transform_indices = @transform_11, window_bounds = array<i64: 1, 16, 128>}]} {
    %c0 = arith.constant 0 : index
    %c0_0 = arith.constant 0 : index
    %c0_1 = arith.constant 0 : index
    %0 = vector.load %arg2[%c0, %c0_0, %c0_1] : memref<1x16x128xf32, #tpu.memory_space<vmem>>, vector<1x16x128xf32>
    %1 = vector.shape_cast %0 : vector<1x16x128xf32> to vector<16x128xf32>
    %c0_2 = arith.constant 0 : index
    %c0_3 = arith.constant 0 : index
    %2 = vector.load %arg3[%c0_2, %c0_3] : memref<1x128xf32, #tpu.memory_space<vmem>>, vector<1x128xf32>
    %c0_4 = arith.constant 0 : index
    %c0_5 = arith.constant 0 : index
    %3 = vector.load %arg4[%c0_4, %c0_5] : memref<1x128xf32, #tpu.memory_space<vmem>>, vector<1x128xf32>
    %cst = arith.constant dense<0.000000e+00> : vector<16xf32>
    %4 = vector.multi_reduction <add>, %1, %cst [1] : vector<16x128xf32> to vector<16xf32>
    %5 = vector.shape_cast %4 : vector<16xf32> to vector<16x1xf32>
    %cst_6 = arith.constant 1.280000e+02 : f32
    %6 = vector.broadcast %cst_6 : f32 to vector<16x1xf32>
    %7 = arith.divf %5, %6 : vector<16x1xf32>
    %8 = vector.broadcast %7 : vector<16x1xf32> to vector<16x128xf32>
    %9 = arith.subf %1, %8 : vector<16x128xf32>
    %10 = arith.mulf %9, %9 : vector<16x128xf32>
    %cst_7 = arith.constant dense<0.000000e+00> : vector<16xf32>
    %11 = vector.multi_reduction <add>, %10, %cst_7 [1] : vector<16x128xf32> to vector<16xf32>
    %12 = vector.shape_cast %11 : vector<16xf32> to vector<16x1xf32>
    %cst_8 = arith.constant 1.280000e+02 : f32
    %13 = vector.broadcast %cst_8 : f32 to vector<16x1xf32>
    %14 = arith.divf %12, %13 : vector<16x1xf32>
    %15 = vector.broadcast %7 : vector<16x1xf32> to vector<16x128xf32>
    %16 = arith.subf %1, %15 : vector<16x128xf32>
    %cst_9 = arith.constant 9.99999974E-6 : f32
    %17 = vector.broadcast %cst_9 : f32 to vector<16x1xf32>
    %18 = arith.addf %14, %17 : vector<16x1xf32>
    %19 = math.rsqrt %18 : vector<16x1xf32>
    %20 = vector.broadcast %19 : vector<16x1xf32> to vector<16x128xf32>
    %21 = arith.mulf %16, %20 : vector<16x128xf32>
    %22 = vector.broadcast %2 : vector<1x128xf32> to vector<16x128xf32>
    %23 = arith.mulf %21, %22 : vector<16x128xf32>
    %24 = vector.broadcast %3 : vector<1x128xf32> to vector<16x128xf32>
    %25 = arith.addf %23, %24 : vector<16x128xf32>
    %c0_10 = arith.constant 0 : index
    %c0_11 = arith.constant 0 : index
    %c0_12 = arith.constant 0 : index
    %26 = vector.load %arg5[%c0_10, %c0_11, %c0_12] : memref<1x128x384xf32, #tpu.memory_space<vmem>>, vector<1x128x384xf32>
    %27 = vector.shape_cast %26 : vector<1x128x384xf32> to vector<128x384xf32>
    %cst_13 = arith.constant dense<0.000000e+00> : vector<16x384xf32>
    %28 = tpu.matmul %25, %27, %cst_13 {dimension_numbers = #tpu.dot_dimension_numbers<[1], [0], [0], [1], [0, 0, 1, 1], [], []>} : vector<16x128xf32>, vector<128x384xf32>, vector<16x384xf32> -> vector<16x384xf32>
    %29 = vector.extract_strided_slice %28 {offsets = [0, 0], sizes = [16, 32], strides = [1, 1]} : vector<16x384xf32> to vector<16x32xf32>
    %30 = vector.extract_strided_slice %28 {offsets = [0, 32], sizes = [16, 32], strides = [1, 1]} : vector<16x384xf32> to vector<16x32xf32>
    %31 = vector.extract_strided_slice %28 {offsets = [0, 64], sizes = [16, 32], strides = [1, 1]} : vector<16x384xf32> to vector<16x32xf32>
    %cst_14 = arith.constant dense<0.000000e+00> : vector<16x16xf32>
    %32 = tpu.matmul %29, %30, %cst_14 {dimension_numbers = #tpu.dot_dimension_numbers<[1], [1], [0], [0], [0, 0, 1, 0], [], []>} : vector<16x32xf32>, vector<16x32xf32>, vector<16x16xf32> -> vector<16x16xf32>
    %cst_15 = arith.constant dense<0xFF800000> : vector<16xf32>
    %33 = vector.multi_reduction <maximumf>, %32, %cst_15 [1] : vector<16x16xf32> to vector<16xf32>
    %34 = vector.shape_cast %33 : vector<16xf32> to vector<16x1xf32>
    %35 = vector.broadcast %34 : vector<16x1xf32> to vector<16x16xf32>
    %36 = arith.subf %32, %35 : vector<16x16xf32>
    %37 = math.exp %36 : vector<16x16xf32>
    %cst_16 = arith.constant dense<0.000000e+00> : vector<16xf32>
    %38 = vector.multi_reduction <add>, %37, %cst_16 [1] : vector<16x16xf32> to vector<16xf32>
    %39 = vector.shape_cast %38 : vector<16xf32> to vector<16x1xf32>
    %cst_17 = arith.constant dense<0.000000e+00> : vector<16x32xf32>
    %40 = tpu.matmul %37, %31, %cst_17 {dimension_numbers = #tpu.dot_dimension_numbers<[1], [0], [0], [1], [0, 0, 1, 1], [], []>} : vector<16x16xf32>, vector<16x32xf32>, vector<16x32xf32> -> vector<16x32xf32>
    %41 = vector.broadcast %39 : vector<16x1xf32> to vector<16x32xf32>
    %42 = arith.divf %40, %41 : vector<16x32xf32>
    %c0_18 = arith.constant 0 : index
    %c0_19 = arith.constant 0 : index
    %c0_20 = arith.constant 0 : index
    %c0_21 = arith.constant 0 : index
    %43 = vector.load %arg6[%c0_18, %c0_19, %c0_20, %c0_21] : memref<1x4x32x128xf32, #tpu.memory_space<vmem>>, vector<1x1x32x128xf32>
    %44 = vector.shape_cast %43 : vector<1x1x32x128xf32> to vector<32x128xf32>
    %cst_22 = arith.constant dense<0.000000e+00> : vector<16x128xf32>
    %45 = tpu.matmul %42, %44, %cst_22 {dimension_numbers = #tpu.dot_dimension_numbers<[1], [0], [0], [1], [0, 0, 1, 1], [], []>} : vector<16x32xf32>, vector<32x128xf32>, vector<16x128xf32> -> vector<16x128xf32>
    %46 = vector.extract_strided_slice %28 {offsets = [0, 96], sizes = [16, 32], strides = [1, 1]} : vector<16x384xf32> to vector<16x32xf32>
    %47 = vector.extract_strided_slice %28 {offsets = [0, 128], sizes = [16, 32], strides = [1, 1]} : vector<16x384xf32> to vector<16x32xf32>
    %48 = vector.extract_strided_slice %28 {offsets = [0, 160], sizes = [16, 32], strides = [1, 1]} : vector<16x384xf32> to vector<16x32xf32>
    %cst_23 = arith.constant dense<0.000000e+00> : vector<16x16xf32>
    %49 = tpu.matmul %46, %47, %cst_23 {dimension_numbers = #tpu.dot_dimension_numbers<[1], [1], [0], [0], [0, 0, 1, 0], [], []>} : vector<16x32xf32>, vector<16x32xf32>, vector<16x16xf32> -> vector<16x16xf32>
    %cst_24 = arith.constant dense<0xFF800000> : vector<16xf32>
    %50 = vector.multi_reduction <maximumf>, %49, %cst_24 [1] : vector<16x16xf32> to vector<16xf32>
    %51 = vector.shape_cast %50 : vector<16xf32> to vector<16x1xf32>
    %52 = vector.broadcast %51 : vector<16x1xf32> to vector<16x16xf32>
    %53 = arith.subf %49, %52 : vector<16x16xf32>
    %54 = math.exp %53 : vector<16x16xf32>
    %cst_25 = arith.constant dense<0.000000e+00> : vector<16xf32>
    %55 = vector.multi_reduction <add>, %54, %cst_25 [1] : vector<16x16xf32> to vector<16xf32>
    %56 = vector.shape_cast %55 : vector<16xf32> to vector<16x1xf32>
    %cst_26 = arith.constant dense<0.000000e+00> : vector<16x32xf32>
    %57 = tpu.matmul %54, %48, %cst_26 {dimension_numbers = #tpu.dot_dimension_numbers<[1], [0], [0], [1], [0, 0, 1, 1], [], []>} : vector<16x16xf32>, vector<16x32xf32>, vector<16x32xf32> -> vector<16x32xf32>
    %58 = vector.broadcast %56 : vector<16x1xf32> to vector<16x32xf32>
    %59 = arith.divf %57, %58 : vector<16x32xf32>
    %c0_27 = arith.constant 0 : index
    %c1 = arith.constant 1 : index
    %c0_28 = arith.constant 0 : index
    %c0_29 = arith.constant 0 : index
    %60 = vector.load %arg6[%c0_27, %c1, %c0_28, %c0_29] : memref<1x4x32x128xf32, #tpu.memory_space<vmem>>, vector<1x1x32x128xf32>
    %61 = vector.shape_cast %60 : vector<1x1x32x128xf32> to vector<32x128xf32>
    %cst_30 = arith.constant dense<0.000000e+00> : vector<16x128xf32>
    %62 = tpu.matmul %59, %61, %cst_30 {dimension_numbers = #tpu.dot_dimension_numbers<[1], [0], [0], [1], [0, 0, 1, 1], [], []>} : vector<16x32xf32>, vector<32x128xf32>, vector<16x128xf32> -> vector<16x128xf32>
    %63 = arith.addf %45, %62 : vector<16x128xf32>
    %64 = vector.extract_strided_slice %28 {offsets = [0, 192], sizes = [16, 32], strides = [1, 1]} : vector<16x384xf32> to vector<16x32xf32>
    %65 = vector.extract_strided_slice %28 {offsets = [0, 224], sizes = [16, 32], strides = [1, 1]} : vector<16x384xf32> to vector<16x32xf32>
    %66 = vector.extract_strided_slice %28 {offsets = [0, 256], sizes = [16, 32], strides = [1, 1]} : vector<16x384xf32> to vector<16x32xf32>
    %cst_31 = arith.constant dense<0.000000e+00> : vector<16x16xf32>
    %67 = tpu.matmul %64, %65, %cst_31 {dimension_numbers = #tpu.dot_dimension_numbers<[1], [1], [0], [0], [0, 0, 1, 0], [], []>} : vector<16x32xf32>, vector<16x32xf32>, vector<16x16xf32> -> vector<16x16xf32>
    %cst_32 = arith.constant dense<0xFF800000> : vector<16xf32>
    %68 = vector.multi_reduction <maximumf>, %67, %cst_32 [1] : vector<16x16xf32> to vector<16xf32>
    %69 = vector.shape_cast %68 : vector<16xf32> to vector<16x1xf32>
    %70 = vector.broadcast %69 : vector<16x1xf32> to vector<16x16xf32>
    %71 = arith.subf %67, %70 : vector<16x16xf32>
    %72 = math.exp %71 : vector<16x16xf32>
    %cst_33 = arith.constant dense<0.000000e+00> : vector<16xf32>
    %73 = vector.multi_reduction <add>, %72, %cst_33 [1] : vector<16x16xf32> to vector<16xf32>
    %74 = vector.shape_cast %73 : vector<16xf32> to vector<16x1xf32>
    %cst_34 = arith.constant dense<0.000000e+00> : vector<16x32xf32>
    %75 = tpu.matmul %72, %66, %cst_34 {dimension_numbers = #tpu.dot_dimension_numbers<[1], [0], [0], [1], [0, 0, 1, 1], [], []>} : vector<16x16xf32>, vector<16x32xf32>, vector<16x32xf32> -> vector<16x32xf32>
    %76 = vector.broadcast %74 : vector<16x1xf32> to vector<16x32xf32>
    %77 = arith.divf %75, %76 : vector<16x32xf32>
    %c0_35 = arith.constant 0 : index
    %c2 = arith.constant 2 : index
    %c0_36 = arith.constant 0 : index
    %c0_37 = arith.constant 0 : index
    %78 = vector.load %arg6[%c0_35, %c2, %c0_36, %c0_37] : memref<1x4x32x128xf32, #tpu.memory_space<vmem>>, vector<1x1x32x128xf32>
    %79 = vector.shape_cast %78 : vector<1x1x32x128xf32> to vector<32x128xf32>
    %cst_38 = arith.constant dense<0.000000e+00> : vector<16x128xf32>
    %80 = tpu.matmul %77, %79, %cst_38 {dimension_numbers = #tpu.dot_dimension_numbers<[1], [0], [0], [1], [0, 0, 1, 1], [], []>} : vector<16x32xf32>, vector<32x128xf32>, vector<16x128xf32> -> vector<16x128xf32>
    %81 = arith.addf %63, %80 : vector<16x128xf32>
    %82 = vector.extract_strided_slice %28 {offsets = [0, 288], sizes = [16, 32], strides = [1, 1]} : vector<16x384xf32> to vector<16x32xf32>
    %83 = vector.extract_strided_slice %28 {offsets = [0, 320], sizes = [16, 32], strides = [1, 1]} : vector<16x384xf32> to vector<16x32xf32>
    %84 = vector.extract_strided_slice %28 {offsets = [0, 352], sizes = [16, 32], strides = [1, 1]} : vector<16x384xf32> to vector<16x32xf32>
    %cst_39 = arith.constant dense<0.000000e+00> : vector<16x16xf32>
    %85 = tpu.matmul %82, %83, %cst_39 {dimension_numbers = #tpu.dot_dimension_numbers<[1], [1], [0], [0], [0, 0, 1, 0], [], []>} : vector<16x32xf32>, vector<16x32xf32>, vector<16x16xf32> -> vector<16x16xf32>
    %cst_40 = arith.constant dense<0xFF800000> : vector<16xf32>
    %86 = vector.multi_reduction <maximumf>, %85, %cst_40 [1] : vector<16x16xf32> to vector<16xf32>
    %87 = vector.shape_cast %86 : vector<16xf32> to vector<16x1xf32>
    %88 = vector.broadcast %87 : vector<16x1xf32> to vector<16x16xf32>
    %89 = arith.subf %85, %88 : vector<16x16xf32>
    %90 = math.exp %89 : vector<16x16xf32>
    %cst_41 = arith.constant dense<0.000000e+00> : vector<16xf32>
    %91 = vector.multi_reduction <add>, %90, %cst_41 [1] : vector<16x16xf32> to vector<16xf32>
    %92 = vector.shape_cast %91 : vector<16xf32> to vector<16x1xf32>
    %cst_42 = arith.constant dense<0.000000e+00> : vector<16x32xf32>
    %93 = tpu.matmul %90, %84, %cst_42 {dimension_numbers = #tpu.dot_dimension_numbers<[1], [0], [0], [1], [0, 0, 1, 1], [], []>} : vector<16x16xf32>, vector<16x32xf32>, vector<16x32xf32> -> vector<16x32xf32>
    %94 = vector.broadcast %92 : vector<16x1xf32> to vector<16x32xf32>
    %95 = arith.divf %93, %94 : vector<16x32xf32>
    %c0_43 = arith.constant 0 : index
    %c3 = arith.constant 3 : index
    %c0_44 = arith.constant 0 : index
    %c0_45 = arith.constant 0 : index
    %96 = vector.load %arg6[%c0_43, %c3, %c0_44, %c0_45] : memref<1x4x32x128xf32, #tpu.memory_space<vmem>>, vector<1x1x32x128xf32>
    %97 = vector.shape_cast %96 : vector<1x1x32x128xf32> to vector<32x128xf32>
    %cst_46 = arith.constant dense<0.000000e+00> : vector<16x128xf32>
    %98 = tpu.matmul %95, %97, %cst_46 {dimension_numbers = #tpu.dot_dimension_numbers<[1], [0], [0], [1], [0, 0, 1, 1], [], []>} : vector<16x32xf32>, vector<32x128xf32>, vector<16x128xf32> -> vector<16x128xf32>
    %99 = arith.addf %81, %98 : vector<16x128xf32>
    %c0_47 = arith.constant 0 : index
    %c0_48 = arith.constant 0 : index
    %c0_49 = arith.constant 0 : index
    %100 = vector.load %arg2[%c0_47, %c0_48, %c0_49] : memref<1x16x128xf32, #tpu.memory_space<vmem>>, vector<1x16x128xf32>
    %101 = vector.shape_cast %100 : vector<1x16x128xf32> to vector<16x128xf32>
    %102 = arith.addf %99, %101 : vector<16x128xf32>
    %c0_50 = arith.constant 0 : index
    %c0_51 = arith.constant 0 : index
    %103 = vector.load %arg7[%c0_50, %c0_51] : memref<1x128xf32, #tpu.memory_space<vmem>>, vector<1x128xf32>
    %c0_52 = arith.constant 0 : index
    %c0_53 = arith.constant 0 : index
    %104 = vector.load %arg8[%c0_52, %c0_53] : memref<1x128xf32, #tpu.memory_space<vmem>>, vector<1x128xf32>
    %cst_54 = arith.constant dense<0.000000e+00> : vector<16xf32>
    %105 = vector.multi_reduction <add>, %102, %cst_54 [1] : vector<16x128xf32> to vector<16xf32>
    %106 = vector.shape_cast %105 : vector<16xf32> to vector<16x1xf32>
    %cst_55 = arith.constant 1.280000e+02 : f32
    %107 = vector.broadcast %cst_55 : f32 to vector<16x1xf32>
    %108 = arith.divf %106, %107 : vector<16x1xf32>
    %109 = vector.broadcast %108 : vector<16x1xf32> to vector<16x128xf32>
    %110 = arith.subf %102, %109 : vector<16x128xf32>
    %111 = arith.mulf %110, %110 : vector<16x128xf32>
    %cst_56 = arith.constant dense<0.000000e+00> : vector<16xf32>
    %112 = vector.multi_reduction <add>, %111, %cst_56 [1] : vector<16x128xf32> to vector<16xf32>
    %113 = vector.shape_cast %112 : vector<16xf32> to vector<16x1xf32>
    %cst_57 = arith.constant 1.280000e+02 : f32
    %114 = vector.broadcast %cst_57 : f32 to vector<16x1xf32>
    %115 = arith.divf %113, %114 : vector<16x1xf32>
    %116 = vector.broadcast %108 : vector<16x1xf32> to vector<16x128xf32>
    %117 = arith.subf %102, %116 : vector<16x128xf32>
    %cst_58 = arith.constant 9.99999974E-6 : f32
    %118 = vector.broadcast %cst_58 : f32 to vector<16x1xf32>
    %119 = arith.addf %115, %118 : vector<16x1xf32>
    %120 = math.rsqrt %119 : vector<16x1xf32>
    %121 = vector.broadcast %120 : vector<16x1xf32> to vector<16x128xf32>
    %122 = arith.mulf %117, %121 : vector<16x128xf32>
    %123 = vector.broadcast %103 : vector<1x128xf32> to vector<16x128xf32>
    %124 = arith.mulf %122, %123 : vector<16x128xf32>
    %125 = vector.broadcast %104 : vector<1x128xf32> to vector<16x128xf32>
    %126 = arith.addf %124, %125 : vector<16x128xf32>
    %c0_59 = arith.constant 0 : index
    %c0_60 = arith.constant 0 : index
    %127 = vector.load %arg9[%c0_59, %c0_60] : memref<128x256xf32, #tpu.memory_space<vmem>>, vector<128x256xf32>
    %cst_61 = arith.constant dense<0.000000e+00> : vector<16x256xf32>
    %128 = tpu.matmul %126, %127, %cst_61 {dimension_numbers = #tpu.dot_dimension_numbers<[1], [0], [0], [1], [0, 0, 1, 1], [], []>} : vector<16x128xf32>, vector<128x256xf32>, vector<16x256xf32> -> vector<16x256xf32>
    %c0_62 = arith.constant 0 : index
    %c0_63 = arith.constant 0 : index
    %129 = vector.load %arg10[%c0_62, %c0_63] : memref<1x256xf32, #tpu.memory_space<vmem>>, vector<1x256xf32>
    %130 = vector.broadcast %129 : vector<1x256xf32> to vector<16x256xf32>
    %131 = arith.addf %128, %130 : vector<16x256xf32>
    %cst_64 = arith.constant 5.000000e-01 : f32
    %132 = vector.broadcast %cst_64 : f32 to vector<16x256xf32>
    %133 = arith.mulf %132, %131 : vector<16x256xf32>
    %cst_65 = arith.constant 2.000000e+00 : f32
    %134 = math.sqrt %cst_65 : f32
    %cst_66 = arith.constant 1.000000e+00 : f32
    %135 = arith.divf %cst_66, %134 : f32
    %136 = vector.broadcast %135 : f32 to vector<16x256xf32>
    %137 = arith.mulf %131, %136 : vector<16x256xf32>
    %138 = math.erf %137 : vector<16x256xf32>
    %cst_67 = arith.constant 1.000000e+00 : f32
    %139 = vector.broadcast %cst_67 : f32 to vector<16x256xf32>
    %140 = arith.addf %139, %138 : vector<16x256xf32>
    %141 = arith.mulf %133, %140 : vector<16x256xf32>
    %c0_68 = arith.constant 0 : index
    %c0_69 = arith.constant 0 : index
    %142 = vector.load %arg11[%c0_68, %c0_69] : memref<256x128xf32, #tpu.memory_space<vmem>>, vector<256x128xf32>
    %cst_70 = arith.constant dense<0.000000e+00> : vector<16x128xf32>
    %143 = tpu.matmul %141, %142, %cst_70 {dimension_numbers = #tpu.dot_dimension_numbers<[1], [0], [0], [1], [0, 0, 1, 1], [], []>} : vector<16x256xf32>, vector<256x128xf32>, vector<16x128xf32> -> vector<16x128xf32>
    %c0_71 = arith.constant 0 : index
    %c0_72 = arith.constant 0 : index
    %144 = vector.load %arg12[%c0_71, %c0_72] : memref<1x128xf32, #tpu.memory_space<vmem>>, vector<1x128xf32>
    %145 = vector.broadcast %144 : vector<1x128xf32> to vector<16x128xf32>
    %146 = arith.addf %143, %145 : vector<16x128xf32>
    %cst_73 = arith.constant 5.000000e-01 : f32
    %147 = vector.broadcast %cst_73 : f32 to vector<16x128xf32>
    %148 = arith.mulf %147, %146 : vector<16x128xf32>
    %cst_74 = arith.constant 2.000000e+00 : f32
    %149 = math.sqrt %cst_74 : f32
    %cst_75 = arith.constant 1.000000e+00 : f32
    %150 = arith.divf %cst_75, %149 : f32
    %151 = vector.broadcast %150 : f32 to vector<16x128xf32>
    %152 = arith.mulf %146, %151 : vector<16x128xf32>
    %153 = math.erf %152 : vector<16x128xf32>
    %cst_76 = arith.constant 1.000000e+00 : f32
    %154 = vector.broadcast %cst_76 : f32 to vector<16x128xf32>
    %155 = arith.addf %154, %153 : vector<16x128xf32>
    %156 = arith.mulf %148, %155 : vector<16x128xf32>
    %157 = arith.addf %156, %102 : vector<16x128xf32>
    %c0_77 = arith.constant 0 : index
    %c0_78 = arith.constant 0 : index
    %c0_79 = arith.constant 0 : index
    %158 = vector.load %arg13[%c0_77, %c0_78, %c0_79] : memref<1x16x128xf32, #tpu.memory_space<vmem>>, vector<1x16x128xf32>
    %159 = vector.shape_cast %158 : vector<1x16x128xf32> to vector<16x128xf32>
    %160 = vector.shape_cast %157 : vector<16x128xf32> to vector<1x16x128xf32>
    tpu.vector_store %arg13[%c0_77, %c0_78, %c0_79], %160 {strides = array<i32>} : memref<1x16x128xf32, #tpu.memory_space<vmem>>, vector<1x16x128xf32>,
    return
  }
  func.func @transform_0(%arg0: i32, %arg1: i32) -> (i32, i32, i32) {
    %c0_i32 = arith.constant 0 : i32
    %c0_i32_0 = arith.constant 0 : i32
    %c0_i32_1 = arith.constant 0 : i32
    return %arg0, %c0_i32, %c0_i32_0 : i32, i32, i32
  }
  func.func @transform_1(%arg0: i32, %arg1: i32) -> (i32, i32) {
    %c0_i32 = arith.constant 0 : i32
    %c0_i32_0 = arith.constant 0 : i32
    %c0_i32_1 = arith.constant 0 : i32
    return %c0_i32, %c0_i32_0 : i32, i32
  }
  func.func @transform_2(%arg0: i32, %arg1: i32) -> (i32, i32) {
    %c0_i32 = arith.constant 0 : i32
    %c0_i32_0 = arith.constant 0 : i32
    %c0_i32_1 = arith.constant 0 : i32
    return %c0_i32, %c0_i32_0 : i32, i32
  }
  func.func @transform_3(%arg0: i32, %arg1: i32) -> (i32, i32, i32) {
    %c0_i32 = arith.constant 0 : i32
    %c0_i32_0 = arith.constant 0 : i32
    %c0_i32_1 = arith.constant 0 : i32
    return %arg1, %c0_i32, %c0_i32_0 : i32, i32, i32
  }
  func.func @transform_4(%arg0: i32, %arg1: i32) -> (i32, i32, i32, i32) {
    %c0_i32 = arith.constant 0 : i32
    %c0_i32_0 = arith.constant 0 : i32
    %c0_i32_1 = arith.constant 0 : i32
    %c0_i32_2 = arith.constant 0 : i32
    return %arg1, %c0_i32, %c0_i32_0, %c0_i32_1 : i32, i32, i32, i32
  }
  func.func @transform_5(%arg0: i32, %arg1: i32) -> (i32, i32) {
    %c0_i32 = arith.constant 0 : i32
    %c0_i32_0 = arith.constant 0 : i32
    %c0_i32_1 = arith.constant 0 : i32
    return %c0_i32, %c0_i32_0 : i32, i32
  }
  func.func @transform_6(%arg0: i32, %arg1: i32) -> (i32, i32) {
    %c0_i32 = arith.constant 0 : i32
    %c0_i32_0 = arith.constant 0 : i32
    %c0_i32_1 = arith.constant 0 : i32
    return %c0_i32, %c0_i32_0 : i32, i32
  }
  func.func @transform_7(%arg0: i32, %arg1: i32) -> (i32, i32) {
    %c0_i32 = arith.constant 0 : i32
    %c0_i32_0 = arith.constant 0 : i32
    %c0_i32_1 = arith.constant 0 : i32
    return %c0_i32, %c0_i32_0 : i32, i32
  }
  func.func @transform_8(%arg0: i32, %arg1: i32) -> (i32, i32) {
    %c0_i32 = arith.constant 0 : i32
    %c0_i32_0 = arith.constant 0 : i32
    %c0_i32_1 = arith.constant 0 : i32
    return %c0_i32, %c0_i32_0 : i32, i32
  }
  func.func @transform_9(%arg0: i32, %arg1: i32) -> (i32, i32) {
    %c0_i32 = arith.constant 0 : i32
    %c0_i32_0 = arith.constant 0 : i32
    %c0_i32_1 = arith.constant 0 : i32
    return %c0_i32, %c0_i32_0 : i32, i32
  }
  func.func @transform_10(%arg0: i32, %arg1: i32) -> (i32, i32) {
    %c0_i32 = arith.constant 0 : i32
    %c0_i32_0 = arith.constant 0 : i32
    %c0_i32_1 = arith.constant 0 : i32
    return %c0_i32, %c0_i32_0 : i32, i32
  }
  func.func @transform_11(%arg0: i32, %arg1: i32) -> (i32, i32, i32) {
    %c0_i32 = arith.constant 0 : i32
    %c0_i32_0 = arith.constant 0 : i32
    %c0_i32_1 = arith.constant 0 : i32
    return %arg0, %c0_i32, %c0_i32_0 : i32, i32, i32
  }
}

module attributes {stable_mosaic.version = 11 : i64} {
  func.func @encoder_layer_kernel(%arg0: i32, %arg1: i32, %arg2: memref<1x16x128xf32, #tpu.memory_space<vmem>>, %arg3: memref<1x128xf32, #tpu.memory_space<vmem>>, %arg4: memref<1x128xf32, #tpu.memory_space<vmem>>, %arg5: memref<1x128x384xf32, #tpu.memory_space<vmem>>, %arg6: memref<1x4x32x128xf32, #tpu.memory_space<vmem>>, %arg7: memref<1x128xf32, #tpu.memory_space<vmem>>, %arg8: memref<1x128xf32, #tpu.memory_space<vmem>>, %arg9: memref<128x256xf32, #tpu.memory_space<vmem>>, %arg10: memref<1x256xf32, #tpu.memory_space<vmem>>, %arg11: memref<256x128xf32, #tpu.memory_space<vmem>>, %arg12: memref<1x128xf32, #tpu.memory_space<vmem>>, %arg13: memref<1x16x128xf32, #tpu.memory_space<vmem>>, %arg14: memref<8x128xf32, #tpu.memory_space<vmem>>, %arg15: memref<8x128xf32, #tpu.memory_space<vmem>>) attributes {dimension_semantics = [#tpu.dimension_semantics<parallel>, #tpu.dimension_semantics<arbitrary>], iteration_bounds = array<i64: 2, 1>, scalar_prefetch = 0 : i64, scratch_operands = 2 : i64, tpu.core_type = #tpu.core_type<tc>, window_params = [{transform_indices = @transform_0, window_bounds = array<i64: 1, 16, 128>}, {pipeline_mode = #tpu.pipeline_mode<synchronous>, transform_indices = @transform_1, window_bounds = array<i64: 1, 128>}, {pipeline_mode = #tpu.pipeline_mode<synchronous>, transform_indices = @transform_2, window_bounds = array<i64: 1, 128>}, {transform_indices = @transform_3, window_bounds = array<i64: 1, 128, 384>}, {transform_indices = @transform_4, window_bounds = array<i64: 1, 4, 32, 128>}, {pipeline_mode = #tpu.pipeline_mode<synchronous>, transform_indices = @transform_5, window_bounds = array<i64: 1, 128>}, {pipeline_mode = #tpu.pipeline_mode<synchronous>, transform_indices = @transform_6, window_bounds = array<i64: 1, 128>}, {pipeline_mode = #tpu.pipeline_mode<synchronous>, transform_indices = @transform_7, window_bounds = array<i64: 128, 256>}, {pipeline_mode = #tpu.pipeline_mode<synchronous>, transform_indices = @transform_8, window_bounds = array<i64: 1, 256>}, {pipeline_mode = #tpu.pipeline_mode<synchronous>, transform_indices = @transform_9, window_bounds = array<i64: 256, 128>}, {pipeline_mode = #tpu.pipeline_mode<synchronous>, transform_indices = @transform_10, window_bounds = array<i64: 1, 128>}, {transform_indices = @transform_11, window_bounds = array<i64: 1, 16, 128>}]} {
    %c0 = arith.constant 0 : index
    %c0_0 = arith.constant 0 : index
    %c0_1 = arith.constant 0 : index
    %0 = vector.load %arg2[%c0, %c0_0, %c0_1] : memref<1x16x128xf32, #tpu.memory_space<vmem>>, vector<1x16x128xf32>
    %1 = vector.shape_cast %0 : vector<1x16x128xf32> to vector<16x128xf32>
    %c0_2 = arith.constant 0 : index
    %c0_3 = arith.constant 0 : index
    %2 = vector.load %arg3[%c0_2, %c0_3] : memref<1x128xf32, #tpu.memory_space<vmem>>, vector<1x128xf32>
    %c0_4 = arith.constant 0 : index
    %c0_5 = arith.constant 0 : index
    %3 = vector.load %arg4[%c0_4, %c0_5] : memref<1x128xf32, #tpu.memory_space<vmem>>, vector<1x128xf32>
    %cst = arith.constant dense<0.000000e+00> : vector<16xf32>
    %4 = vector.multi_reduction <add>, %1, %cst [1] : vector<16x128xf32> to vector<16xf32>
    %5 = vector.shape_cast %4 : vector<16xf32> to vector<16x1xf32>
    %cst_6 = arith.constant 1.280000e+02 : f32
    %6 = vector.broadcast %cst_6 : f32 to vector<16x1xf32>
    %7 = arith.divf %5, %6 : vector<16x1xf32>
    %8 = vector.broadcast %7 : vector<16x1xf32> to vector<16x128xf32>
    %9 = arith.subf %1, %8 : vector<16x128xf32>
    %10 = arith.mulf %9, %9 : vector<16x128xf32>
    %cst_7 = arith.constant dense<0.000000e+00> : vector<16xf32>
    %11 = vector.multi_reduction <add>, %10, %cst_7 [1] : vector<16x128xf32> to vector<16xf32>
    %12 = vector.shape_cast %11 : vector<16xf32> to vector<16x1xf32>
    %cst_8 = arith.constant 1.280000e+02 : f32
    %13 = vector.broadcast %cst_8 : f32 to vector<16x1xf32>
    %14 = arith.divf %12, %13 : vector<16x1xf32>
    %15 = vector.broadcast %7 : vector<16x1xf32> to vector<16x128xf32>
    %16 = arith.subf %1, %15 : vector<16x128xf32>
    %cst_9 = arith.constant 9.99999974E-6 : f32
    %17 = vector.broadcast %cst_9 : f32 to vector<16x1xf32>
    %18 = arith.addf %14, %17 : vector<16x1xf32>
    %19 = math.rsqrt %18 : vector<16x1xf32>
    %20 = vector.broadcast %19 : vector<16x1xf32> to vector<16x128xf32>
    %21 = arith.mulf %16, %20 : vector<16x128xf32>
    %22 = vector.broadcast %2 : vector<1x128xf32> to vector<16x128xf32>
    %23 = arith.mulf %21, %22 : vector<16x128xf32>
    %24 = vector.broadcast %3 : vector<1x128xf32> to vector<16x128xf32>
    %25 = arith.addf %23, %24 : vector<16x128xf32>
    %c0_10 = arith.constant 0 : index
    %c0_11 = arith.constant 0 : index
    %c0_12 = arith.constant 0 : index
    %26 = vector.load %arg5[%c0_10, %c0_11, %c0_12] : memref<1x128x384xf32, #tpu.memory_space<vmem>>, vector<1x128x384xf32>
    %27 = vector.shape_cast %26 : vector<1x128x384xf32> to vector<128x384xf32>
    %cst_13 = arith.constant dense<0.000000e+00> : vector<16x384xf32>
    %28 = tpu.matmul %25, %27, %cst_13 {dimension_numbers = #tpu.dot_dimension_numbers<[1], [0], [0], [1], [0, 0, 1, 1], [], []>} : vector<16x128xf32>, vector<128x384xf32>, vector<16x384xf32> -> vector<16x384xf32>
    %29 = vector.extract_strided_slice %28 {offsets = [0, 0], sizes = [16, 32], strides = [1, 1]} : vector<16x384xf32> to vector<16x32xf32>
    %30 = vector.extract_strided_slice %28 {offsets = [0, 32], sizes = [16, 32], strides = [1, 1]} : vector<16x384xf32> to vector<16x32xf32>
    %31 = vector.extract_strided_slice %28 {offsets = [0, 64], sizes = [16, 32], strides = [1, 1]} : vector<16x384xf32> to vector<16x32xf32>
    %cst_14 = arith.constant dense<0.000000e+00> : vector<16x16xf32>
    %32 = tpu.matmul %29, %30, %cst_14 {dimension_numbers = #tpu.dot_dimension_numbers<[1], [1], [0], [0], [0, 0, 1, 0], [], []>} : vector<16x32xf32>, vector<16x32xf32>, vector<16x16xf32> -> vector<16x16xf32>
    %cst_15 = arith.constant dense<0xFF800000> : vector<16xf32>
    %33 = vector.multi_reduction <maximumf>, %32, %cst_15 [1] : vector<16x16xf32> to vector<16xf32>
    %34 = vector.shape_cast %33 : vector<16xf32> to vector<16x1xf32>
    %35 = vector.broadcast %34 : vector<16x1xf32> to vector<16x16xf32>
    %36 = arith.subf %32, %35 : vector<16x16xf32>
    %37 = math.exp %36 : vector<16x16xf32>
    %cst_16 = arith.constant dense<0.000000e+00> : vector<16xf32>
    %38 = vector.multi_reduction <add>, %37, %cst_16 [1] : vector<16x16xf32> to vector<16xf32>
    %39 = vector.shape_cast %38 : vector<16xf32> to vector<16x1xf32>
    %cst_17 = arith.constant dense<0.000000e+00> : vector<16x32xf32>
    %40 = tpu.matmul %37, %31, %cst_17 {dimension_numbers = #tpu.dot_dimension_numbers<[1], [0], [0], [1], [0, 0, 1, 1], [], []>} : vector<16x16xf32>, vector<16x32xf32>, vector<16x32xf32> -> vector<16x32xf32>
    %41 = vector.broadcast %39 : vector<16x1xf32> to vector<16x32xf32>
    %42 = arith.divf %40, %41 : vector<16x32xf32>
    %c0_18 = arith.constant 0 : index
    %c0_19 = arith.constant 0 : index
    %c0_20 = arith.constant 0 : index
    %c0_21 = arith.constant 0 : index
    %43 = vector.load %arg6[%c0_18, %c0_19, %c0_20, %c0_21] : memref<1x4x32x128xf32, #tpu.memory_space<vmem>>, vector<1x1x32x128xf32>
    %44 = vector.shape_cast %43 : vector<1x1x32x128xf32> to vector<32x128xf32>
    %cst_22 = arith.constant dense<0.000000e+00> : vector<16x128xf32>
    %45 = tpu.matmul %42, %44, %cst_22 {dimension_numbers = #tpu.dot_dimension_numbers<[1], [0], [0], [1], [0, 0, 1, 1], [], []>} : vector<16x32xf32>, vector<32x128xf32>, vector<16x128xf32> -> vector<16x128xf32>
    %46 = vector.extract_strided_slice %28 {offsets = [0, 96], sizes = [16, 32], strides = [1, 1]} : vector<16x384xf32> to vector<16x32xf32>
    %47 = vector.extract_strided_slice %28 {offsets = [0, 128], sizes = [16, 32], strides = [1, 1]} : vector<16x384xf32> to vector<16x32xf32>
    %48 = vector.extract_strided_slice %28 {offsets = [0, 160], sizes = [16, 32], strides = [1, 1]} : vector<16x384xf32> to vector<16x32xf32>
    %cst_23 = arith.constant dense<0.000000e+00> : vector<16x16xf32>
    %49 = tpu.matmul %46, %47, %cst_23 {dimension_numbers = #tpu.dot_dimension_numbers<[1], [1], [0], [0], [0, 0, 1, 0], [], []>} : vector<16x32xf32>, vector<16x32xf32>, vector<16x16xf32> -> vector<16x16xf32>
    %cst_24 = arith.constant dense<0xFF800000> : vector<16xf32>
    %50 = vector.multi_reduction <maximumf>, %49, %cst_24 [1] : vector<16x16xf32> to vector<16xf32>
    %51 = vector.shape_cast %50 : vector<16xf32> to vector<16x1xf32>
    %52 = vector.broadcast %51 : vector<16x1xf32> to vector<16x16xf32>
    %53 = arith.subf %49, %52 : vector<16x16xf32>
    %54 = math.exp %53 : vector<16x16xf32>
    %cst_25 = arith.constant dense<0.000000e+00> : vector<16xf32>
    %55 = vector.multi_reduction <add>, %54, %cst_25 [1] : vector<16x16xf32> to vector<16xf32>
    %56 = vector.shape_cast %55 : vector<16xf32> to vector<16x1xf32>
    %cst_26 = arith.constant dense<0.000000e+00> : vector<16x32xf32>
    %57 = tpu.matmul %54, %48, %cst_26 {dimension_numbers = #tpu.dot_dimension_numbers<[1], [0], [0], [1], [0, 0, 1, 1], [], []>} : vector<16x16xf32>, vector<16x32xf32>, vector<16x32xf32> -> vector<16x32xf32>
    %58 = vector.broadcast %56 : vector<16x1xf32> to vector<16x32xf32>
    %59 = arith.divf %57, %58 : vector<16x32xf32>
    %c0_27 = arith.constant 0 : index
    %c1 = arith.constant 1 : index
    %c0_28 = arith.constant 0 : index
    %c0_29 = arith.constant 0 : index
    %60 = vector.load %arg6[%c0_27, %c1, %c0_28, %c0_29] : memref<1x4x32x128xf32, #tpu.memory_space<vmem>>, vector<1x1x32x128xf32>
    %61 = vector.shape_cast %60 : vector<1x1x32x128xf32> to vector<32x128xf32>
    %cst_30 = arith.constant dense<0.000000e+00> : vector<16x128xf32>
    %62 = tpu.matmul %59, %61, %cst_30 {dimension_numbers = #tpu.dot_dimension_numbers<[1], [0], [0], [1], [0, 0, 1, 1], [], []>} : vector<16x32xf32>, vector<32x128xf32>, vector<16x128xf32> -> vector<16x128xf32>
    %63 = arith.addf %45, %62 : vector<16x128xf32>
    %64 = vector.extract_strided_slice %28 {offsets = [0, 192], sizes = [16, 32], strides = [1, 1]} : vector<16x384xf32> to vector<16x32xf32>
    %65 = vector.extract_strided_slice %28 {offsets = [0, 224], sizes = [16, 32], strides = [1, 1]} : vector<16x384xf32> to vector<16x32xf32>
    %66 = vector.extract_strided_slice %28 {offsets = [0, 256], sizes = [16, 32], strides = [1, 1]} : vector<16x384xf32> to vector<16x32xf32>
    %cst_31 = arith.constant dense<0.000000e+00> : vector<16x16xf32>
    %67 = tpu.matmul %64, %65, %cst_31 {dimension_numbers = #tpu.dot_dimension_numbers<[1], [1], [0], [0], [0, 0, 1, 0], [], []>} : vector<16x32xf32>, vector<16x32xf32>, vector<16x16xf32> -> vector<16x16xf32>
    %cst_32 = arith.constant dense<0xFF800000> : vector<16xf32>
    %68 = vector.multi_reduction <maximumf>, %67, %cst_32 [1] : vector<16x16xf32> to vector<16xf32>
    %69 = vector.shape_cast %68 : vector<16xf32> to vector<16x1xf32>
    %70 = vector.broadcast %69 : vector<16x1xf32> to vector<16x16xf32>
    %71 = arith.subf %67, %70 : vector<16x16xf32>
    %72 = math.exp %71 : vector<16x16xf32>
    %cst_33 = arith.constant dense<0.000000e+00> : vector<16xf32>
    %73 = vector.multi_reduction <add>, %72, %cst_33 [1] : vector<16x16xf32> to vector<16xf32>
    %74 = vector.shape_cast %73 : vector<16xf32> to vector<16x1xf32>
    %cst_34 = arith.constant dense<0.000000e+00> : vector<16x32xf32>
    %75 = tpu.matmul %72, %66, %cst_34 {dimension_numbers = #tpu.dot_dimension_numbers<[1], [0], [0], [1], [0, 0, 1, 1], [], []>} : vector<16x16xf32>, vector<16x32xf32>, vector<16x32xf32> -> vector<16x32xf32>
    %76 = vector.broadcast %74 : vector<16x1xf32> to vector<16x32xf32>
    %77 = arith.divf %75, %76 : vector<16x32xf32>
    %c0_35 = arith.constant 0 : index
    %c2 = arith.constant 2 : index
    %c0_36 = arith.constant 0 : index
    %c0_37 = arith.constant 0 : index
    %78 = vector.load %arg6[%c0_35, %c2, %c0_36, %c0_37] : memref<1x4x32x128xf32, #tpu.memory_space<vmem>>, vector<1x1x32x128xf32>
    %79 = vector.shape_cast %78 : vector<1x1x32x128xf32> to vector<32x128xf32>
    %cst_38 = arith.constant dense<0.000000e+00> : vector<16x128xf32>
    %80 = tpu.matmul %77, %79, %cst_38 {dimension_numbers = #tpu.dot_dimension_numbers<[1], [0], [0], [1], [0, 0, 1, 1], [], []>} : vector<16x32xf32>, vector<32x128xf32>, vector<16x128xf32> -> vector<16x128xf32>
    %81 = arith.addf %63, %80 : vector<16x128xf32>
    %82 = vector.extract_strided_slice %28 {offsets = [0, 288], sizes = [16, 32], strides = [1, 1]} : vector<16x384xf32> to vector<16x32xf32>
    %83 = vector.extract_strided_slice %28 {offsets = [0, 320], sizes = [16, 32], strides = [1, 1]} : vector<16x384xf32> to vector<16x32xf32>
    %84 = vector.extract_strided_slice %28 {offsets = [0, 352], sizes = [16, 32], strides = [1, 1]} : vector<16x384xf32> to vector<16x32xf32>
    %cst_39 = arith.constant dense<0.000000e+00> : vector<16x16xf32>
    %85 = tpu.matmul %82, %83, %cst_39 {dimension_numbers = #tpu.dot_dimension_numbers<[1], [1], [0], [0], [0, 0, 1, 0], [], []>} : vector<16x32xf32>, vector<16x32xf32>, vector<16x16xf32> -> vector<16x16xf32>
    %cst_40 = arith.constant dense<0xFF800000> : vector<16xf32>
    %86 = vector.multi_reduction <maximumf>, %85, %cst_40 [1] : vector<16x16xf32> to vector<16xf32>
    %87 = vector.shape_cast %86 : vector<16xf32> to vector<16x1xf32>
    %88 = vector.broadcast %87 : vector<16x1xf32> to vector<16x16xf32>
    %89 = arith.subf %85, %88 : vector<16x16xf32>
    %90 = math.exp %89 : vector<16x16xf32>
    %cst_41 = arith.constant dense<0.000000e+00> : vector<16xf32>
    %91 = vector.multi_reduction <add>, %90, %cst_41 [1] : vector<16x16xf32> to vector<16xf32>
    %92 = vector.shape_cast %91 : vector<16xf32> to vector<16x1xf32>
    %cst_42 = arith.constant dense<0.000000e+00> : vector<16x32xf32>
    %93 = tpu.matmul %90, %84, %cst_42 {dimension_numbers = #tpu.dot_dimension_numbers<[1], [0], [0], [1], [0, 0, 1, 1], [], []>} : vector<16x16xf32>, vector<16x32xf32>, vector<16x32xf32> -> vector<16x32xf32>
    %94 = vector.broadcast %92 : vector<16x1xf32> to vector<16x32xf32>
    %95 = arith.divf %93, %94 : vector<16x32xf32>
    %c0_43 = arith.constant 0 : index
    %c3 = arith.constant 3 : index
    %c0_44 = arith.constant 0 : index
    %c0_45 = arith.constant 0 : index
    %96 = vector.load %arg6[%c0_43, %c3, %c0_44, %c0_45] : memref<1x4x32x128xf32, #tpu.memory_space<vmem>>, vector<1x1x32x128xf32>
    %97 = vector.shape_cast %96 : vector<1x1x32x128xf32> to vector<32x128xf32>
    %cst_46 = arith.constant dense<0.000000e+00> : vector<16x128xf32>
    %98 = tpu.matmul %95, %97, %cst_46 {dimension_numbers = #tpu.dot_dimension_numbers<[1], [0], [0], [1], [0, 0, 1, 1], [], []>} : vector<16x32xf32>, vector<32x128xf32>, vector<16x128xf32> -> vector<16x128xf32>
    %99 = arith.addf %81, %98 : vector<16x128xf32>
    %c0_47 = arith.constant 0 : index
    %c0_48 = arith.constant 0 : index
    %c0_49 = arith.constant 0 : index
    %100 = vector.load %arg2[%c0_47, %c0_48, %c0_49] : memref<1x16x128xf32, #tpu.memory_space<vmem>>, vector<1x16x128xf32>
    %101 = vector.shape_cast %100 : vector<1x16x128xf32> to vector<16x128xf32>
    %102 = arith.addf %99, %101 : vector<16x128xf32>
    %c0_50 = arith.constant 0 : index
    %c0_51 = arith.constant 0 : index
    %103 = vector.load %arg7[%c0_50, %c0_51] : memref<1x128xf32, #tpu.memory_space<vmem>>, vector<1x128xf32>
    %c0_52 = arith.constant 0 : index
    %c0_53 = arith.constant 0 : index
    %104 = vector.load %arg8[%c0_52, %c0_53] : memref<1x128xf32, #tpu.memory_space<vmem>>, vector<1x128xf32>
    %cst_54 = arith.constant dense<0.000000e+00> : vector<16xf32>
    %105 = vector.multi_reduction <add>, %102, %cst_54 [1] : vector<16x128xf32> to vector<16xf32>
    %106 = vector.shape_cast %105 : vector<16xf32> to vector<16x1xf32>
    %cst_55 = arith.constant 1.280000e+02 : f32
    %107 = vector.broadcast %cst_55 : f32 to vector<16x1xf32>
    %108 = arith.divf %106, %107 : vector<16x1xf32>
    %109 = vector.broadcast %108 : vector<16x1xf32> to vector<16x128xf32>
    %110 = arith.subf %102, %109 : vector<16x128xf32>
    %111 = arith.mulf %110, %110 : vector<16x128xf32>
    %cst_56 = arith.constant dense<0.000000e+00> : vector<16xf32>
    %112 = vector.multi_reduction <add>, %111, %cst_56 [1] : vector<16x128xf32> to vector<16xf32>
    %113 = vector.shape_cast %112 : vector<16xf32> to vector<16x1xf32>
    %cst_57 = arith.constant 1.280000e+02 : f32
    %114 = vector.broadcast %cst_57 : f32 to vector<16x1xf32>
    %115 = arith.divf %113, %114 : vector<16x1xf32>
    %116 = vector.broadcast %108 : vector<16x1xf32> to vector<16x128xf32>
    %117 = arith.subf %102, %116 : vector<16x128xf32>
    %cst_58 = arith.constant 9.99999974E-6 : f32
    %118 = vector.broadcast %cst_58 : f32 to vector<16x1xf32>
    %119 = arith.addf %115, %118 : vector<16x1xf32>
    %120 = math.rsqrt %119 : vector<16x1xf32>
    %121 = vector.broadcast %120 : vector<16x1xf32> to vector<16x128xf32>
    %122 = arith.mulf %117, %121 : vector<16x128xf32>
    %123 = vector.broadcast %103 : vector<1x128xf32> to vector<16x128xf32>
    %124 = arith.mulf %122, %123 : vector<16x128xf32>
    %125 = vector.broadcast %104 : vector<1x128xf32> to vector<16x128xf32>
    %126 = arith.addf %124, %125 : vector<16x128xf32>
    %c0_59 = arith.constant 0 : index
    %c0_60 = arith.constant 0 : index
    %127 = vector.load %arg9[%c0_59, %c0_60] : memref<128x256xf32, #tpu.memory_space<vmem>>, vector<128x256xf32>
    %cst_61 = arith.constant dense<0.000000e+00> : vector<16x256xf32>
    %128 = tpu.matmul %126, %127, %cst_61 {dimension_numbers = #tpu.dot_dimension_numbers<[1], [0], [0], [1], [0, 0, 1, 1], [], []>} : vector<16x128xf32>, vector<128x256xf32>, vector<16x256xf32> -> vector<16x256xf32>
    %c0_62 = arith.constant 0 : index
    %c0_63 = arith.constant 0 : index
    %129 = vector.load %arg10[%c0_62, %c0_63] : memref<1x256xf32, #tpu.memory_space<vmem>>, vector<1x256xf32>
    %130 = vector.broadcast %129 : vector<1x256xf32> to vector<16x256xf32>
    %131 = arith.addf %128, %130 : vector<16x256xf32>
    %cst_64 = arith.constant 5.000000e-01 : f32
    %132 = vector.broadcast %cst_64 : f32 to vector<16x256xf32>
    %133 = arith.mulf %132, %131 : vector<16x256xf32>
    %cst_65 = arith.constant 2.000000e+00 : f32
    %134 = math.sqrt %cst_65 : f32
    %cst_66 = arith.constant 1.000000e+00 : f32
    %135 = arith.divf %cst_66, %134 : f32
    %136 = vector.broadcast %135 : f32 to vector<16x256xf32>
    %137 = arith.mulf %131, %136 : vector<16x256xf32>
    %138 = math.erf %137 : vector<16x256xf32>
    %cst_67 = arith.constant 1.000000e+00 : f32
    %139 = vector.broadcast %cst_67 : f32 to vector<16x256xf32>
    %140 = arith.addf %139, %138 : vector<16x256xf32>
    %141 = arith.mulf %133, %140 : vector<16x256xf32>
    %c0_68 = arith.constant 0 : index
    %c0_69 = arith.constant 0 : index
    %142 = vector.load %arg11[%c0_68, %c0_69] : memref<256x128xf32, #tpu.memory_space<vmem>>, vector<256x128xf32>
    %cst_70 = arith.constant dense<0.000000e+00> : vector<16x128xf32>
    %143 = tpu.matmul %141, %142, %cst_70 {dimension_numbers = #tpu.dot_dimension_numbers<[1], [0], [0], [1], [0, 0, 1, 1], [], []>} : vector<16x256xf32>, vector<256x128xf32>, vector<16x128xf32> -> vector<16x128xf32>
    %c0_71 = arith.constant 0 : index
    %c0_72 = arith.constant 0 : index
    %144 = vector.load %arg12[%c0_71, %c0_72] : memref<1x128xf32, #tpu.memory_space<vmem>>, vector<1x128xf32>
    %145 = vector.broadcast %144 : vector<1x128xf32> to vector<16x128xf32>
    %146 = arith.addf %143, %145 : vector<16x128xf32>
    %cst_73 = arith.constant 5.000000e-01 : f32
    %147 = vector.broadcast %cst_73 : f32 to vector<16x128xf32>
    %148 = arith.mulf %147, %146 : vector<16x128xf32>
    %cst_74 = arith.constant 2.000000e+00 : f32
    %149 = math.sqrt %cst_74 : f32
    %cst_75 = arith.constant 1.000000e+00 : f32
    %150 = arith.divf %cst_75, %149 : f32
    %151 = vector.broadcast %150 : f32 to vector<16x128xf32>
    %152 = arith.mulf %146, %151 : vector<16x128xf32>
    %153 = math.erf %152 : vector<16x128xf32>
    %cst_76 = arith.constant 1.000000e+00 : f32
    %154 = vector.broadcast %cst_76 : f32 to vector<16x128xf32>
    %155 = arith.addf %154, %153 : vector<16x128xf32>
    %156 = arith.mulf %148, %155 : vector<16x128xf32>
    %157 = arith.addf %156, %102 : vector<16x128xf32>
    %c0_77 = arith.constant 0 : index
    %c0_78 = arith.constant 0 : index
    %c0_79 = arith.constant 0 : index
    %158 = vector.load %arg13[%c0_77, %c0_78, %c0_79] : memref<1x16x128xf32, #tpu.memory_space<vmem>>, vector<1x16x128xf32>
    %159 = vector.shape_cast %158 : vector<1x16x128xf32> to vector<16x128xf32>
    %160 = vector.shape_cast %157 : vector<16x128xf32> to vector<1x16x128xf32>
    tpu.vector_store %arg13[%c0_77, %c0_78, %c0_79], %160 {strides = array<i32>} : memref<1x16x128xf32, #tpu.memory_space<vmem>>, vector<1x16x128xf32>,
    return
  }
  func.func @transform_0(%arg0: i32, %arg1: i32) -> (i32, i32, i32) {
    %c0_i32 = arith.constant 0 : i32
    %c0_i32_0 = arith.constant 0 : i32
    %c0_i32_1 = arith.constant 0 : i32
    return %arg0, %c0_i32, %c0_i32_0 : i32, i32, i32
  }
  func.func @transform_1(%arg0: i32, %arg1: i32) -> (i32, i32) {
    %c0_i32 = arith.constant 0 : i32
    %c0_i32_0 = arith.constant 0 : i32
    %c0_i32_1 = arith.constant 0 : i32
    return %c0_i32, %c0_i32_0 : i32, i32
  }
  func.func @transform_2(%arg0: i32, %arg1: i32) -> (i32, i32) {
    %c0_i32 = arith.constant 0 : i32
    %c0_i32_0 = arith.constant 0 : i32
    %c0_i32_1 = arith.constant 0 : i32
    return %c0_i32, %c0_i32_0 : i32, i32
  }
  func.func @transform_3(%arg0: i32, %arg1: i32) -> (i32, i32, i32) {
    %c0_i32 = arith.constant 0 : i32
    %c0_i32_0 = arith.constant 0 : i32
    %c0_i32_1 = arith.constant 0 : i32
    return %arg1, %c0_i32, %c0_i32_0 : i32, i32, i32
  }
  func.func @transform_4(%arg0: i32, %arg1: i32) -> (i32, i32, i32, i32) {
    %c0_i32 = arith.constant 0 : i32
    %c0_i32_0 = arith.constant 0 : i32
    %c0_i32_1 = arith.constant 0 : i32
    %c0_i32_2 = arith.constant 0 : i32
    return %arg1, %c0_i32, %c0_i32_0, %c0_i32_1 : i32, i32, i32, i32
  }
  func.func @transform_5(%arg0: i32, %arg1: i32) -> (i32, i32) {
    %c0_i32 = arith.constant 0 : i32
    %c0_i32_0 = arith.constant 0 : i32
    %c0_i32_1 = arith.constant 0 : i32
    return %c0_i32, %c0_i32_0 : i32, i32
  }
  func.func @transform_6(%arg0: i32, %arg1: i32) -> (i32, i32) {
    %c0_i32 = arith.constant 0 : i32
    %c0_i32_0 = arith.constant 0 : i32
    %c0_i32_1 = arith.constant 0 : i32
    return %c0_i32, %c0_i32_0 : i32, i32
  }
  func.func @transform_7(%arg0: i32, %arg1: i32) -> (i32, i32) {
    %c0_i32 = arith.constant 0 : i32
    %c0_i32_0 = arith.constant 0 : i32
    %c0_i32_1 = arith.constant 0 : i32
    return %c0_i32, %c0_i32_0 : i32, i32
  }
  func.func @transform_8(%arg0: i32, %arg1: i32) -> (i32, i32) {
    %c0_i32 = arith.constant 0 : i32
    %c0_i32_0 = arith.constant 0 : i32
    %c0_i32_1 = arith.constant 0 : i32
    return %c0_i32, %c0_i32_0 : i32, i32
  }
  func.func @transform_9(%arg0: i32, %arg1: i32) -> (i32, i32) {
    %c0_i32 = arith.constant 0 : i32
    %c0_i32_0 = arith.constant 0 : i32
    %c0_i32_1 = arith.constant 0 : i32
    return %c0_i32, %c0_i32_0 : i32, i32
  }
  func.func @transform_10(%arg0: i32, %arg1: i32) -> (i32, i32) {
    %c0_i32 = arith.constant 0 : i32
    %c0_i32_0 = arith.constant 0 : i32
    %c0_i32_1 = arith.constant 0 : i32
    return %c0_i32, %c0_i32_0 : i32, i32
  }
  func.func @transform_11(%arg0: i32, %arg1: i32) -> (i32, i32, i32) {
    %c0_i32 = arith.constant 0 : i32
    %c0_i32_0 = arith.constant 0 : i32
    %c0_i32_1 = arith.constant 0 : i32
    return %arg0, %c0_i32, %c0_i32_0 : i32, i32, i32
  }
}

</mosaic_0001>

<llo_original>
// kernel: tpu_custom_call.1
$region0: #{tpu_custom_call.1}
  #allocation0 [shape = 'u32[]', space=smem, size = 0x4, offset = 0x4, fixed_abs, tag = 'smem constant byte address 0x4 - core index']
  #allocation1 [shape = 'u32[144,128]{1,0:T(1,128)}', space=vmem, size = 0x12000, scoped, tag = 'internal scratch']
  #allocation2 [shape = 'f32[8,128]{1,0:T(8,128)}', space=vmem, size = 0x1000, scoped, tag = 'scratch operand']
  #allocation3 [shape = 'f32[8,128]{1,0:T(8,128)}', space=vmem, size = 0x1000, scoped, tag = 'scratch operand']
  %s0 = inlined_call_operand.hbm [shape: f32[2,16,128], index: 0, kind: input, shape index: {}]
  %s1 = inlined_call_operand.hbm [shape: f32[1,128], index: 1, kind: input, shape index: {}]
  %s2 = inlined_call_operand.hbm [shape: f32[1,128], index: 2, kind: input, shape index: {}]
  %s3 = inlined_call_operand.hbm [shape: f32[1,128,384], index: 3, kind: input, shape index: {}]
  %s4 = inlined_call_operand.hbm [shape: f32[1,4,32,128], index: 4, kind: input, shape index: {}]
  %s5 = inlined_call_operand.hbm [shape: f32[1,128], index: 5, kind: input, shape index: {}]
  %s6 = inlined_call_operand.hbm [shape: f32[1,128], index: 6, kind: input, shape index: {}]
  %s7 = inlined_call_operand.hbm [shape: f32[128,256], index: 7, kind: input, shape index: {}]
  %s8 = inlined_call_operand.hbm [shape: f32[1,256], index: 8, kind: input, shape index: {}]
  %s9 = inlined_call_operand.hbm [shape: f32[256,128], index: 9, kind: input, shape index: {}]
  %s10 = inlined_call_operand.hbm [shape: f32[1,128], index: 10, kind: input, shape index: {}]
  %s11 = inlined_call_operand.hbm [shape: f32[2,16,128], index: 11, kind: output, shape index: {}]
  %s12 = sld [smem:[#allocation0]]
  $region121: #{tpu_custom_call.1} parent=0
    _
  %s14 = ssub.s32 1, %s12
  %s15 = scalar_select 0, %s14, %s12
  $region1: #{tpu_custom_call.1} parent=0
    #allocation4 [shape = 'u8[16384]{0}', space=vmem, size = 0x4000, scoped, tag = 'input window, operand 0']
    #allocation5 [shape = 's32[2]{0}', space=sflag, size = 0x8, scoped, tag = 'scoped memory for tpu_custom_call.1']
    #allocation6 [shape = 's32[2]{0}', space=sflag, size = 0x8, scoped, tag = 'scoped memory for tpu_custom_call.1']
    #allocation7 [shape = 'u8[512]{0}', space=vmem, size = 0x400, scoped, tag = 'input window, operand 1, single buffered']
    #allocation8 [shape = 's32[1]{0}', space=sflag, size = 0x4, scoped, tag = 'scoped memory for tpu_custom_call.1']
    #allocation9 [shape = 'u8[512]{0}', space=vmem, size = 0x400, scoped, tag = 'input window, operand 2, single buffered']
    #allocation10 [shape = 'u8[196608]{0}', space=vmem, size = 0x30000, scoped, tag = 'input window, operand 3, single buffered']
    #allocation11 [shape = 's32[1]{0}', space=sflag, size = 0x4, scoped, tag = 'scoped memory for tpu_custom_call.1']
    #allocation12 [shape = 'u8[65536]{0}', space=vmem, size = 0x10000, scoped, tag = 'input window, operand 4, single buffered']
    #allocation13 [shape = 'u8[512]{0}', space=vmem, size = 0x400, scoped, tag = 'input window, operand 5, single buffered']
    #allocation14 [shape = 's32[1]{0}', space=sflag, size = 0x4, scoped, tag = 'scoped memory for tpu_custom_call.1']
    #allocation15 [shape = 'u8[512]{0}', space=vmem, size = 0x400, scoped, tag = 'input window, operand 6, single buffered']
    #allocation16 [shape = 'u8[131072]{0}', space=vmem, size = 0x20000, scoped, tag = 'input window, operand 7, single buffered']
    #allocation17 [shape = 's32[1]{0}', space=sflag, size = 0x4, scoped, tag = 'scoped memory for tpu_custom_call.1']
    #allocation18 [shape = 'u8[1024]{0}', space=vmem, size = 0x400, scoped, tag = 'input window, operand 8, single buffered']
    #allocation19 [shape = 'u8[131072]{0}', space=vmem, size = 0x20000, scoped, tag = 'input window, operand 9, single buffered']
    #allocation20 [shape = 's32[1]{0}', space=sflag, size = 0x4, scoped, tag = 'scoped memory for tpu_custom_call.1']
    #allocation21 [shape = 'u8[512]{0}', space=vmem, size = 0x400, scoped, tag = 'input window, operand 10, single buffered']
    #allocation22 [shape = 'u8[16384]{0}', space=vmem, size = 0x4000, scoped, tag = 'output window, operand 0']
    %16 = vsyncpa [#allocation5], 0
    %s17 = scalar_lea.sflag [#allocation5], 1
    %18 = vsyncpa %s17, 0
    %19 = vsyncpa [#allocation8], 0
    %20 = vsyncpa [#allocation11], 0
    %21 = vsyncpa [#allocation14], 0
    %22 = vsyncpa [#allocation17], 0
    %23 = vsyncpa [#allocation20], 0
    %24 = vsyncpa [#allocation6], 0
    %s25 = scalar_lea.sflag [#allocation6], 1
    %26 = vsyncpa %s25, 0
    loop: start=0, step=1, limit=4
    $region2: #{tpu_custom_call.1} parent=1 // loop_pre_header
      _
    $region3: #{tpu_custom_call.1} parent=1 // loop_header
      %s28 = sphi 0, %s32
      %p29 = scmp.ge.s32.totalorder %s28, 4
      %s35 = sphi 0, %s47
      %s36 = sphi 0, %s43
      %s37 = sphi 0, %s35
      %s38 = sphi 0, %s36
      %s39 = sphi 0, %s37
      %s40 = sphi 0, %s38
      %s50 = sphi 0, %s52
      %s53 = sphi 0, %s50
      %s54 = sphi 0, %s53
      %s70 = sphi 0, %s54
      %s74 = sphi 0, %s74
      %s76 = sphi 0, %s74
      %s77 = sphi 0, %s76
      %s91 = sphi 0, %s77
      %s95 = sphi 0, %s95
      %s97 = sphi 0, %s95
      %s98 = sphi 0, %s97
      %s112 = sphi 0, %s98
      %s118 = sphi 0, %s120
      %s121 = sphi 0, %s118
      %s122 = sphi 0, %s121
      %s138 = sphi 0, %s122
      %s144 = sphi 0, %s146
      %s147 = sphi 0, %s144
      %s148 = sphi 0, %s147
      %s164 = sphi 0, %s148
      %s168 = sphi 0, %s168
      %s170 = sphi 0, %s168
      %s171 = sphi 0, %s170
      %s185 = sphi 0, %s171
      %s189 = sphi 0, %s189
      %s191 = sphi 0, %s189
      %s192 = sphi 0, %s191
      %s206 = sphi 0, %s192
      %s210 = sphi 0, %s210
      %s212 = sphi 0, %s210
      %s213 = sphi 0, %s212
      %s227 = sphi 0, %s213
      %s231 = sphi 0, %s231
      %s233 = sphi 0, %s231
      %s234 = sphi 0, %s233
      %s248 = sphi 0, %s234
      %s252 = sphi 0, %s252
      %s254 = sphi 0, %s252
      %s255 = sphi 0, %s254
      %s269 = sphi 0, %s255
      %s273 = sphi 0, %s273
      %s275 = sphi 0, %s273
      %s276 = sphi 0, %s275
      %s290 = sphi 0, %s276
      %s296 = sphi 0, %s298
      %s299 = sphi 0, %s296
      %s300 = sphi 0, %s299
      %s316 = sphi 0, %s300
    $region4: #{tpu_custom_call.1} parent=1 // loop_header_branch
      %31 = sbr.rel (%p29) target = $region8
    $region5: #{tpu_custom_call.1} parent=1 // loop_body
      %s33 = ssub.s32 %s28, 1
      %s34 = ssub.s32 %s28, 2
      %s41 = sadd.s32 1, %s36
      %p42 = scmp.ge.s32.totalorder %s41, 1
      %s43 = scalar_select %p42, 0, %s41
      %s44 = sadd.s32 1, %s35
      %s45 = scalar_select %p42, %s44, %s35
      %p46 = scmp.ge.s32.totalorder %s45, 2
      %s47 = scalar_select %p46, 0, %s45
      %s48 = ssub.s32 %s35, %s47
      %p49 = scmp.eq.s32.totalorder %s48, 0
      %s51 = sadd.s32 %s50, 1
      %s52 = scalar_select %p49, %s50, %s51
      %p55 = pneg %p49
      %p56 = scmp.eq.s32.totalorder %s28, 1
      %p57 = por %p55, %p56
      %p58 = scmp.ne.s32.totalorder %s50, %s53
      %p59 = scmp.eq.s32.totalorder %s28, 0
      %p60 = por %p58, %p59
      %p61 = scmp.ne.s32.totalorder %s50, %s53
      %p62 = scmp.eq.s32.totalorder %s33, 1
      %p63 = por %p61, %p62
      %p64 = scmp.ne.s32.totalorder %s53, %s54
      %p65 = scmp.eq.s32.totalorder %s33, 0
      %p66 = por %p64, %p65
      %p67 = scmp.ne.s32.totalorder %s53, %s54
      %p68 = scmp.eq.s32.totalorder %s34, 1
      %p69 = por %p67, %p68
      %p71 = scmp.ne.s32.totalorder %s54, %s70
      %p72 = scmp.eq.s32.totalorder %s34, 0
      %p73 = por %p71, %p72
      %s75 = sadd.s32 %s74, 1
      %p78 = scmp.eq.s32.totalorder %s28, 1
      %p79 = scmp.ne.s32.totalorder %s74, %s76
      %p80 = scmp.eq.s32.totalorder %s28, 0
      %p81 = por %p79, %p80
      %p82 = scmp.ne.s32.totalorder %s74, %s76
      %p83 = scmp.eq.s32.totalorder %s33, 1
      %p84 = por %p82, %p83
      %p85 = scmp.ne.s32.totalorder %s76, %s77
      %p86 = scmp.eq.s32.totalorder %s33, 0
      %p87 = por %p85, %p86
      %p88 = scmp.ne.s32.totalorder %s76, %s77
      %p89 = scmp.eq.s32.totalorder %s34, 1
      %p90 = por %p88, %p89
      %p92 = scmp.ne.s32.totalorder %s77, %s91
      %p93 = scmp.eq.s32.totalorder %s34, 0
      %p94 = por %p92, %p93
      %s96 = sadd.s32 %s95, 1
      %p99 = scmp.eq.s32.totalorder %s28, 1
      %p100 = scmp.ne.s32.totalorder %s95, %s97
      %p101 = scmp.eq.s32.totalorder %s28, 0
      %p102 = por %p100, %p101
      %p103 = scmp.ne.s32.totalorder %s95, %s97
      %p104 = scmp.eq.s32.totalorder %s33, 1
      %p105 = por %p103, %p104
      %p106 = scmp.ne.s32.totalorder %s97, %s98
      %p107 = scmp.eq.s32.totalorder %s33, 0
      %p108 = por %p106, %p107
      %p109 = scmp.ne.s32.totalorder %s97, %s98
      %p110 = scmp.eq.s32.totalorder %s34, 1
      %p111 = por %p109, %p110
      %p113 = scmp.ne.s32.totalorder %s98, %s112
      %p114 = scmp.eq.s32.totalorder %s34, 0
      %p115 = por %p113, %p114
      %s116 = ssub.s32 %s36, %s43
      %p117 = scmp.eq.s32.totalorder %s116, 0
      %s119 = sadd.s32 %s118, 1
      %s120 = scalar_select %p117, %s118, %s119
      %p123 = pneg %p117
      %p124 = scmp.eq.s32.totalorder %s28, 1
      %p125 = por %p123, %p124
      %p126 = scmp.ne.s32.totalorder %s118, %s121
      %p127 = scmp.eq.s32.totalorder %s28, 0
      %p128 = por %p126, %p127
      %p129 = scmp.ne.s32.totalorder %s118, %s121
      %p130 = scmp.eq.s32.totalorder %s33, 1
      %p131 = por %p129, %p130
      %p132 = scmp.ne.s32.totalorder %s121, %s122
      %p133 = scmp.eq.s32.totalorder %s33, 0
      %p134 = por %p132, %p133
      %p135 = scmp.ne.s32.totalorder %s121, %s122
      %p136 = scmp.eq.s32.totalorder %s34, 1
      %p137 = por %p135, %p136
      %p139 = scmp.ne.s32.totalorder %s122, %s138
      %p140 = scmp.eq.s32.totalorder %s34, 0
      %p141 = por %p139, %p140
      %s142 = ssub.s32 %s36, %s43
      %p143 = scmp.eq.s32.totalorder %s142, 0
      %s145 = sadd.s32 %s144, 1
      %s146 = scalar_select %p143, %s144, %s145
      %p149 = pneg %p143
      %p150 = scmp.eq.s32.totalorder %s28, 1
      %p151 = por %p149, %p150
      %p152 = scmp.ne.s32.totalorder %s144, %s147
      %p153 = scmp.eq.s32.totalorder %s28, 0
      %p154 = por %p152, %p153
      %p155 = scmp.ne.s32.totalorder %s144, %s147
      %p156 = scmp.eq.s32.totalorder %s33, 1
      %p157 = por %p155, %p156
      %p158 = scmp.ne.s32.totalorder %s147, %s148
      %p159 = scmp.eq.s32.totalorder %s33, 0
      %p160 = por %p158, %p159
      %p161 = scmp.ne.s32.totalorder %s147, %s148
      %p162 = scmp.eq.s32.totalorder %s34, 1
      %p163 = por %p161, %p162
      %p165 = scmp.ne.s32.totalorder %s148, %s164
      %p166 = scmp.eq.s32.totalorder %s34, 0
      %p167 = por %p165, %p166
      %s169 = sadd.s32 %s168, 1
      %p172 = scmp.eq.s32.totalorder %s28, 1
      %p173 = scmp.ne.s32.totalorder %s168, %s170
      %p174 = scmp.eq.s32.totalorder %s28, 0
      %p175 = por %p173, %p174
      %p176 = scmp.ne.s32.totalorder %s168, %s170
      %p177 = scmp.eq.s32.totalorder %s33, 1
      %p178 = por %p176, %p177
      %p179 = scmp.ne.s32.totalorder %s170, %s171
      %p180 = scmp.eq.s32.totalorder %s33, 0
      %p181 = por %p179, %p180
      %p182 = scmp.ne.s32.totalorder %s170, %s171
      %p183 = scmp.eq.s32.totalorder %s34, 1
      %p184 = por %p182, %p183
      %p186 = scmp.ne.s32.totalorder %s171, %s185
      %p187 = scmp.eq.s32.totalorder %s34, 0
      %p188 = por %p186, %p187
      %s190 = sadd.s32 %s189, 1
      %p193 = scmp.eq.s32.totalorder %s28, 1
      %p194 = scmp.ne.s32.totalorder %s189, %s191
      %p195 = scmp.eq.s32.totalorder %s28, 0
      %p196 = por %p194, %p195
      %p197 = scmp.ne.s32.totalorder %s189, %s191
      %p198 = scmp.eq.s32.totalorder %s33, 1
      %p199 = por %p197, %p198
      %p200 = scmp.ne.s32.totalorder %s191, %s192
      %p201 = scmp.eq.s32.totalorder %s33, 0
      %p202 = por %p200, %p201
      %p203 = scmp.ne.s32.totalorder %s191, %s192
      %p204 = scmp.eq.s32.totalorder %s34, 1
      %p205 = por %p203, %p204
      %p207 = scmp.ne.s32.totalorder %s192, %s206
      %p208 = scmp.eq.s32.totalorder %s34, 0
      %p209 = por %p207, %p208
      %s211 = sadd.s32 %s210, 1
      %p214 = scmp.eq.s32.totalorder %s28, 1
      %p215 = scmp.ne.s32.totalorder %s210, %s212
      %p216 = scmp.eq.s32.totalorder %s28, 0
      %p217 = por %p215, %p216
      %p218 = scmp.ne.s32.totalorder %s210, %s212
      %p219 = scmp.eq.s32.totalorder %s33, 1
      %p220 = por %p218, %p219
      %p221 = scmp.ne.s32.totalorder %s212, %s213
      %p222 = scmp.eq.s32.totalorder %s33, 0
      %p223 = por %p221, %p222
      %p224 = scmp.ne.s32.totalorder %s212, %s213
      %p225 = scmp.eq.s32.totalorder %s34, 1
      %p226 = por %p224, %p225
      %p228 = scmp.ne.s32.totalorder %s213, %s227
      %p229 = scmp.eq.s32.totalorder %s34, 0
      %p230 = por %p228, %p229
      %s232 = sadd.s32 %s231, 1
      %p235 = scmp.eq.s32.totalorder %s28, 1
      %p236 = scmp.ne.s32.totalorder %s231, %s233
      %p237 = scmp.eq.s32.totalorder %s28, 0
      %p238 = por %p236, %p237
      %p239 = scmp.ne.s32.totalorder %s231, %s233
      %p240 = scmp.eq.s32.totalorder %s33, 1
      %p241 = por %p239, %p240
      %p242 = scmp.ne.s32.totalorder %s233, %s234
      %p243 = scmp.eq.s32.totalorder %s33, 0
      %p244 = por %p242, %p243
      %p245 = scmp.ne.s32.totalorder %s233, %s234
      %p246 = scmp.eq.s32.totalorder %s34, 1
      %p247 = por %p245, %p246
      %p249 = scmp.ne.s32.totalorder %s234, %s248
      %p250 = scmp.eq.s32.totalorder %s34, 0
      %p251 = por %p249, %p250
      %s253 = sadd.s32 %s252, 1
      %p256 = scmp.eq.s32.totalorder %s28, 1
      %p257 = scmp.ne.s32.totalorder %s252, %s254
      %p258 = scmp.eq.s32.totalorder %s28, 0
      %p259 = por %p257, %p258
      %p260 = scmp.ne.s32.totalorder %s252, %s254
      %p261 = scmp.eq.s32.totalorder %s33, 1
      %p262 = por %p260, %p261
      %p263 = scmp.ne.s32.totalorder %s254, %s255
      %p264 = scmp.eq.s32.totalorder %s33, 0
      %p265 = por %p263, %p264
      %p266 = scmp.ne.s32.totalorder %s254, %s255
      %p267 = scmp.eq.s32.totalorder %s34, 1
      %p268 = por %p266, %p267
      %p270 = scmp.ne.s32.totalorder %s255, %s269
      %p271 = scmp.eq.s32.totalorder %s34, 0
      %p272 = por %p270, %p271
      %s274 = sadd.s32 %s273, 1
      %p277 = scmp.eq.s32.totalorder %s28, 1
      %p278 = scmp.ne.s32.totalorder %s273, %s275
      %p279 = scmp.eq.s32.totalorder %s28, 0
      %p280 = por %p278, %p279
      %p281 = scmp.ne.s32.totalorder %s273, %s275
      %p282 = scmp.eq.s32.totalorder %s33, 1
      %p283 = por %p281, %p282
      %p284 = scmp.ne.s32.totalorder %s275, %s276
      %p285 = scmp.eq.s32.totalorder %s33, 0
      %p286 = por %p284, %p285
      %p287 = scmp.ne.s32.totalorder %s275, %s276
      %p288 = scmp.eq.s32.totalorder %s34, 1
      %p289 = por %p287, %p288
      %p291 = scmp.ne.s32.totalorder %s276, %s290
      %p292 = scmp.eq.s32.totalorder %s34, 0
      %p293 = por %p291, %p292
      %s294 = ssub.s32 %s35, %s47
      %p295 = scmp.eq.s32.totalorder %s294, 0
      %s297 = sadd.s32 %s296, 1
      %s298 = scalar_select %p295, %s296, %s297
      %p301 = pneg %p295
      %p302 = scmp.eq.s32.totalorder %s28, 1
      %p303 = por %p301, %p302
      %p304 = scmp.ne.s32.totalorder %s296, %s299
      %p305 = scmp.eq.s32.totalorder %s28, 0
      %p306 = por %p304, %p305
      %p307 = scmp.ne.s32.totalorder %s296, %s299
      %p308 = scmp.eq.s32.totalorder %s33, 1
      %p309 = por %p307, %p308
      %p310 = scmp.ne.s32.totalorder %s299, %s300
      %p311 = scmp.eq.s32.totalorder %s33, 0
      %p312 = por %p310, %p311
      %p313 = scmp.ne.s32.totalorder %s299, %s300
      %p314 = scmp.eq.s32.totalorder %s34, 1
      %p315 = por %p313, %p314
      %p317 = scmp.ne.s32.totalorder %s300, %s316
      %p318 = scmp.eq.s32.totalorder %s34, 0
      %p319 = por %p317, %p318
      %p320 = scmp.le.s32.totalorder 1, %s28
      %p321 = scmp.lt.s32.totalorder %s28, 3
      %p322 = pnand %p320, %p321
      %p323 = pneg %p322
      // Predicated region
      $region9: #{tpu_custom_call.1} parent=5 // pred_check
        _
      $region10: #{tpu_custom_call.1} parent=5 // pred_check_branch
        %325 = sbr.rel (%p322) target = $region12
      $region11: #{tpu_custom_call.1} parent=5 // pred_region
        %s326 = ssub.s32 %s28, 1
        // Predicated region
        $region13: #{tpu_custom_call.1} parent=11 // pred_check
          %p327 = pneg %p87
        $region14: #{tpu_custom_call.1} parent=11 // pred_check_branch
          %329 = sbr.rel (%p327) target = $region16
        $region15: #{tpu_custom_call.1} parent=11 // pred_region
          %s331 = ssub.s32 16, 16
          %332 = vsyncadd [#allocation8], %s331
          %s334 = sshll.u32 [#allocation7], 4
          %s335 = int_to_ptr.vmem [resolvable:$true] %s334
          %337 = dma.hbm_to_vmem [thread:$0]  %s1, 16, %s335, [#allocation8]
        $region16: #{tpu_custom_call.1} parent=11 // pred_fallthru
          _
        // Predicated region
        $region17: #{tpu_custom_call.1} parent=11 // pred_check
          %p338 = pneg %p108
        $region18: #{tpu_custom_call.1} parent=11 // pred_check_branch
          %340 = sbr.rel (%p338) target = $region20
        $region19: #{tpu_custom_call.1} parent=11 // pred_region
          %s342 = ssub.s32 16, 16
          %343 = vsyncadd [#allocation8], %s342
          %s345 = sshll.u32 [#allocation9], 4
          %s346 = int_to_ptr.vmem [resolvable:$true] %s345
          %348 = dma.hbm_to_vmem [thread:$0]  %s2, 16, %s346, [#allocation8]
        $region20: #{tpu_custom_call.1} parent=11 // pred_fallthru
          _
        // Predicated region
        $region21: #{tpu_custom_call.1} parent=11 // pred_check
          %p349 = pneg %p134
        $region22: #{tpu_custom_call.1} parent=11 // pred_check_branch
          %351 = sbr.rel (%p349) target = $region24
        $region23: #{tpu_custom_call.1} parent=11 // pred_region
          %s353 = ssub.s32 6144, 6144
          %354 = vsyncadd [#allocation11], %s353
          %s355 = smul.addr %s38, 48
          %s356 = smul.addr %s355, 128
          %s357 = scalar_lea.hbm %s3, %s356
          %s358 = sshll.u32 [#allocation10], 4
          %s359 = int_to_ptr.vmem [resolvable:$true] %s358
          %364 = dma.hbm_to_vmem [thread:$0]  %s357, 6144, %s359, [#allocation11], 384, 384, 24
        $region24: #{tpu_custom_call.1} parent=11 // pred_fallthru
          _
        // Predicated region
        $region25: #{tpu_custom_call.1} parent=11 // pred_check
          %p365 = pneg %p160
        $region26: #{tpu_custom_call.1} parent=11 // pred_check_branch
          %367 = sbr.rel (%p365) target = $region28
        $region27: #{tpu_custom_call.1} parent=11 // pred_region
          %s369 = ssub.s32 2048, 2048
          %370 = vsyncadd [#allocation11], %s369
          %s371 = smul.addr %s38, 16
          %s372 = smul.addr %s371, 128
          %s373 = scalar_lea.hbm %s4, %s372
          %s374 = sshll.u32 [#allocation12], 4
          %s375 = int_to_ptr.vmem [resolvable:$true] %s374
          %380 = dma.hbm_to_vmem [thread:$0]  %s373, 2048, %s375, [#allocation11], 128, 128, 8
        $region28: #{tpu_custom_call.1} parent=11 // pred_fallthru
          _
        // Predicated region
        $region29: #{tpu_custom_call.1} parent=11 // pred_check
          %p381 = pneg %p181
        $region30: #{tpu_custom_call.1} parent=11 // pred_check_branch
          %383 = sbr.rel (%p381) target = $region32
        $region31: #{tpu_custom_call.1} parent=11 // pred_region
          %s385 = ssub.s32 16, 16
          %386 = vsyncadd [#allocation14], %s385
          %s388 = sshll.u32 [#allocation13], 4
          %s389 = int_to_ptr.vmem [resolvable:$true] %s388
          %391 = dma.hbm_to_vmem [thread:$0]  %s5, 16, %s389, [#allocation14]
        $region32: #{tpu_custom_call.1} parent=11 // pred_fallthru
          _
        // Predicated region
        $region33: #{tpu_custom_call.1} parent=11 // pred_check
          %p392 = pneg %p202
        $region34: #{tpu_custom_call.1} parent=11 // pred_check_branch
          %394 = sbr.rel (%p392) target = $region36
        $region35: #{tpu_custom_call.1} parent=11 // pred_region
          %s396 = ssub.s32 16, 16
          %397 = vsyncadd [#allocation14], %s396
          %s399 = sshll.u32 [#allocation15], 4
          %s400 = int_to_ptr.vmem [resolvable:$true] %s399
          %402 = dma.hbm_to_vmem [thread:$0]  %s6, 16, %s400, [#allocation14]
        $region36: #{tpu_custom_call.1} parent=11 // pred_fallthru
          _
        // Predicated region
        $region37: #{tpu_custom_call.1} parent=11 // pred_check
          %p403 = pneg %p223
        $region38: #{tpu_custom_call.1} parent=11 // pred_check_branch
          %405 = sbr.rel (%p403) target = $region40
        $region39: #{tpu_custom_call.1} parent=11 // pred_region
          %s407 = ssub.s32 4096, 4096
          %408 = vsyncadd [#allocation17], %s407
          %s409 = sshll.u32 [#allocation16], 4
          %s410 = int_to_ptr.vmem [resolvable:$true] %s409
          %415 = dma.hbm_to_vmem [thread:$0]  %s7, 4096, %s410, [#allocation17], 256, 256, 16
        $region40: #{tpu_custom_call.1} parent=11 // pred_fallthru
          _
        // Predicated region
        $region41: #{tpu_custom_call.1} parent=11 // pred_check
          %p416 = pneg %p244
        $region42: #{tpu_custom_call.1} parent=11 // pred_check_branch
          %418 = sbr.rel (%p416) target = $region44
        $region43: #{tpu_custom_call.1} parent=11 // pred_region
          %s420 = ssub.s32 32, 32
          %421 = vsyncadd [#allocation17], %s420
          %s423 = sshll.u32 [#allocation18], 4
          %s424 = int_to_ptr.vmem [resolvable:$true] %s423
          %426 = dma.hbm_to_vmem [thread:$0]  %s8, 32, %s424, [#allocation17]
        $region44: #{tpu_custom_call.1} parent=11 // pred_fallthru
          _
        // Predicated region
        $region45: #{tpu_custom_call.1} parent=11 // pred_check
          %p427 = pneg %p265
        $region46: #{tpu_custom_call.1} parent=11 // pred_check_branch
          %429 = sbr.rel (%p427) target = $region48
        $region47: #{tpu_custom_call.1} parent=11 // pred_region
          %s431 = ssub.s32 4096, 4096
          %432 = vsyncadd [#allocation20], %s431
          %s433 = sshll.u32 [#allocation19], 4
          %s434 = int_to_ptr.vmem [resolvable:$true] %s433
          %439 = dma.hbm_to_vmem [thread:$0]  %s9, 4096, %s434, [#allocation20], 128, 128, 8
        $region48: #{tpu_custom_call.1} parent=11 // pred_fallthru
          _
        // Predicated region
        $region49: #{tpu_custom_call.1} parent=11 // pred_check
          %p440 = pneg %p286
        $region50: #{tpu_custom_call.1} parent=11 // pred_check_branch
          %442 = sbr.rel (%p440) target = $region52
        $region51: #{tpu_custom_call.1} parent=11 // pred_region
          %s444 = ssub.s32 16, 16
          %445 = vsyncadd [#allocation20], %s444
          %s447 = sshll.u32 [#allocation21], 4
          %s448 = int_to_ptr.vmem [resolvable:$true] %s447
          %450 = dma.hbm_to_vmem [thread:$0]  %s10, 16, %s448, [#allocation20]
        $region52: #{tpu_custom_call.1} parent=11 // pred_fallthru
          _
      $region12: #{tpu_custom_call.1} parent=5 // pred_fallthru
        _
      %p451 = scmp.lt.s32.totalorder %s28, 2
      // Predicated region
      $region53: #{tpu_custom_call.1} parent=5 // pred_check
        %p452 = pneg %p451
      $region54: #{tpu_custom_call.1} parent=5 // pred_check_branch
        %454 = sbr.rel (%p452) target = $region56
      $region55: #{tpu_custom_call.1} parent=5 // pred_region
        // Predicated region
        $region57: #{tpu_custom_call.1} parent=55 // pred_check
          %p455 = pneg %p60
        $region58: #{tpu_custom_call.1} parent=55 // pred_check_branch
          %457 = sbr.rel (%p455) target = $region60
        $region59: #{tpu_custom_call.1} parent=55 // pred_region
          %s458 = sand.u32 %s50, 1
          %s459 = scalar_lea.sflag [#allocation5], %s458
          %s460 = sand.u32 %s50, 1
          %s461 = smul.addr %s460, 16
          %s462 = scalar_lea.vmem [#allocation4], %s461
          %s464 = ssub.s32 256, 256
          %465 = vsyncadd %s459, %s464
          %s466 = smul.addr %s35, 2
          %s467 = smul.addr %s466, 128
          %s468 = scalar_lea.hbm %s0, %s467
          %s469 = sshll.u32 %s462, 4
          %s470 = int_to_ptr.vmem [resolvable:$true] %s469
          %475 = dma.hbm_to_vmem [thread:$0]  %s468, 256, %s470, %s459, 128, 128, 8
        $region60: #{tpu_custom_call.1} parent=55 // pred_fallthru
          _
      $region56: #{tpu_custom_call.1} parent=5 // pred_fallthru
        _
      %p476 = scmp.le.s32.totalorder 1, %s28
      %p477 = scmp.lt.s32.totalorder %s28, 3
      %p478 = pnand %p476, %p477
      %p479 = pneg %p478
      // Predicated region
      $region61: #{tpu_custom_call.1} parent=5 // pred_check
        _
      $region62: #{tpu_custom_call.1} parent=5 // pred_check_branch
        %481 = sbr.rel (%p478) target = $region64
      $region63: #{tpu_custom_call.1} parent=5 // pred_region
        %s482 = ssub.s32 %s28, 1
        %s483 = sand.u32 %s53, 1
        %s484 = scalar_lea.sflag [#allocation5], %s483
        %s485 = sand.u32 %s53, 1
        %s486 = smul.addr %s485, 16
        %s487 = scalar_lea.vmem [#allocation4], %s486
        // Predicated region
        $region65: #{tpu_custom_call.1} parent=63 // pred_check
          %p488 = pneg %p66
        $region66: #{tpu_custom_call.1} parent=63 // pred_check_branch
          %490 = sbr.rel (%p488) target = $region68
        $region67: #{tpu_custom_call.1} parent=63 // pred_region
          %491 = dma.done %s484, 256
        $region68: #{tpu_custom_call.1} parent=63 // pred_fallthru
          _
        // Predicated region
        $region69: #{tpu_custom_call.1} parent=63 // pred_check
          %p492 = pneg %p87
        $region70: #{tpu_custom_call.1} parent=63 // pred_check_branch
          %494 = sbr.rel (%p492) target = $region72
        $region71: #{tpu_custom_call.1} parent=63 // pred_region
          %495 = dma.done [#allocation8], 16
        $region72: #{tpu_custom_call.1} parent=63 // pred_fallthru
          _
        // Predicated region
        $region73: #{tpu_custom_call.1} parent=63 // pred_check
          %p496 = pneg %p108
        $region74: #{tpu_custom_call.1} parent=63 // pred_check_branch
          %498 = sbr.rel (%p496) target = $region76
        $region75: #{tpu_custom_call.1} parent=63 // pred_region
          %499 = dma.done [#allocation8], 16
        $region76: #{tpu_custom_call.1} parent=63 // pred_fallthru
          _
        // Predicated region
        $region77: #{tpu_custom_call.1} parent=63 // pred_check
          %p500 = pneg %p134
        $region78: #{tpu_custom_call.1} parent=63 // pred_check_branch
          %502 = sbr.rel (%p500) target = $region80
        $region79: #{tpu_custom_call.1} parent=63 // pred_region
          %503 = dma.done [#allocation11], 6144
        $region80: #{tpu_custom_call.1} parent=63 // pred_fallthru
          _
        // Predicated region
        $region81: #{tpu_custom_call.1} parent=63 // pred_check
          %p504 = pneg %p160
        $region82: #{tpu_custom_call.1} parent=63 // pred_check_branch
          %506 = sbr.rel (%p504) target = $region84
        $region83: #{tpu_custom_call.1} parent=63 // pred_region
          %507 = dma.done [#allocation11], 2048
        $region84: #{tpu_custom_call.1} parent=63 // pred_fallthru
          _
        // Predicated region
        $region85: #{tpu_custom_call.1} parent=63 // pred_check
          %p508 = pneg %p181
        $region86: #{tpu_custom_call.1} parent=63 // pred_check_branch
          %510 = sbr.rel (%p508) target = $region88
        $region87: #{tpu_custom_call.1} parent=63 // pred_region
          %511 = dma.done [#allocation14], 16
        $region88: #{tpu_custom_call.1} parent=63 // pred_fallthru
          _
        // Predicated region
        $region89: #{tpu_custom_call.1} parent=63 // pred_check
          %p512 = pneg %p202
        $region90: #{tpu_custom_call.1} parent=63 // pred_check_branch
          %514 = sbr.rel (%p512) target = $region92
        $region91: #{tpu_custom_call.1} parent=63 // pred_region
          %515 = dma.done [#allocation14], 16
        $region92: #{tpu_custom_call.1} parent=63 // pred_fallthru
          _
        // Predicated region
        $region93: #{tpu_custom_call.1} parent=63 // pred_check
          %p516 = pneg %p223
        $region94: #{tpu_custom_call.1} parent=63 // pred_check_branch
          %518 = sbr.rel (%p516) target = $region96
        $region95: #{tpu_custom_call.1} parent=63 // pred_region
          %519 = dma.done [#allocation17], 4096
        $region96: #{tpu_custom_call.1} parent=63 // pred_fallthru
          _
        // Predicated region
        $region97: #{tpu_custom_call.1} parent=63 // pred_check
          %p520 = pneg %p244
        $region98: #{tpu_custom_call.1} parent=63 // pred_check_branch
          %522 = sbr.rel (%p520) target = $region100
        $region99: #{tpu_custom_call.1} parent=63 // pred_region
          %523 = dma.done [#allocation17], 32
        $region100: #{tpu_custom_call.1} parent=63 // pred_fallthru
          _
        // Predicated region
        $region101: #{tpu_custom_call.1} parent=63 // pred_check
          %p524 = pneg %p265
        $region102: #{tpu_custom_call.1} parent=63 // pred_check_branch
          %526 = sbr.rel (%p524) target = $region104
        $region103: #{tpu_custom_call.1} parent=63 // pred_region
          %527 = dma.done [#allocation20], 4096
        $region104: #{tpu_custom_call.1} parent=63 // pred_fallthru
          _
        // Predicated region
        $region105: #{tpu_custom_call.1} parent=63 // pred_check
          %p528 = pneg %p286
        $region106: #{tpu_custom_call.1} parent=63 // pred_check_branch
          %530 = sbr.rel (%p528) target = $region108
        $region107: #{tpu_custom_call.1} parent=63 // pred_region
          %531 = dma.done [#allocation20], 16
        $region108: #{tpu_custom_call.1} parent=63 // pred_fallthru
          _
        %s532 = sand.u32 %s53, 1
        %s533 = scalar_lea.sflag [#allocation5], %s532
        %s534 = sand.u32 %s53, 1
        %s535 = smul.addr %s534, 16
        %s536 = scalar_lea.vmem [#allocation4], %s535
        %p537 = pneg %p66
        %p538 = pneg %p63
        %p539 = pneg %p87
        %p540 = pneg %p84
        %p541 = pneg %p108
        %p542 = pneg %p105
        %p543 = pneg %p134
        %p544 = pneg %p131
        %p545 = pneg %p160
        %p546 = pneg %p157
        %p547 = pneg %p181
        %p548 = pneg %p178
        %p549 = pneg %p202
        %p550 = pneg %p199
        %p551 = pneg %p223
        %p552 = pneg %p220
        %p553 = pneg %p244
        %p554 = pneg %p241
        %p555 = pneg %p265
        %p556 = pneg %p262
        %p557 = pneg %p286
        %p558 = pneg %p283
        %p559 = pneg %p312
        %p560 = pneg %p309
        %s561 = sand.u32 %s299, 1
        %s562 = scalar_lea.sflag [#allocation6], %s561
        %s563 = sand.u32 %s299, 1
        %s564 = smul.addr %s563, 16
        %s565 = scalar_lea.vmem [#allocation22], %s564
        %v566 = vld [vmem:[%s487] sm:$0xff]
        %v567 = vld [vmem:[%s487 + $0x8] sm:$0xff]
        %v568 = vld [vmem:[#allocation7] sm:$0x1]
        %v569 = vld [vmem:[#allocation9] sm:$0x1]
        %570 = vadd.xlane.f32.xlu0 %v566
        %v571 = vpop.xlane.xlu0 %570
        %572 = vadd.xlane.f32.xlu0 %v567
        %v573 = vpop.xlane.xlu0 %572
        %v574 = vrcp.pop 128.0
        %v575 = vmul.f32 %v571, %v574
        %v576 = vmul.f32 %v573, %v574
        %v577 = vsub.f32 %v566, %v575
        %v578 = vsub.f32 %v567, %v576
        %v579 = vmul.f32 %v577, %v577
        %v580 = vmul.f32 %v578, %v578
        %581 = vadd.xlane.f32.xlu0 %v579
        %v582 = vpop.xlane.xlu0 %581
        %583 = vadd.xlane.f32.xlu0 %v580
        %v584 = vpop.xlane.xlu0 %583
        %v585 = vmul.f32 %v582, %v574
        %v586 = vmul.f32 %v584, %v574
        %v587 = vadd.f32 %v585, 1e-05
        %v588 = vadd.f32 %v586, 1e-05
        %v589 = vrsqrt.pop %v587
        %v590 = vrsqrt.pop %v588
        %v591 = vmul.f32 %v577, %v589
        %v592 = vmul.f32 %v578, %v590
        %v594 = vlaneseq
        %v595 = vshrl.u32 %v594, 7
        %v596 = vsub.s32 0, %v595
        %v597 = vrot.slane %v568, %v596
        %v599 = vmul.f32 %v591, %v597
        %v600 = vmul.f32 %v592, %v597
        %v602 = vlaneseq
        %v603 = vshrl.u32 %v602, 7
        %v604 = vsub.s32 0, %v603
        %v605 = vrot.slane %v569, %v604
        %v607 = vadd.f32 %v599, %v605
        %v608 = vadd.f32 %v600, %v605
        %v609 = vld [vmem:[#allocation10] sm:$0xff]
        %v610 = vld [vmem:[#allocation10 + $0x8] sm:$0xff]
        %v611 = vld [vmem:[#allocation10 + $0x10] sm:$0xff]
        %v612 = vld [vmem:[#allocation10 + $0x18] sm:$0xff]
        %v613 = vld [vmem:[#allocation10 + $0x20] sm:$0xff]
        %v614 = vld [vmem:[#allocation10 + $0x28] sm:$0xff]
        %v615 = vld [vmem:[#allocation10 + $0x30] sm:$0xff]
        %v616 = vld [vmem:[#allocation10 + $0x38] sm:$0xff]
        %v617 = vld [vmem:[#allocation10 + $0x40] sm:$0xff]
        %v618 = vld [vmem:[#allocation10 + $0x48] sm:$0xff]
        %v619 = vld [vmem:[#allocation10 + $0x50] sm:$0xff]
        %v620 = vld [vmem:[#allocation10 + $0x58] sm:$0xff]
        %v621 = vld [vmem:[#allocation10 + $0x60] sm:$0xff]
        %v622 = vld [vmem:[#allocation10 + $0x68] sm:$0xff]
        %v623 = vld [vmem:[#allocation10 + $0x70] sm:$0xff]
        %v624 = vld [vmem:[#allocation10 + $0x78] sm:$0xff]
        %v625 = vld [vmem:[#allocation10 + $0x80] sm:$0xff]
        %v626 = vld [vmem:[#allocation10 + $0x88] sm:$0xff]
        %v627 = vld [vmem:[#allocation10 + $0x90] sm:$0xff]
        %v628 = vld [vmem:[#allocation10 + $0x98] sm:$0xff]
        %v629 = vld [vmem:[#allocation10 + $0xa0] sm:$0xff]
        %v630 = vld [vmem:[#allocation10 + $0xa8] sm:$0xff]
        %v631 = vld [vmem:[#allocation10 + $0xb0] sm:$0xff]
        %v632 = vld [vmem:[#allocation10 + $0xb8] sm:$0xff]
        %v633 = vld [vmem:[#allocation10 + $0xc0] sm:$0xff]
        %v634 = vld [vmem:[#allocation10 + $0xc8] sm:$0xff]
        %v635 = vld [vmem:[#allocation10 + $0xd0] sm:$0xff]
        %v636 = vld [vmem:[#allocation10 + $0xd8] sm:$0xff]
        %v637 = vld [vmem:[#allocation10 + $0xe0] sm:$0xff]
        %v638 = vld [vmem:[#allocation10 + $0xe8] sm:$0xff]
        %v639 = vld [vmem:[#allocation10 + $0xf0] sm:$0xff]
        %v640 = vld [vmem:[#allocation10 + $0xf8] sm:$0xff]
        %v641 = vld [vmem:[#allocation10 + $0x100] sm:$0xff]
        %v642 = vld [vmem:[#allocation10 + $0x108] sm:$0xff]
        %v643 = vld [vmem:[#allocation10 + $0x110] sm:$0xff]
        %v644 = vld [vmem:[#allocation10 + $0x118] sm:$0xff]
        %v645 = vld [vmem:[#allocation10 + $0x120] sm:$0xff]
        %v646 = vld [vmem:[#allocation10 + $0x128] sm:$0xff]
        %v647 = vld [vmem:[#allocation10 + $0x130] sm:$0xff]
        %v648 = vld [vmem:[#allocation10 + $0x138] sm:$0xff]
        %v649 = vld [vmem:[#allocation10 + $0x140] sm:$0xff]
        %v650 = vld [vmem:[#allocation10 + $0x148] sm:$0xff]
        %v651 = vld [vmem:[#allocation10 + $0x150] sm:$0xff]
        %v652 = vld [vmem:[#allocation10 + $0x158] sm:$0xff]
        %v653 = vld [vmem:[#allocation10 + $0x160] sm:$0xff]
        %v654 = vld [vmem:[#allocation10 + $0x168] sm:$0xff]
        %v655 = vld [vmem:[#allocation10 + $0x170] sm:$0xff]
        %v656 = vld [vmem:[#allocation10 + $0x178] sm:$0xff]
        %657 = vmatprep.subr.mxu0 %v610
        %658 = vmatpush1.msra.mxu0 %v609
        %659 = vmatprep.subr.mxu0 %v613
        %660 = vmatpush1.msra.mxu0 %v612
        %661 = vmatprep.subr.mxu0 %v616
        %662 = vmatpush1.msra.mxu0 %v615
        %663 = vmatprep.subr.mxu0 %v619
        %664 = vmatpush1.msra.mxu0 %v618
        %665 = vmatprep.subr.mxu0 %v622
        %666 = vmatpush1.msra.mxu0 %v621
        %667 = vmatprep.subr.mxu0 %v625
        %668 = vmatpush1.msra.mxu0 %v624
        %669 = vmatprep.subr.mxu0 %v628
        %670 = vmatpush1.msra.mxu0 %v627
        %671 = vmatprep.subr.mxu0 %v631
        %672 = vmatpush1.msra.mxu0 %v630
        %673 = vmatprep.subr.mxu0 %v634
        %674 = vmatpush1.msra.mxu0 %v633
        %675 = vmatprep.subr.mxu0 %v637
        %676 = vmatpush1.msra.mxu0 %v636
        %677 = vmatprep.subr.mxu0 %v640
        %678 = vmatpush1.msra.mxu0 %v639
        %679 = vmatprep.subr.mxu0 %v643
        %680 = vmatpush1.msra.mxu0 %v642
        %681 = vmatprep.subr.mxu0 %v646
        %682 = vmatpush1.msra.mxu0 %v645
        %683 = vmatprep.subr.mxu0 %v649
        %684 = vmatpush1.msra.mxu0 %v648
        %685 = vmatprep.subr.mxu0 %v652
        %686 = vmatpush1.msra.mxu0 %v651
        %687 = vmatprep.subr.mxu0 %v655
        %688 = vmatpush1.msra.mxu0 %v654
        %689 = vmatprep.subr.mxu0 0.0
        %690 = vmatpush1.msra.mxu0 0.0
        %691 = vmatprep.subr.mxu0 0.0
        %692 = vmatpush1.msra.mxu0 0.0
        %693 = vmatprep.subr.mxu0 0.0
        %694 = vmatpush1.msra.mxu0 0.0
        %695 = vmatprep.subr.mxu0 0.0
        %696 = vmatpush1.msra.mxu0 0.0
        %697 = vmatprep.subr.mxu0 0.0
        %698 = vmatpush1.msra.mxu0 0.0
        %699 = vmatprep.subr.mxu0 0.0
        %700 = vmatpush1.msra.mxu0 0.0
        %701 = vmatprep.subr.mxu0 0.0
        %702 = vmatpush1.msra.mxu0 0.0
        %703 = vmatprep.subr.mxu0 0.0
        %704 = vmatpush1.msra.mxu0 0.0
        %705 = vmatprep.subr.mxu0 0.0
        %706 = vmatpush1.msra.mxu0 0.0
        %707 = vmatprep.subr.mxu0 0.0
        %708 = vmatpush1.msra.mxu0 0.0
        %709 = vmatprep.subr.mxu0 0.0
        %710 = vmatpush1.msra.mxu0 0.0
        %711 = vmatprep.subr.mxu0 0.0
        %712 = vmatpush1.msra.mxu0 0.0
        %713 = vmatprep.subr.mxu0 0.0
        %714 = vmatpush1.msra.mxu0 0.0
        %715 = vmatprep.subr.mxu0 0.0
        %716 = vmatpush1.msra.mxu0 0.0
        %717 = vmatprep.subr.mxu0 0.0
        %718 = vmatpush1.msra.mxu0 0.0
        %719 = vmatprep.subr.mxu0 0.0
        %720 = vmatpush1.msra.mxu0 0.0
        %721 = vmatprep.mubr.f32.mxu0 0.0
        %722 = vmatmul.mubr.f32.gmra.mrb[0].mxu0 %v607
        %v723 = vpop.f32.mrb[0].mxu0
        %v724 = vadd.f32 0.0, %v723
        %v725 = vpop.f32.mrb[0].mxu0
        %v726 = vadd.f32 0.0, %v725
        %727 = vmatprep.mubr.f32.mxu0 0.0
        %728 = vmatmul.mubr.f32.gmra.mrb[0].mxu0 %v608
        %v729 = vpop.f32.mrb[0].mxu0
        %v730 = vadd.f32 0.0, %v729
        %v731 = vpop.f32.mrb[0].mxu0
        %v732 = vadd.f32 0.0, %v731
        %733 = vdwg.mxu0
        %734 = vmatprep.subr.mxu0 0.0
        %735 = vmatpush1.msra.mxu0 %v611
        %736 = vmatprep.subr.mxu0 0.0
        %737 = vmatpush1.msra.mxu0 %v614
        %738 = vmatprep.subr.mxu0 0.0
        %739 = vmatpush1.msra.mxu0 %v617
        %740 = vmatprep.subr.mxu0 0.0
        %741 = vmatpush1.msra.mxu0 %v620
        %742 = vmatprep.subr.mxu0 0.0
        %743 = vmatpush1.msra.mxu0 %v623
        %744 = vmatprep.subr.mxu0 0.0
        %745 = vmatpush1.msra.mxu0 %v626
        %746 = vmatprep.subr.mxu0 0.0
        %747 = vmatpush1.msra.mxu0 %v629
        %748 = vmatprep.subr.mxu0 0.0
        %749 = vmatpush1.msra.mxu0 %v632
        %750 = vmatprep.subr.mxu0 0.0
        %751 = vmatpush1.msra.mxu0 %v635
        %752 = vmatprep.subr.mxu0 0.0
        %753 = vmatpush1.msra.mxu0 %v638
        %754 = vmatprep.subr.mxu0 0.0
        %755 = vmatpush1.msra.mxu0 %v641
        %756 = vmatprep.subr.mxu0 0.0
        %757 = vmatpush1.msra.mxu0 %v644
        %758 = vmatprep.subr.mxu0 0.0
        %759 = vmatpush1.msra.mxu0 %v647
        %760 = vmatprep.subr.mxu0 0.0
        %761 = vmatpush1.msra.mxu0 %v650
        %762 = vmatprep.subr.mxu0 0.0
        %763 = vmatpush1.msra.mxu0 %v653
        %764 = vmatprep.subr.mxu0 0.0
        %765 = vmatpush1.msra.mxu0 %v656
        %766 = vmatprep.subr.mxu0 0.0
        %767 = vmatpush1.msra.mxu0 0.0
        %768 = vmatprep.subr.mxu0 0.0
        %769 = vmatpush1.msra.mxu0 0.0
        %770 = vmatprep.subr.mxu0 0.0
        %771 = vmatpush1.msra.mxu0 0.0
        %772 = vmatprep.subr.mxu0 0.0
        %773 = vmatpush1.msra.mxu0 0.0
        %774 = vmatprep.subr.mxu0 0.0
        %775 = vmatpush1.msra.mxu0 0.0
        %776 = vmatprep.subr.mxu0 0.0
        %777 = vmatpush1.msra.mxu0 0.0
        %778 = vmatprep.subr.mxu0 0.0
        %779 = vmatpush1.msra.mxu0 0.0
        %780 = vmatprep.subr.mxu0 0.0
        %781 = vmatpush1.msra.mxu0 0.0
        %782 = vmatprep.subr.mxu0 0.0
        %783 = vmatpush1.msra.mxu0 0.0
        %784 = vmatprep.subr.mxu0 0.0
        %785 = vmatpush1.msra.mxu0 0.0
        %786 = vmatprep.subr.mxu0 0.0
        %787 = vmatpush1.msra.mxu0 0.0
        %788 = vmatprep.subr.mxu0 0.0
        %789 = vmatpush1.msra.mxu0 0.0
        %790 = vmatprep.subr.mxu0 0.0
        %791 = vmatpush1.msra.mxu0 0.0
        %792 = vmatprep.subr.mxu0 0.0
        %793 = vmatpush1.msra.mxu0 0.0
        %794 = vmatprep.subr.mxu0 0.0
        %795 = vmatpush1.msra.mxu0 0.0
        %796 = vmatprep.subr.mxu0 0.0
        %797 = vmatpush1.msra.mxu0 0.0
        %798 = vmatprep.mubr.f32.mxu0 0.0
        %799 = vmatmul.mubr.f32.gmra.mrb[0].mxu0 %v607
        %v800 = vpop.f32.mrb[0].mxu0
        %v801 = vadd.f32 0.0, %v800
        %v802 = vpop.f32.mrb[0].mxu0
        %803 = vmatprep.mubr.f32.mxu0 0.0
        %804 = vmatmul.mubr.f32.gmra.mrb[0].mxu0 %v608
        %v805 = vpop.f32.mrb[0].mxu0
        %v806 = vadd.f32 0.0, %v805
        %v807 = vpop.f32.mrb[0].mxu0
        %808 = vdwg.mxu0
        %811 = vrot.lane.b32.xlu0 %v724, 96
        %v812 = vpop.permute.xlu0 %811
        %813 = vrot.lane.b32.xlu0 %v730, 96
        %v814 = vpop.permute.xlu0 %813
        %vm815 = vcmask 261120
        %v816 = vsel %vm815, %v724, 0
        %v818 = vsel %vm815, %v730, 0
        %v820 = vsel %vm815, %v812, 0
        %v822 = vsel %vm815, %v814, 0
        %824 = vmatprep.subr.mxu0 0.0
        %825 = vmatpush1.xpose.msra.mxu0 %v820
        %826 = vmatprep.subr.mxu0 0.0
        %827 = vmatpush1.xpose.msra.mxu0 %v822
        %828 = vmatprep.subr.mxu0 0.0
        %829 = vmatpush1.xpose.msra.mxu0 0.0
        %830 = vmatprep.subr.mxu0 0.0
        %831 = vmatpush1.xpose.msra.mxu0 0.0
        %832 = vmatprep.subr.mxu0 0.0
        %833 = vmatpush1.xpose.msra.mxu0 0.0
        %834 = vmatprep.subr.mxu0 0.0
        %835 = vmatpush1.xpose.msra.mxu0 0.0
        %836 = vmatprep.subr.mxu0 0.0
        %837 = vmatpush1.xpose.msra.mxu0 0.0
        %838 = vmatprep.subr.mxu0 0.0
        %839 = vmatpush1.xpose.msra.mxu0 0.0
        %840 = vmatprep.subr.mxu0 0.0
        %841 = vmatpush1.xpose.msra.mxu0 0.0
        %842 = vmatprep.subr.mxu0 0.0
        %843 = vmatpush1.xpose.msra.mxu0 0.0
        %844 = vmatprep.subr.mxu0 0.0
        %845 = vmatpush1.xpose.msra.mxu0 0.0
        %846 = vmatprep.subr.mxu0 0.0
        %847 = vmatpush1.xpose.msra.mxu0 0.0
        %848 = vmatprep.subr.mxu0 0.0
        %849 = vmatpush1.xpose.msra.mxu0 0.0
        %850 = vmatprep.subr.mxu0 0.0
        %851 = vmatpush1.xpose.msra.mxu0 0.0
        %852 = vmatprep.subr.mxu0 0.0
        %853 = vmatpush1.xpose.msra.mxu0 0.0
        %854 = vmatprep.subr.mxu0 0.0
        %855 = vmatpush1.xpose.msra.mxu0 0.0
        %856 = vmatprep.subr.mxu0 0.0
        %857 = vmatpush1.xpose.msra.mxu0 0.0
        %858 = vmatprep.subr.mxu0 0.0
        %859 = vmatpush1.xpose.msra.mxu0 0.0
        %860 = vmatprep.subr.mxu0 0.0
        %861 = vmatpush1.xpose.msra.mxu0 0.0
        %862 = vmatprep.subr.mxu0 0.0
        %863 = vmatpush1.xpose.msra.mxu0 0.0
        %864 = vmatprep.subr.mxu0 0.0
        %865 = vmatpush1.xpose.msra.mxu0 0.0
        %866 = vmatprep.subr.mxu0 0.0
        %867 = vmatpush1.xpose.msra.mxu0 0.0
        %868 = vmatprep.subr.mxu0 0.0
        %869 = vmatpush1.xpose.msra.mxu0 0.0
        %870 = vmatprep.subr.mxu0 0.0
        %871 = vmatpush1.xpose.msra.mxu0 0.0
        %872 = vmatprep.subr.mxu0 0.0
        %873 = vmatpush1.xpose.msra.mxu0 0.0
        %874 = vmatprep.subr.mxu0 0.0
        %875 = vmatpush1.xpose.msra.mxu0 0.0
        %876 = vmatprep.subr.mxu0 0.0
        %877 = vmatpush1.xpose.msra.mxu0 0.0
        %878 = vmatprep.subr.mxu0 0.0
        %879 = vmatpush1.xpose.msra.mxu0 0.0
        %880 = vmatprep.subr.mxu0 0.0
        %881 = vmatpush1.xpose.msra.mxu0 0.0
        %882 = vmatprep.subr.mxu0 0.0
        %883 = vmatpush1.xpose.msra.mxu0 0.0
        %884 = vmatprep.subr.mxu0 0.0
        %885 = vmatpush1.xpose.msra.mxu0 0.0
        %886 = vmatprep.subr.mxu0 0.0
        %887 = vmatpush1.xpose.msra.mxu0 0.0
        %888 = vmatprep.mubr.f32.mxu0 0.0
        %889 = vmatmul.mubr.f32.gmra.mrb[0].mxu0 %v816
        %v890 = vpop.f32.mrb[0].mxu0
        %v891 = vadd.f32 0.0, %v890
        %v892 = vpop.f32.mrb[0].mxu0
        %893 = vmatprep.mubr.f32.mxu0 0.0
        %894 = vmatmul.mubr.f32.gmra.mrb[0].mxu0 %v818
        %v895 = vpop.f32.mrb[0].mxu0
        %v896 = vadd.f32 0.0, %v895
        %v897 = vpop.f32.mrb[0].mxu0
        %898 = vdwg.mxu0
        %vm899 = vcmask 130048
        %v900 = vsel %vm899, %v891, -inf
        %901 = vmax.xlane.f32.xlu0 %v900
        %v902 = vpop.xlane.xlu0 %901
        %v903 = vsel %vm899, %v896, -inf
        %904 = vmax.xlane.f32.xlu0 %v903
        %v905 = vpop.xlane.xlu0 %904
        %v906 = vsub.f32 %v891, %v902
        %v907 = vsub.f32 %v896, %v905
        %v908 = vmul.f32 %v906, 1.442695
        %v909 = vpow.pop %v908
        %v910 = vmul.f32 %v907, 1.442695
        %v911 = vpow.pop %v910
        %v912 = vsel %vm899, %v909, 0.0
        %913 = vadd.xlane.f32.xlu0 %v912
        %v914 = vpop.xlane.xlu0 %913
        %v915 = vsel %vm899, %v911, 0.0
        %916 = vadd.xlane.f32.xlu0 %v915
        %v917 = vpop.xlane.xlu0 %916
        %918 = vrot.lane.b32.xlu0 %v724, 64
        %v919 = vpop.permute.xlu0 %918
        %920 = vrot.lane.b32.xlu0 %v730, 64
        %v921 = vpop.permute.xlu0 %920
        %v925 = vsel %vm899, %v909, 0
        %v928 = vsel %vm899, %v911, 0
        %930 = vmatprep.subr.mxu0 0.0
        %931 = vmatpush1.msra.mxu0 %v919
        %932 = vmatprep.subr.mxu0 0.0
        %933 = vmatpush1.msra.mxu0 %v921
        %934 = vmatprep.subr.mxu0 0.0
        %935 = vmatpush1.msra.mxu0 0.0
        %936 = vmatprep.subr.mxu0 0.0
        %937 = vmatpush1.msra.mxu0 0.0
        %938 = vmatprep.subr.mxu0 0.0
        %939 = vmatpush1.msra.mxu0 0.0
        %940 = vmatprep.subr.mxu0 0.0
        %941 = vmatpush1.msra.mxu0 0.0
        %942 = vmatprep.subr.mxu0 0.0
        %943 = vmatpush1.msra.mxu0 0.0
        %944 = vmatprep.subr.mxu0 0.0
        %945 = vmatpush1.msra.mxu0 0.0
        %946 = vmatprep.subr.mxu0 0.0
        %947 = vmatpush1.msra.mxu0 0.0
        %948 = vmatprep.subr.mxu0 0.0
        %949 = vmatpush1.msra.mxu0 0.0
        %950 = vmatprep.subr.mxu0 0.0
        %951 = vmatpush1.msra.mxu0 0.0
        %952 = vmatprep.subr.mxu0 0.0
        %953 = vmatpush1.msra.mxu0 0.0
        %954 = vmatprep.subr.mxu0 0.0
        %955 = vmatpush1.msra.mxu0 0.0
        %956 = vmatprep.subr.mxu0 0.0
        %957 = vmatpush1.msra.mxu0 0.0
        %958 = vmatprep.subr.mxu0 0.0
        %959 = vmatpush1.msra.mxu0 0.0
        %960 = vmatprep.subr.mxu0 0.0
        %961 = vmatpush1.msra.mxu0 0.0
        %962 = vmatprep.subr.mxu0 0.0
        %963 = vmatpush1.msra.mxu0 0.0
        %964 = vmatprep.subr.mxu0 0.0
        %965 = vmatpush1.msra.mxu0 0.0
        %966 = vmatprep.subr.mxu0 0.0
        %967 = vmatpush1.msra.mxu0 0.0
        %968 = vmatprep.subr.mxu0 0.0
        %969 = vmatpush1.msra.mxu0 0.0
        %970 = vmatprep.subr.mxu0 0.0
        %971 = vmatpush1.msra.mxu0 0.0
        %972 = vmatprep.subr.mxu0 0.0
        %973 = vmatpush1.msra.mxu0 0.0
        %974 = vmatprep.subr.mxu0 0.0
        %975 = vmatpush1.msra.mxu0 0.0
        %976 = vmatprep.subr.mxu0 0.0
        %977 = vmatpush1.msra.mxu0 0.0
        %978 = vmatprep.subr.mxu0 0.0
        %979 = vmatpush1.msra.mxu0 0.0
        %980 = vmatprep.subr.mxu0 0.0
        %981 = vmatpush1.msra.mxu0 0.0
        %982 = vmatprep.subr.mxu0 0.0
        %983 = vmatpush1.msra.mxu0 0.0
        %984 = vmatprep.subr.mxu0 0.0
        %985 = vmatpush1.msra.mxu0 0.0
        %986 = vmatprep.subr.mxu0 0.0
        %987 = vmatpush1.msra.mxu0 0.0
        %988 = vmatprep.subr.mxu0 0.0
        %989 = vmatpush1.msra.mxu0 0.0
        %990 = vmatprep.subr.mxu0 0.0
        %991 = vmatpush1.msra.mxu0 0.0
        %992 = vmatprep.subr.mxu0 0.0
        %993 = vmatpush1.msra.mxu0 0.0
        %994 = vmatprep.mubr.f32.mxu0 0.0
        %995 = vmatmul.mubr.f32.gmra.mrb[0].mxu0 %v925
        %v996 = vpop.f32.mrb[0].mxu0
        %v997 = vadd.f32 0.0, %v996
        %v998 = vpop.f32.mrb[0].mxu0
        %999 = vmatprep.mubr.f32.mxu0 0.0
        %1000 = vmatmul.mubr.f32.gmra.mrb[0].mxu0 %v928
        %v1001 = vpop.f32.mrb[0].mxu0
        %v1002 = vadd.f32 0.0, %v1001
        %v1003 = vpop.f32.mrb[0].mxu0
        %1004 = vdwg.mxu0
        %v1005 = vrcp.pop %v914
        %v1006 = vmul.f32 %v997, %v1005
        %v1007 = vrcp.pop %v917
        %v1008 = vmul.f32 %v1002, %v1007
        %v1009 = vld [vmem:[#allocation12] sm:$0xff]
        %v1010 = vld [vmem:[#allocation12 + $0x8] sm:$0xff]
        %v1011 = vld [vmem:[#allocation12 + $0x10] sm:$0xff]
        %v1012 = vld [vmem:[#allocation12 + $0x18] sm:$0xff]
        %1013 = vrot.lane.b32.xlu0 %v724, 32
        %v1014 = vpop.permute.xlu0 %1013
        %1015 = vrot.lane.b32.xlu0 %v730, 32
        %v1016 = vpop.permute.xlu0 %1015
        %v1017 = vsel %vm815, %v1014, 0
        %v1019 = vsel %vm815, %v1016, 0
        %v1022 = vsel %vm815, %v726, 0
        %v1025 = vsel %vm815, %v732, 0
        %1027 = vmatprep.subr.mxu0 0.0
        %1028 = vmatpush1.xpose.msra.mxu0 %v1022
        %1029 = vmatprep.subr.mxu0 0.0
        %1030 = vmatpush1.xpose.msra.mxu0 %v1025
        %1031 = vmatprep.subr.mxu0 0.0
        %1032 = vmatpush1.xpose.msra.mxu0 0.0
        %1033 = vmatprep.subr.mxu0 0.0
        %1034 = vmatpush1.xpose.msra.mxu0 0.0
        %1035 = vmatprep.subr.mxu0 0.0
        %1036 = vmatpush1.xpose.msra.mxu0 0.0
        %1037 = vmatprep.subr.mxu0 0.0
        %1038 = vmatpush1.xpose.msra.mxu0 0.0
        %1039 = vmatprep.subr.mxu0 0.0
        %1040 = vmatpush1.xpose.msra.mxu0 0.0
        %1041 = vmatprep.subr.mxu0 0.0
        %1042 = vmatpush1.xpose.msra.mxu0 0.0
        %1043 = vmatprep.subr.mxu0 0.0
        %1044 = vmatpush1.xpose.msra.mxu0 0.0
        %1045 = vmatprep.subr.mxu0 0.0
        %1046 = vmatpush1.xpose.msra.mxu0 0.0
        %1047 = vmatprep.subr.mxu0 0.0
        %1048 = vmatpush1.xpose.msra.mxu0 0.0
        %1049 = vmatprep.subr.mxu0 0.0
        %1050 = vmatpush1.xpose.msra.mxu0 0.0
        %1051 = vmatprep.subr.mxu0 0.0
        %1052 = vmatpush1.xpose.msra.mxu0 0.0
        %1053 = vmatprep.subr.mxu0 0.0
        %1054 = vmatpush1.xpose.msra.mxu0 0.0
        %1055 = vmatprep.subr.mxu0 0.0
        %1056 = vmatpush1.xpose.msra.mxu0 0.0
        %1057 = vmatprep.subr.mxu0 0.0
        %1058 = vmatpush1.xpose.msra.mxu0 0.0
        %1059 = vmatprep.subr.mxu0 0.0
        %1060 = vmatpush1.xpose.msra.mxu0 0.0
        %1061 = vmatprep.subr.mxu0 0.0
        %1062 = vmatpush1.xpose.msra.mxu0 0.0
        %1063 = vmatprep.subr.mxu0 0.0
        %1064 = vmatpush1.xpose.msra.mxu0 0.0
        %1065 = vmatprep.subr.mxu0 0.0
        %1066 = vmatpush1.xpose.msra.mxu0 0.0
        %1067 = vmatprep.subr.mxu0 0.0
        %1068 = vmatpush1.xpose.msra.mxu0 0.0
        %1069 = vmatprep.subr.mxu0 0.0
        %1070 = vmatpush1.xpose.msra.mxu0 0.0
        %1071 = vmatprep.subr.mxu0 0.0
        %1072 = vmatpush1.xpose.msra.mxu0 0.0
        %1073 = vmatprep.subr.mxu0 0.0
        %1074 = vmatpush1.xpose.msra.mxu0 0.0
        %1075 = vmatprep.subr.mxu0 0.0
        %1076 = vmatpush1.xpose.msra.mxu0 0.0
        %1077 = vmatprep.subr.mxu0 0.0
        %1078 = vmatpush1.xpose.msra.mxu0 0.0
        %1079 = vmatprep.subr.mxu0 0.0
        %1080 = vmatpush1.xpose.msra.mxu0 0.0
        %1081 = vmatprep.subr.mxu0 0.0
        %1082 = vmatpush1.xpose.msra.mxu0 0.0
        %1083 = vmatprep.subr.mxu0 0.0
        %1084 = vmatpush1.xpose.msra.mxu0 0.0
        %1085 = vmatprep.subr.mxu0 0.0
        %1086 = vmatpush1.xpose.msra.mxu0 0.0
        %1087 = vmatprep.subr.mxu0 0.0
        %1088 = vmatpush1.xpose.msra.mxu0 0.0
        %1089 = vmatprep.subr.mxu0 0.0
        %1090 = vmatpush1.xpose.msra.mxu0 0.0
        %1091 = vmatprep.mubr.f32.mxu0 0.0
        %1092 = vmatmul.mubr.f32.gmra.mrb[0].mxu0 %v1017
        %v1093 = vpop.f32.mrb[0].mxu0
        %v1094 = vadd.f32 0.0, %v1093
        %v1095 = vpop.f32.mrb[0].mxu0
        %1096 = vmatprep.mubr.f32.mxu0 0.0
        %1097 = vmatmul.mubr.f32.gmra.mrb[0].mxu0 %v1019
        %v1098 = vpop.f32.mrb[0].mxu0
        %v1099 = vadd.f32 0.0, %v1098
        %v1100 = vpop.f32.mrb[0].mxu0
        %1101 = vdwg.mxu0
        %v1102 = vsel %vm899, %v1094, -inf
        %1103 = vmax.xlane.f32.xlu0 %v1102
        %v1104 = vpop.xlane.xlu0 %1103
        %v1105 = vsel %vm899, %v1099, -inf
        %1106 = vmax.xlane.f32.xlu0 %v1105
        %v1107 = vpop.xlane.xlu0 %1106
        %v1108 = vsub.f32 %v1094, %v1104
        %v1109 = vsub.f32 %v1099, %v1107
        %v1110 = vmul.f32 %v1108, 1.442695
        %v1111 = vpow.pop %v1110
        %v1112 = vmul.f32 %v1109, 1.442695
        %v1113 = vpow.pop %v1112
        %v1114 = vsel %vm899, %v1111, 0.0
        %1115 = vadd.xlane.f32.xlu0 %v1114
        %v1116 = vpop.xlane.xlu0 %1115
        %v1117 = vsel %vm899, %v1113, 0.0
        %1118 = vadd.xlane.f32.xlu0 %v1117
        %v1119 = vpop.xlane.xlu0 %1118
        %1120 = vrot.lane.b32.xlu0 %v726, 96
        %v1121 = vpop.permute.xlu0 %1120
        %1122 = vrot.lane.b32.xlu0 %v732, 96
        %v1123 = vpop.permute.xlu0 %1122
        %v1127 = vsel %vm899, %v1111, 0
        %v1130 = vsel %vm899, %v1113, 0
        %1132 = vmatprep.subr.mxu0 0.0
        %1133 = vmatpush1.msra.mxu0 %v1121
        %1134 = vmatprep.subr.mxu0 0.0
        %1135 = vmatpush1.msra.mxu0 %v1123
        %1136 = vmatprep.subr.mxu0 0.0
        %1137 = vmatpush1.msra.mxu0 0.0
        %1138 = vmatprep.subr.mxu0 0.0
        %1139 = vmatpush1.msra.mxu0 0.0
        %1140 = vmatprep.subr.mxu0 0.0
        %1141 = vmatpush1.msra.mxu0 0.0
        %1142 = vmatprep.subr.mxu0 0.0
        %1143 = vmatpush1.msra.mxu0 0.0
        %1144 = vmatprep.subr.mxu0 0.0
        %1145 = vmatpush1.msra.mxu0 0.0
        %1146 = vmatprep.subr.mxu0 0.0
        %1147 = vmatpush1.msra.mxu0 0.0
        %1148 = vmatprep.subr.mxu0 0.0
        %1149 = vmatpush1.msra.mxu0 0.0
        %1150 = vmatprep.subr.mxu0 0.0
        %1151 = vmatpush1.msra.mxu0 0.0
        %1152 = vmatprep.subr.mxu0 0.0
        %1153 = vmatpush1.msra.mxu0 0.0
        %1154 = vmatprep.subr.mxu0 0.0
        %1155 = vmatpush1.msra.mxu0 0.0
        %1156 = vmatprep.subr.mxu0 0.0
        %1157 = vmatpush1.msra.mxu0 0.0
        %1158 = vmatprep.subr.mxu0 0.0
        %1159 = vmatpush1.msra.mxu0 0.0
        %1160 = vmatprep.subr.mxu0 0.0
        %1161 = vmatpush1.msra.mxu0 0.0
        %1162 = vmatprep.subr.mxu0 0.0
        %1163 = vmatpush1.msra.mxu0 0.0
        %1164 = vmatprep.subr.mxu0 0.0
        %1165 = vmatpush1.msra.mxu0 0.0
        %1166 = vmatprep.subr.mxu0 0.0
        %1167 = vmatpush1.msra.mxu0 0.0
        %1168 = vmatprep.subr.mxu0 0.0
        %1169 = vmatpush1.msra.mxu0 0.0
        %1170 = vmatprep.subr.mxu0 0.0
        %1171 = vmatpush1.msra.mxu0 0.0
        %1172 = vmatprep.subr.mxu0 0.0
        %1173 = vmatpush1.msra.mxu0 0.0
        %1174 = vmatprep.subr.mxu0 0.0
        %1175 = vmatpush1.msra.mxu0 0.0
        %1176 = vmatprep.subr.mxu0 0.0
        %1177 = vmatpush1.msra.mxu0 0.0
        %1178 = vmatprep.subr.mxu0 0.0
        %1179 = vmatpush1.msra.mxu0 0.0
        %1180 = vmatprep.subr.mxu0 0.0
        %1181 = vmatpush1.msra.mxu0 0.0
        %1182 = vmatprep.subr.mxu0 0.0
        %1183 = vmatpush1.msra.mxu0 0.0
        %1184 = vmatprep.subr.mxu0 0.0
        %1185 = vmatpush1.msra.mxu0 0.0
        %1186 = vmatprep.subr.mxu0 0.0
        %1187 = vmatpush1.msra.mxu0 0.0
        %1188 = vmatprep.subr.mxu0 0.0
        %1189 = vmatpush1.msra.mxu0 0.0
        %1190 = vmatprep.subr.mxu0 0.0
        %1191 = vmatpush1.msra.mxu0 0.0
        %1192 = vmatprep.subr.mxu0 0.0
        %1193 = vmatpush1.msra.mxu0 0.0
        %1194 = vmatprep.subr.mxu0 0.0
        %1195 = vmatpush1.msra.mxu0 0.0
        %1196 = vmatprep.mubr.f32.mxu0 0.0
        %1197 = vmatmul.mubr.f32.gmra.mrb[0].mxu0 %v1127
        %v1198 = vpop.f32.mrb[0].mxu0
        %v1199 = vadd.f32 0.0, %v1198
        %v1200 = vpop.f32.mrb[0].mxu0
        %1201 = vmatprep.mubr.f32.mxu0 0.0
        %1202 = vmatmul.mubr.f32.gmra.mrb[0].mxu0 %v1130
        %v1203 = vpop.f32.mrb[0].mxu0
        %v1204 = vadd.f32 0.0, %v1203
        %v1205 = vpop.f32.mrb[0].mxu0
        %1206 = vdwg.mxu0
        %v1207 = vrcp.pop %v1116
        %v1208 = vmul.f32 %v1199, %v1207
        %v1209 = vrcp.pop %v1119
        %v1210 = vmul.f32 %v1204, %v1209
        %s1211 = scalar_lea.vmem [#allocation12], 32
        %v1212 = vld [vmem:[%s1211] sm:$0xff]
        %v1213 = vld [vmem:[%s1211 + $0x8] sm:$0xff]
        %v1214 = vld [vmem:[%s1211 + $0x10] sm:$0xff]
        %v1215 = vld [vmem:[%s1211 + $0x18] sm:$0xff]
        %v1217 = vsel %vm815, %v1208, 0
        %v1220 = vsel %vm815, %v1210, 0
        %1222 = vmatprep.subr.mxu0 0.0
        %1223 = vmatpush1.msra.mxu0 %v1212
        %1224 = vmatprep.subr.mxu0 0.0
        %1225 = vmatpush1.msra.mxu0 %v1213
        %1226 = vmatprep.subr.mxu0 0.0
        %1227 = vmatpush1.msra.mxu0 %v1214
        %1228 = vmatprep.subr.mxu0 0.0
        %1229 = vmatpush1.msra.mxu0 %v1215
        %1230 = vmatprep.subr.mxu0 0.0
        %1231 = vmatpush1.msra.mxu0 0.0
        %1232 = vmatprep.subr.mxu0 0.0
        %1233 = vmatpush1.msra.mxu0 0.0
        %1234 = vmatprep.subr.mxu0 0.0
        %1235 = vmatpush1.msra.mxu0 0.0
        %1236 = vmatprep.subr.mxu0 0.0
        %1237 = vmatpush1.msra.mxu0 0.0
        %1238 = vmatprep.subr.mxu0 0.0
        %1239 = vmatpush1.msra.mxu0 0.0
        %1240 = vmatprep.subr.mxu0 0.0
        %1241 = vmatpush1.msra.mxu0 0.0
        %1242 = vmatprep.subr.mxu0 0.0
        %1243 = vmatpush1.msra.mxu0 0.0
        %1244 = vmatprep.subr.mxu0 0.0
        %1245 = vmatpush1.msra.mxu0 0.0
        %1246 = vmatprep.subr.mxu0 0.0
        %1247 = vmatpush1.msra.mxu0 0.0
        %1248 = vmatprep.subr.mxu0 0.0
        %1249 = vmatpush1.msra.mxu0 0.0
        %1250 = vmatprep.subr.mxu0 0.0
        %1251 = vmatpush1.msra.mxu0 0.0
        %1252 = vmatprep.subr.mxu0 0.0
        %1253 = vmatpush1.msra.mxu0 0.0
        %1254 = vmatprep.subr.mxu0 0.0
        %1255 = vmatpush1.msra.mxu0 0.0
        %1256 = vmatprep.subr.mxu0 0.0
        %1257 = vmatpush1.msra.mxu0 0.0
        %1258 = vmatprep.subr.mxu0 0.0
        %1259 = vmatpush1.msra.mxu0 0.0
        %1260 = vmatprep.subr.mxu0 0.0
        %1261 = vmatpush1.msra.mxu0 0.0
        %1262 = vmatprep.subr.mxu0 0.0
        %1263 = vmatpush1.msra.mxu0 0.0
        %1264 = vmatprep.subr.mxu0 0.0
        %1265 = vmatpush1.msra.mxu0 0.0
        %1266 = vmatprep.subr.mxu0 0.0
        %1267 = vmatpush1.msra.mxu0 0.0
        %1268 = vmatprep.subr.mxu0 0.0
        %1269 = vmatpush1.msra.mxu0 0.0
        %1270 = vmatprep.subr.mxu0 0.0
        %1271 = vmatpush1.msra.mxu0 0.0
        %1272 = vmatprep.subr.mxu0 0.0
        %1273 = vmatpush1.msra.mxu0 0.0
        %1274 = vmatprep.subr.mxu0 0.0
        %1275 = vmatpush1.msra.mxu0 0.0
        %1276 = vmatprep.subr.mxu0 0.0
        %1277 = vmatpush1.msra.mxu0 0.0
        %1278 = vmatprep.subr.mxu0 0.0
        %1279 = vmatpush1.msra.mxu0 0.0
        %1280 = vmatprep.subr.mxu0 0.0
        %1281 = vmatpush1.msra.mxu0 0.0
        %1282 = vmatprep.subr.mxu0 0.0
        %1283 = vmatpush1.msra.mxu0 0.0
        %1284 = vmatprep.subr.mxu0 0.0
        %1285 = vmatpush1.msra.mxu0 0.0
        %1286 = vmatprep.mubr.f32.mxu0 0.0
        %1287 = vmatmul.mubr.f32.gmra.mrb[0].mxu0 %v1217
        %v1288 = vpop.f32.mrb[0].mxu0
        %v1289 = vadd.f32 0.0, %v1288
        %v1290 = vpop.f32.mrb[0].mxu0
        %1291 = vmatprep.mubr.f32.mxu0 0.0
        %1292 = vmatmul.mubr.f32.gmra.mrb[0].mxu0 %v1220
        %v1293 = vpop.f32.mrb[0].mxu0
        %v1294 = vadd.f32 0.0, %v1293
        %v1295 = vpop.f32.mrb[0].mxu0
        %1296 = vdwg.mxu0
        %v1298 = vsel %vm815, %v1006, 0
        %v1301 = vsel %vm815, %v1008, 0
        %1303 = vmatprep.subr.mxu0 0.0
        %1304 = vmatpush1.msra.mxu0 %v1009
        %1305 = vmatprep.subr.mxu0 0.0
        %1306 = vmatpush1.msra.mxu0 %v1010
        %1307 = vmatprep.subr.mxu0 0.0
        %1308 = vmatpush1.msra.mxu0 %v1011
        %1309 = vmatprep.subr.mxu0 0.0
        %1310 = vmatpush1.msra.mxu0 %v1012
        %1311 = vmatprep.subr.mxu0 0.0
        %1312 = vmatpush1.msra.mxu0 0.0
        %1313 = vmatprep.subr.mxu0 0.0
        %1314 = vmatpush1.msra.mxu0 0.0
        %1315 = vmatprep.subr.mxu0 0.0
        %1316 = vmatpush1.msra.mxu0 0.0
        %1317 = vmatprep.subr.mxu0 0.0
        %1318 = vmatpush1.msra.mxu0 0.0
        %1319 = vmatprep.subr.mxu0 0.0
        %1320 = vmatpush1.msra.mxu0 0.0
        %1321 = vmatprep.subr.mxu0 0.0
        %1322 = vmatpush1.msra.mxu0 0.0
        %1323 = vmatprep.subr.mxu0 0.0
        %1324 = vmatpush1.msra.mxu0 0.0
        %1325 = vmatprep.subr.mxu0 0.0
        %1326 = vmatpush1.msra.mxu0 0.0
        %1327 = vmatprep.subr.mxu0 0.0
        %1328 = vmatpush1.msra.mxu0 0.0
        %1329 = vmatprep.subr.mxu0 0.0
        %1330 = vmatpush1.msra.mxu0 0.0
        %1331 = vmatprep.subr.mxu0 0.0
        %1332 = vmatpush1.msra.mxu0 0.0
        %1333 = vmatprep.subr.mxu0 0.0
        %1334 = vmatpush1.msra.mxu0 0.0
        %1335 = vmatprep.subr.mxu0 0.0
        %1336 = vmatpush1.msra.mxu0 0.0
        %1337 = vmatprep.subr.mxu0 0.0
        %1338 = vmatpush1.msra.mxu0 0.0
        %1339 = vmatprep.subr.mxu0 0.0
        %1340 = vmatpush1.msra.mxu0 0.0
        %1341 = vmatprep.subr.mxu0 0.0
        %1342 = vmatpush1.msra.mxu0 0.0
        %1343 = vmatprep.subr.mxu0 0.0
        %1344 = vmatpush1.msra.mxu0 0.0
        %1345 = vmatprep.subr.mxu0 0.0
        %1346 = vmatpush1.msra.mxu0 0.0
        %1347 = vmatprep.subr.mxu0 0.0
        %1348 = vmatpush1.msra.mxu0 0.0
        %1349 = vmatprep.subr.mxu0 0.0
        %1350 = vmatpush1.msra.mxu0 0.0
        %1351 = vmatprep.subr.mxu0 0.0
        %1352 = vmatpush1.msra.mxu0 0.0
        %1353 = vmatprep.subr.mxu0 0.0
        %1354 = vmatpush1.msra.mxu0 0.0
        %1355 = vmatprep.subr.mxu0 0.0
        %1356 = vmatpush1.msra.mxu0 0.0
        %1357 = vmatprep.subr.mxu0 0.0
        %1358 = vmatpush1.msra.mxu0 0.0
        %1359 = vmatprep.subr.mxu0 0.0
        %1360 = vmatpush1.msra.mxu0 0.0
        %1361 = vmatprep.subr.mxu0 0.0
        %1362 = vmatpush1.msra.mxu0 0.0
        %1363 = vmatprep.subr.mxu0 0.0
        %1364 = vmatpush1.msra.mxu0 0.0
        %1365 = vmatprep.subr.mxu0 0.0
        %1366 = vmatpush1.msra.mxu0 0.0
        %1367 = vmatprep.mubr.f32.mxu0 0.0
        %1368 = vmatmul.mubr.f32.gmra.mrb[0].mxu0 %v1298
        %v1369 = vpop.f32.mrb[0].mxu0
        %v1370 = vadd.f32 %v1289, %v1369
        %v1371 = vpop.f32.mrb[0].mxu0
        %1372 = vmatprep.mubr.f32.mxu0 0.0
        %1373 = vmatmul.mubr.f32.gmra.mrb[0].mxu0 %v1301
        %v1374 = vpop.f32.mrb[0].mxu0
        %v1375 = vadd.f32 %v1294, %v1374
        %v1376 = vpop.f32.mrb[0].mxu0
        %1377 = vdwg.mxu0
        %1378 = vrot.lane.b32.xlu0 %v726, 64
        %v1379 = vpop.permute.xlu0 %1378
        %1380 = vrot.lane.b32.xlu0 %v732, 64
        %v1381 = vpop.permute.xlu0 %1380
        %1382 = vrot.lane.b32.xlu0 %v726, 32
        %v1383 = vpop.permute.xlu0 %1382
        %1384 = vrot.lane.b32.xlu0 %v732, 32
        %v1385 = vpop.permute.xlu0 %1384
        %v1386 = vsel %vm815, %v1379, 0
        %v1388 = vsel %vm815, %v1381, 0
        %v1390 = vsel %vm815, %v1383, 0
        %v1392 = vsel %vm815, %v1385, 0
        %1394 = vmatprep.subr.mxu0 0.0
        %1395 = vmatpush1.xpose.msra.mxu0 %v1390
        %1396 = vmatprep.subr.mxu0 0.0
        %1397 = vmatpush1.xpose.msra.mxu0 %v1392
        %1398 = vmatprep.subr.mxu0 0.0
        %1399 = vmatpush1.xpose.msra.mxu0 0.0
        %1400 = vmatprep.subr.mxu0 0.0
        %1401 = vmatpush1.xpose.msra.mxu0 0.0
        %1402 = vmatprep.subr.mxu0 0.0
        %1403 = vmatpush1.xpose.msra.mxu0 0.0
        %1404 = vmatprep.subr.mxu0 0.0
        %1405 = vmatpush1.xpose.msra.mxu0 0.0
        %1406 = vmatprep.subr.mxu0 0.0
        %1407 = vmatpush1.xpose.msra.mxu0 0.0
        %1408 = vmatprep.subr.mxu0 0.0
        %1409 = vmatpush1.xpose.msra.mxu0 0.0
        %1410 = vmatprep.subr.mxu0 0.0
        %1411 = vmatpush1.xpose.msra.mxu0 0.0
        %1412 = vmatprep.subr.mxu0 0.0
        %1413 = vmatpush1.xpose.msra.mxu0 0.0
        %1414 = vmatprep.subr.mxu0 0.0
        %1415 = vmatpush1.xpose.msra.mxu0 0.0
        %1416 = vmatprep.subr.mxu0 0.0
        %1417 = vmatpush1.xpose.msra.mxu0 0.0
        %1418 = vmatprep.subr.mxu0 0.0
        %1419 = vmatpush1.xpose.msra.mxu0 0.0
        %1420 = vmatprep.subr.mxu0 0.0
        %1421 = vmatpush1.xpose.msra.mxu0 0.0
        %1422 = vmatprep.subr.mxu0 0.0
        %1423 = vmatpush1.xpose.msra.mxu0 0.0
        %1424 = vmatprep.subr.mxu0 0.0
        %1425 = vmatpush1.xpose.msra.mxu0 0.0
        %1426 = vmatprep.subr.mxu0 0.0
        %1427 = vmatpush1.xpose.msra.mxu0 0.0
        %1428 = vmatprep.subr.mxu0 0.0
        %1429 = vmatpush1.xpose.msra.mxu0 0.0
        %1430 = vmatprep.subr.mxu0 0.0
        %1431 = vmatpush1.xpose.msra.mxu0 0.0
        %1432 = vmatprep.subr.mxu0 0.0
        %1433 = vmatpush1.xpose.msra.mxu0 0.0
        %1434 = vmatprep.subr.mxu0 0.0
        %1435 = vmatpush1.xpose.msra.mxu0 0.0
        %1436 = vmatprep.subr.mxu0 0.0
        %1437 = vmatpush1.xpose.msra.mxu0 0.0
        %1438 = vmatprep.subr.mxu0 0.0
        %1439 = vmatpush1.xpose.msra.mxu0 0.0
        %1440 = vmatprep.subr.mxu0 0.0
        %1441 = vmatpush1.xpose.msra.mxu0 0.0
        %1442 = vmatprep.subr.mxu0 0.0
        %1443 = vmatpush1.xpose.msra.mxu0 0.0
        %1444 = vmatprep.subr.mxu0 0.0
        %1445 = vmatpush1.xpose.msra.mxu0 0.0
        %1446 = vmatprep.subr.mxu0 0.0
        %1447 = vmatpush1.xpose.msra.mxu0 0.0
        %1448 = vmatprep.subr.mxu0 0.0
        %1449 = vmatpush1.xpose.msra.mxu0 0.0
        %1450 = vmatprep.subr.mxu0 0.0
        %1451 = vmatpush1.xpose.msra.mxu0 0.0
        %1452 = vmatprep.subr.mxu0 0.0
        %1453 = vmatpush1.xpose.msra.mxu0 0.0
        %1454 = vmatprep.subr.mxu0 0.0
        %1455 = vmatpush1.xpose.msra.mxu0 0.0
        %1456 = vmatprep.subr.mxu0 0.0
        %1457 = vmatpush1.xpose.msra.mxu0 0.0
        %1458 = vmatprep.mubr.f32.mxu0 0.0
        %1459 = vmatmul.mubr.f32.gmra.mrb[0].mxu0 %v1386
        %v1460 = vpop.f32.mrb[0].mxu0
        %v1461 = vadd.f32 0.0, %v1460
        %v1462 = vpop.f32.mrb[0].mxu0
        %1463 = vmatprep.mubr.f32.mxu0 0.0
        %1464 = vmatmul.mubr.f32.gmra.mrb[0].mxu0 %v1388
        %v1465 = vpop.f32.mrb[0].mxu0
        %v1466 = vadd.f32 0.0, %v1465
        %v1467 = vpop.f32.mrb[0].mxu0
        %1468 = vdwg.mxu0
        %v1469 = vsel %vm899, %v1461, -inf
        %1470 = vmax.xlane.f32.xlu0 %v1469
        %v1471 = vpop.xlane.xlu0 %1470
        %v1472 = vsel %vm899, %v1466, -inf
        %1473 = vmax.xlane.f32.xlu0 %v1472
        %v1474 = vpop.xlane.xlu0 %1473
        %v1475 = vsub.f32 %v1461, %v1471
        %v1476 = vsub.f32 %v1466, %v1474
        %v1477 = vmul.f32 %v1475, 1.442695
        %v1478 = vpow.pop %v1477
        %v1479 = vmul.f32 %v1476, 1.442695
        %v1480 = vpow.pop %v1479
        %v1481 = vsel %vm899, %v1478, 0.0
        %1482 = vadd.xlane.f32.xlu0 %v1481
        %v1483 = vpop.xlane.xlu0 %1482
        %v1484 = vsel %vm899, %v1480, 0.0
        %1485 = vadd.xlane.f32.xlu0 %v1484
        %v1486 = vpop.xlane.xlu0 %1485
        %v1488 = vsel %vm899, %v1478, 0
        %v1491 = vsel %vm899, %v1480, 0
        %1493 = vmatprep.subr.mxu0 0.0
        %1494 = vmatpush1.msra.mxu0 %v801
        %1495 = vmatprep.subr.mxu0 0.0
        %1496 = vmatpush1.msra.mxu0 %v806
        %1497 = vmatprep.subr.mxu0 0.0
        %1498 = vmatpush1.msra.mxu0 0.0
        %1499 = vmatprep.subr.mxu0 0.0
        %1500 = vmatpush1.msra.mxu0 0.0
        %1501 = vmatprep.subr.mxu0 0.0
        %1502 = vmatpush1.msra.mxu0 0.0
        %1503 = vmatprep.subr.mxu0 0.0
        %1504 = vmatpush1.msra.mxu0 0.0
        %1505 = vmatprep.subr.mxu0 0.0
        %1506 = vmatpush1.msra.mxu0 0.0
        %1507 = vmatprep.subr.mxu0 0.0
        %1508 = vmatpush1.msra.mxu0 0.0
        %1509 = vmatprep.subr.mxu0 0.0
        %1510 = vmatpush1.msra.mxu0 0.0
        %1511 = vmatprep.subr.mxu0 0.0
        %1512 = vmatpush1.msra.mxu0 0.0
        %1513 = vmatprep.subr.mxu0 0.0
        %1514 = vmatpush1.msra.mxu0 0.0
        %1515 = vmatprep.subr.mxu0 0.0
        %1516 = vmatpush1.msra.mxu0 0.0
        %1517 = vmatprep.subr.mxu0 0.0
        %1518 = vmatpush1.msra.mxu0 0.0
        %1519 = vmatprep.subr.mxu0 0.0
        %1520 = vmatpush1.msra.mxu0 0.0
        %1521 = vmatprep.subr.mxu0 0.0
        %1522 = vmatpush1.msra.mxu0 0.0
        %1523 = vmatprep.subr.mxu0 0.0
        %1524 = vmatpush1.msra.mxu0 0.0
        %1525 = vmatprep.subr.mxu0 0.0
        %1526 = vmatpush1.msra.mxu0 0.0
        %1527 = vmatprep.subr.mxu0 0.0
        %1528 = vmatpush1.msra.mxu0 0.0
        %1529 = vmatprep.subr.mxu0 0.0
        %1530 = vmatpush1.msra.mxu0 0.0
        %1531 = vmatprep.subr.mxu0 0.0
        %1532 = vmatpush1.msra.mxu0 0.0
        %1533 = vmatprep.subr.mxu0 0.0
        %1534 = vmatpush1.msra.mxu0 0.0
        %1535 = vmatprep.subr.mxu0 0.0
        %1536 = vmatpush1.msra.mxu0 0.0
        %1537 = vmatprep.subr.mxu0 0.0
        %1538 = vmatpush1.msra.mxu0 0.0
        %1539 = vmatprep.subr.mxu0 0.0
        %1540 = vmatpush1.msra.mxu0 0.0
        %1541 = vmatprep.subr.mxu0 0.0
        %1542 = vmatpush1.msra.mxu0 0.0
        %1543 = vmatprep.subr.mxu0 0.0
        %1544 = vmatpush1.msra.mxu0 0.0
        %1545 = vmatprep.subr.mxu0 0.0
        %1546 = vmatpush1.msra.mxu0 0.0
        %1547 = vmatprep.subr.mxu0 0.0
        %1548 = vmatpush1.msra.mxu0 0.0
        %1549 = vmatprep.subr.mxu0 0.0
        %1550 = vmatpush1.msra.mxu0 0.0
        %1551 = vmatprep.subr.mxu0 0.0
        %1552 = vmatpush1.msra.mxu0 0.0
        %1553 = vmatprep.subr.mxu0 0.0
        %1554 = vmatpush1.msra.mxu0 0.0
        %1555 = vmatprep.subr.mxu0 0.0
        %1556 = vmatpush1.msra.mxu0 0.0
        %1557 = vmatprep.mubr.f32.mxu0 0.0
        %1558 = vmatmul.mubr.f32.gmra.mrb[0].mxu0 %v1488
        %v1559 = vpop.f32.mrb[0].mxu0
        %v1560 = vadd.f32 0.0, %v1559
        %v1561 = vpop.f32.mrb[0].mxu0
        %1562 = vmatprep.mubr.f32.mxu0 0.0
        %1563 = vmatmul.mubr.f32.gmra.mrb[0].mxu0 %v1491
        %v1564 = vpop.f32.mrb[0].mxu0
        %v1565 = vadd.f32 0.0, %v1564
        %v1566 = vpop.f32.mrb[0].mxu0
        %1567 = vdwg.mxu0
        %v1568 = vrcp.pop %v1483
        %v1569 = vmul.f32 %v1560, %v1568
        %v1570 = vrcp.pop %v1486
        %v1571 = vmul.f32 %v1565, %v1570
        %s1572 = scalar_lea.vmem [#allocation12], 64
        %v1573 = vld [vmem:[%s1572] sm:$0xff]
        %v1574 = vld [vmem:[%s1572 + $0x8] sm:$0xff]
        %v1575 = vld [vmem:[%s1572 + $0x10] sm:$0xff]
        %v1576 = vld [vmem:[%s1572 + $0x18] sm:$0xff]
        %v1578 = vsel %vm815, %v1569, 0
        %v1581 = vsel %vm815, %v1571, 0
        %1583 = vmatprep.subr.mxu0 0.0
        %1584 = vmatpush1.msra.mxu0 %v1573
        %1585 = vmatprep.subr.mxu0 0.0
        %1586 = vmatpush1.msra.mxu0 %v1574
        %1587 = vmatprep.subr.mxu0 0.0
        %1588 = vmatpush1.msra.mxu0 %v1575
        %1589 = vmatprep.subr.mxu0 0.0
        %1590 = vmatpush1.msra.mxu0 %v1576
        %1591 = vmatprep.subr.mxu0 0.0
        %1592 = vmatpush1.msra.mxu0 0.0
        %1593 = vmatprep.subr.mxu0 0.0
        %1594 = vmatpush1.msra.mxu0 0.0
        %1595 = vmatprep.subr.mxu0 0.0
        %1596 = vmatpush1.msra.mxu0 0.0
        %1597 = vmatprep.subr.mxu0 0.0
        %1598 = vmatpush1.msra.mxu0 0.0
        %1599 = vmatprep.subr.mxu0 0.0
        %1600 = vmatpush1.msra.mxu0 0.0
        %1601 = vmatprep.subr.mxu0 0.0
        %1602 = vmatpush1.msra.mxu0 0.0
        %1603 = vmatprep.subr.mxu0 0.0
        %1604 = vmatpush1.msra.mxu0 0.0
        %1605 = vmatprep.subr.mxu0 0.0
        %1606 = vmatpush1.msra.mxu0 0.0
        %1607 = vmatprep.subr.mxu0 0.0
        %1608 = vmatpush1.msra.mxu0 0.0
        %1609 = vmatprep.subr.mxu0 0.0
        %1610 = vmatpush1.msra.mxu0 0.0
        %1611 = vmatprep.subr.mxu0 0.0
        %1612 = vmatpush1.msra.mxu0 0.0
        %1613 = vmatprep.subr.mxu0 0.0
        %1614 = vmatpush1.msra.mxu0 0.0
        %1615 = vmatprep.subr.mxu0 0.0
        %1616 = vmatpush1.msra.mxu0 0.0
        %1617 = vmatprep.subr.mxu0 0.0
        %1618 = vmatpush1.msra.mxu0 0.0
        %1619 = vmatprep.subr.mxu0 0.0
        %1620 = vmatpush1.msra.mxu0 0.0
        %1621 = vmatprep.subr.mxu0 0.0
        %1622 = vmatpush1.msra.mxu0 0.0
        %1623 = vmatprep.subr.mxu0 0.0
        %1624 = vmatpush1.msra.mxu0 0.0
        %1625 = vmatprep.subr.mxu0 0.0
        %1626 = vmatpush1.msra.mxu0 0.0
        %1627 = vmatprep.subr.mxu0 0.0
        %1628 = vmatpush1.msra.mxu0 0.0
        %1629 = vmatprep.subr.mxu0 0.0
        %1630 = vmatpush1.msra.mxu0 0.0
        %1631 = vmatprep.subr.mxu0 0.0
        %1632 = vmatpush1.msra.mxu0 0.0
        %1633 = vmatprep.subr.mxu0 0.0
        %1634 = vmatpush1.msra.mxu0 0.0
        %1635 = vmatprep.subr.mxu0 0.0
        %1636 = vmatpush1.msra.mxu0 0.0
        %1637 = vmatprep.subr.mxu0 0.0
        %1638 = vmatpush1.msra.mxu0 0.0
        %1639 = vmatprep.subr.mxu0 0.0
        %1640 = vmatpush1.msra.mxu0 0.0
        %1641 = vmatprep.subr.mxu0 0.0
        %1642 = vmatpush1.msra.mxu0 0.0
        %1643 = vmatprep.subr.mxu0 0.0
        %1644 = vmatpush1.msra.mxu0 0.0
        %1645 = vmatprep.subr.mxu0 0.0
        %1646 = vmatpush1.msra.mxu0 0.0
        %1647 = vmatprep.mubr.f32.mxu0 0.0
        %1648 = vmatmul.mubr.f32.gmra.mrb[0].mxu0 %v1578
        %v1649 = vpop.f32.mrb[0].mxu0
        %v1650 = vadd.f32 0.0, %v1649
        %v1651 = vpop.f32.mrb[0].mxu0
        %1652 = vmatprep.mubr.f32.mxu0 0.0
        %1653 = vmatmul.mubr.f32.gmra.mrb[0].mxu0 %v1581
        %v1654 = vpop.f32.mrb[0].mxu0
        %v1655 = vadd.f32 0.0, %v1654
        %v1656 = vpop.f32.mrb[0].mxu0
        %1657 = vdwg.mxu0
        %v1658 = vadd.f32 %v1370, %v1650
        %v1659 = vadd.f32 %v1375, %v1655
        %1662 = vrot.lane.b32.xlu0 %v801, 96
        %v1663 = vpop.permute.xlu0 %1662
        %1664 = vrot.lane.b32.xlu0 %v806, 96
        %v1665 = vpop.permute.xlu0 %1664
        %1666 = vrot.lane.b32.xlu0 %v801, 64
        %v1667 = vpop.permute.xlu0 %1666
        %1668 = vrot.lane.b32.xlu0 %v806, 64
        %v1669 = vpop.permute.xlu0 %1668
        %v1670 = vsel %vm815, %v1663, 0
        %v1672 = vsel %vm815, %v1665, 0
        %v1674 = vsel %vm815, %v1667, 0
        %v1676 = vsel %vm815, %v1669, 0
        %1678 = vmatprep.subr.mxu0 0.0
        %1679 = vmatpush1.xpose.msra.mxu0 %v1674
        %1680 = vmatprep.subr.mxu0 0.0
        %1681 = vmatpush1.xpose.msra.mxu0 %v1676
        %1682 = vmatprep.subr.mxu0 0.0
        %1683 = vmatpush1.xpose.msra.mxu0 0.0
        %1684 = vmatprep.subr.mxu0 0.0
        %1685 = vmatpush1.xpose.msra.mxu0 0.0
        %1686 = vmatprep.subr.mxu0 0.0
        %1687 = vmatpush1.xpose.msra.mxu0 0.0
        %1688 = vmatprep.subr.mxu0 0.0
        %1689 = vmatpush1.xpose.msra.mxu0 0.0
        %1690 = vmatprep.subr.mxu0 0.0
        %1691 = vmatpush1.xpose.msra.mxu0 0.0
        %1692 = vmatprep.subr.mxu0 0.0
        %1693 = vmatpush1.xpose.msra.mxu0 0.0
        %1694 = vmatprep.subr.mxu0 0.0
        %1695 = vmatpush1.xpose.msra.mxu0 0.0
        %1696 = vmatprep.subr.mxu0 0.0
        %1697 = vmatpush1.xpose.msra.mxu0 0.0
        %1698 = vmatprep.subr.mxu0 0.0
        %1699 = vmatpush1.xpose.msra.mxu0 0.0
        %1700 = vmatprep.subr.mxu0 0.0
        %1701 = vmatpush1.xpose.msra.mxu0 0.0
        %1702 = vmatprep.subr.mxu0 0.0
        %1703 = vmatpush1.xpose.msra.mxu0 0.0
        %1704 = vmatprep.subr.mxu0 0.0
        %1705 = vmatpush1.xpose.msra.mxu0 0.0
        %1706 = vmatprep.subr.mxu0 0.0
        %1707 = vmatpush1.xpose.msra.mxu0 0.0
        %1708 = vmatprep.subr.mxu0 0.0
        %1709 = vmatpush1.xpose.msra.mxu0 0.0
        %1710 = vmatprep.subr.mxu0 0.0
        %1711 = vmatpush1.xpose.msra.mxu0 0.0
        %1712 = vmatprep.subr.mxu0 0.0
        %1713 = vmatpush1.xpose.msra.mxu0 0.0
        %1714 = vmatprep.subr.mxu0 0.0
        %1715 = vmatpush1.xpose.msra.mxu0 0.0
        %1716 = vmatprep.subr.mxu0 0.0
        %1717 = vmatpush1.xpose.msra.mxu0 0.0
        %1718 = vmatprep.subr.mxu0 0.0
        %1719 = vmatpush1.xpose.msra.mxu0 0.0
        %1720 = vmatprep.subr.mxu0 0.0
        %1721 = vmatpush1.xpose.msra.mxu0 0.0
        %1722 = vmatprep.subr.mxu0 0.0
        %1723 = vmatpush1.xpose.msra.mxu0 0.0
        %1724 = vmatprep.subr.mxu0 0.0
        %1725 = vmatpush1.xpose.msra.mxu0 0.0
        %1726 = vmatprep.subr.mxu0 0.0
        %1727 = vmatpush1.xpose.msra.mxu0 0.0
        %1728 = vmatprep.subr.mxu0 0.0
        %1729 = vmatpush1.xpose.msra.mxu0 0.0
        %1730 = vmatprep.subr.mxu0 0.0
        %1731 = vmatpush1.xpose.msra.mxu0 0.0
        %1732 = vmatprep.subr.mxu0 0.0
        %1733 = vmatpush1.xpose.msra.mxu0 0.0
        %1734 = vmatprep.subr.mxu0 0.0
        %1735 = vmatpush1.xpose.msra.mxu0 0.0
        %1736 = vmatprep.subr.mxu0 0.0
        %1737 = vmatpush1.xpose.msra.mxu0 0.0
        %1738 = vmatprep.subr.mxu0 0.0
        %1739 = vmatpush1.xpose.msra.mxu0 0.0
        %1740 = vmatprep.subr.mxu0 0.0
        %1741 = vmatpush1.xpose.msra.mxu0 0.0
        %1742 = vmatprep.mubr.f32.mxu0 0.0
        %1743 = vmatmul.mubr.f32.gmra.mrb[0].mxu0 %v1670
        %v1744 = vpop.f32.mrb[0].mxu0
        %v1745 = vadd.f32 0.0, %v1744
        %v1746 = vpop.f32.mrb[0].mxu0
        %1747 = vmatprep.mubr.f32.mxu0 0.0
        %1748 = vmatmul.mubr.f32.gmra.mrb[0].mxu0 %v1672
        %v1749 = vpop.f32.mrb[0].mxu0
        %v1750 = vadd.f32 0.0, %v1749
        %v1751 = vpop.f32.mrb[0].mxu0
        %1752 = vdwg.mxu0
        %v1753 = vsel %vm899, %v1745, -inf
        %1754 = vmax.xlane.f32.xlu0 %v1753
        %v1755 = vpop.xlane.xlu0 %1754
        %v1756 = vsel %vm899, %v1750, -inf
        %1757 = vmax.xlane.f32.xlu0 %v1756
        %v1758 = vpop.xlane.xlu0 %1757
        %v1759 = vsub.f32 %v1745, %v1755
        %v1760 = vsub.f32 %v1750, %v1758
        %v1761 = vmul.f32 %v1759, 1.442695
        %v1762 = vpow.pop %v1761
        %v1763 = vmul.f32 %v1760, 1.442695
        %v1764 = vpow.pop %v1763
        %v1765 = vsel %vm899, %v1762, 0.0
        %1766 = vadd.xlane.f32.xlu0 %v1765
        %v1767 = vpop.xlane.xlu0 %1766
        %v1768 = vsel %vm899, %v1764, 0.0
        %1769 = vadd.xlane.f32.xlu0 %v1768
        %v1770 = vpop.xlane.xlu0 %1769
        %1771 = vrot.lane.b32.xlu0 %v801, 32
        %v1772 = vpop.permute.xlu0 %1771
        %1773 = vrot.lane.b32.xlu0 %v806, 32
        %v1774 = vpop.permute.xlu0 %1773
        %v1778 = vsel %vm899, %v1762, 0
        %v1781 = vsel %vm899, %v1764, 0
        %1783 = vmatprep.subr.mxu0 0.0
        %1784 = vmatpush1.msra.mxu0 %v1772
        %1785 = vmatprep.subr.mxu0 0.0
        %1786 = vmatpush1.msra.mxu0 %v1774
        %1787 = vmatprep.subr.mxu0 0.0
        %1788 = vmatpush1.msra.mxu0 0.0
        %1789 = vmatprep.subr.mxu0 0.0
        %1790 = vmatpush1.msra.mxu0 0.0
        %1791 = vmatprep.subr.mxu0 0.0
        %1792 = vmatpush1.msra.mxu0 0.0
        %1793 = vmatprep.subr.mxu0 0.0
        %1794 = vmatpush1.msra.mxu0 0.0
        %1795 = vmatprep.subr.mxu0 0.0
        %1796 = vmatpush1.msra.mxu0 0.0
        %1797 = vmatprep.subr.mxu0 0.0
        %1798 = vmatpush1.msra.mxu0 0.0
        %1799 = vmatprep.subr.mxu0 0.0
        %1800 = vmatpush1.msra.mxu0 0.0
        %1801 = vmatprep.subr.mxu0 0.0
        %1802 = vmatpush1.msra.mxu0 0.0
        %1803 = vmatprep.subr.mxu0 0.0
        %1804 = vmatpush1.msra.mxu0 0.0
        %1805 = vmatprep.subr.mxu0 0.0
        %1806 = vmatpush1.msra.mxu0 0.0
        %1807 = vmatprep.subr.mxu0 0.0
        %1808 = vmatpush1.msra.mxu0 0.0
        %1809 = vmatprep.subr.mxu0 0.0
        %1810 = vmatpush1.msra.mxu0 0.0
        %1811 = vmatprep.subr.mxu0 0.0
        %1812 = vmatpush1.msra.mxu0 0.0
        %1813 = vmatprep.subr.mxu0 0.0
        %1814 = vmatpush1.msra.mxu0 0.0
        %1815 = vmatprep.subr.mxu0 0.0
        %1816 = vmatpush1.msra.mxu0 0.0
        %1817 = vmatprep.subr.mxu0 0.0
        %1818 = vmatpush1.msra.mxu0 0.0
        %1819 = vmatprep.subr.mxu0 0.0
        %1820 = vmatpush1.msra.mxu0 0.0
        %1821 = vmatprep.subr.mxu0 0.0
        %1822 = vmatpush1.msra.mxu0 0.0
        %1823 = vmatprep.subr.mxu0 0.0
        %1824 = vmatpush1.msra.mxu0 0.0
        %1825 = vmatprep.subr.mxu0 0.0
        %1826 = vmatpush1.msra.mxu0 0.0
        %1827 = vmatprep.subr.mxu0 0.0
        %1828 = vmatpush1.msra.mxu0 0.0
        %1829 = vmatprep.subr.mxu0 0.0
        %1830 = vmatpush1.msra.mxu0 0.0
        %1831 = vmatprep.subr.mxu0 0.0
        %1832 = vmatpush1.msra.mxu0 0.0
        %1833 = vmatprep.subr.mxu0 0.0
        %1834 = vmatpush1.msra.mxu0 0.0
        %1835 = vmatprep.subr.mxu0 0.0
        %1836 = vmatpush1.msra.mxu0 0.0
        %1837 = vmatprep.subr.mxu0 0.0
        %1838 = vmatpush1.msra.mxu0 0.0
        %1839 = vmatprep.subr.mxu0 0.0
        %1840 = vmatpush1.msra.mxu0 0.0
        %1841 = vmatprep.subr.mxu0 0.0
        %1842 = vmatpush1.msra.mxu0 0.0
        %1843 = vmatprep.subr.mxu0 0.0
        %1844 = vmatpush1.msra.mxu0 0.0
        %1845 = vmatprep.subr.mxu0 0.0
        %1846 = vmatpush1.msra.mxu0 0.0
        %1847 = vmatprep.mubr.f32.mxu0 0.0
        %1848 = vmatmul.mubr.f32.gmra.mrb[0].mxu0 %v1778
        %v1849 = vpop.f32.mrb[0].mxu0
        %v1850 = vadd.f32 0.0, %v1849
        %v1851 = vpop.f32.mrb[0].mxu0
        %1852 = vmatprep.mubr.f32.mxu0 0.0
        %1853 = vmatmul.mubr.f32.gmra.mrb[0].mxu0 %v1781
        %v1854 = vpop.f32.mrb[0].mxu0
        %v1855 = vadd.f32 0.0, %v1854
        %v1856 = vpop.f32.mrb[0].mxu0
        %1857 = vdwg.mxu0
        %v1858 = vrcp.pop %v1767
        %v1859 = vmul.f32 %v1850, %v1858
        %v1860 = vrcp.pop %v1770
        %v1861 = vmul.f32 %v1855, %v1860
        %s1862 = scalar_lea.vmem [#allocation12], 96
        %v1863 = vld [vmem:[%s1862] sm:$0xff]
        %v1864 = vld [vmem:[%s1862 + $0x8] sm:$0xff]
        %v1865 = vld [vmem:[%s1862 + $0x10] sm:$0xff]
        %v1866 = vld [vmem:[%s1862 + $0x18] sm:$0xff]
        %v1868 = vsel %vm815, %v1859, 0
        %v1871 = vsel %vm815, %v1861, 0
        %1873 = vmatprep.subr.mxu0 0.0
        %1874 = vmatpush1.msra.mxu0 %v1863
        %1875 = vmatprep.subr.mxu0 0.0
        %1876 = vmatpush1.msra.mxu0 %v1864
        %1877 = vmatprep.subr.mxu0 0.0
        %1878 = vmatpush1.msra.mxu0 %v1865
        %1879 = vmatprep.subr.mxu0 0.0
        %1880 = vmatpush1.msra.mxu0 %v1866
        %1881 = vmatprep.subr.mxu0 0.0
        %1882 = vmatpush1.msra.mxu0 0.0
        %1883 = vmatprep.subr.mxu0 0.0
        %1884 = vmatpush1.msra.mxu0 0.0
        %1885 = vmatprep.subr.mxu0 0.0
        %1886 = vmatpush1.msra.mxu0 0.0
        %1887 = vmatprep.subr.mxu0 0.0
        %1888 = vmatpush1.msra.mxu0 0.0
        %1889 = vmatprep.subr.mxu0 0.0
        %1890 = vmatpush1.msra.mxu0 0.0
        %1891 = vmatprep.subr.mxu0 0.0
        %1892 = vmatpush1.msra.mxu0 0.0
        %1893 = vmatprep.subr.mxu0 0.0
        %1894 = vmatpush1.msra.mxu0 0.0
        %1895 = vmatprep.subr.mxu0 0.0
        %1896 = vmatpush1.msra.mxu0 0.0
        %1897 = vmatprep.subr.mxu0 0.0
        %1898 = vmatpush1.msra.mxu0 0.0
        %1899 = vmatprep.subr.mxu0 0.0
        %1900 = vmatpush1.msra.mxu0 0.0
        %1901 = vmatprep.subr.mxu0 0.0
        %1902 = vmatpush1.msra.mxu0 0.0
        %1903 = vmatprep.subr.mxu0 0.0
        %1904 = vmatpush1.msra.mxu0 0.0
        %1905 = vmatprep.subr.mxu0 0.0
        %1906 = vmatpush1.msra.mxu0 0.0
        %1907 = vmatprep.subr.mxu0 0.0
        %1908 = vmatpush1.msra.mxu0 0.0
        %1909 = vmatprep.subr.mxu0 0.0
        %1910 = vmatpush1.msra.mxu0 0.0
        %1911 = vmatprep.subr.mxu0 0.0
        %1912 = vmatpush1.msra.mxu0 0.0
        %1913 = vmatprep.subr.mxu0 0.0
        %1914 = vmatpush1.msra.mxu0 0.0
        %1915 = vmatprep.subr.mxu0 0.0
        %1916 = vmatpush1.msra.mxu0 0.0
        %1917 = vmatprep.subr.mxu0 0.0
        %1918 = vmatpush1.msra.mxu0 0.0
        %1919 = vmatprep.subr.mxu0 0.0
        %1920 = vmatpush1.msra.mxu0 0.0
        %1921 = vmatprep.subr.mxu0 0.0
        %1922 = vmatpush1.msra.mxu0 0.0
        %1923 = vmatprep.subr.mxu0 0.0
        %1924 = vmatpush1.msra.mxu0 0.0
        %1925 = vmatprep.subr.mxu0 0.0
        %1926 = vmatpush1.msra.mxu0 0.0
        %1927 = vmatprep.subr.mxu0 0.0
        %1928 = vmatpush1.msra.mxu0 0.0
        %1929 = vmatprep.subr.mxu0 0.0
        %1930 = vmatpush1.msra.mxu0 0.0
        %1931 = vmatprep.subr.mxu0 0.0
        %1932 = vmatpush1.msra.mxu0 0.0
        %1933 = vmatprep.subr.mxu0 0.0
        %1934 = vmatpush1.msra.mxu0 0.0
        %1935 = vmatprep.subr.mxu0 0.0
        %1936 = vmatpush1.msra.mxu0 0.0
        %1937 = vmatprep.mubr.f32.mxu0 0.0
        %1938 = vmatmul.mubr.f32.gmra.mrb[0].mxu0 %v1868
        %v1939 = vpop.f32.mrb[0].mxu0
        %v1940 = vadd.f32 0.0, %v1939
        %v1941 = vpop.f32.mrb[0].mxu0
        %1942 = vmatprep.mubr.f32.mxu0 0.0
        %1943 = vmatmul.mubr.f32.gmra.mrb[0].mxu0 %v1871
        %v1944 = vpop.f32.mrb[0].mxu0
        %v1945 = vadd.f32 0.0, %v1944
        %v1946 = vpop.f32.mrb[0].mxu0
        %1947 = vdwg.mxu0
        %v1948 = vadd.f32 %v1658, %v1940
        %v1949 = vadd.f32 %v1659, %v1945
        %v1950 = vadd.f32 %v1948, %v566
        %v1951 = vadd.f32 %v1949, %v567
        %v1952 = vld [vmem:[#allocation13] sm:$0x1]
        %v1953 = vld [vmem:[#allocation15] sm:$0x1]
        %1954 = vadd.xlane.f32.xlu0 %v1950
        %v1955 = vpop.xlane.xlu0 %1954
        %1956 = vadd.xlane.f32.xlu0 %v1951
        %v1957 = vpop.xlane.xlu0 %1956
        %v1958 = vmul.f32 %v1955, %v574
        %v1959 = vmul.f32 %v1957, %v574
        %v1960 = vsub.f32 %v1950, %v1958
        %v1961 = vsub.f32 %v1951, %v1959
        %v1962 = vmul.f32 %v1960, %v1960
        %v1963 = vmul.f32 %v1961, %v1961
        %1964 = vadd.xlane.f32.xlu0 %v1962
        %v1965 = vpop.xlane.xlu0 %1964
        %1966 = vadd.xlane.f32.xlu0 %v1963
        %v1967 = vpop.xlane.xlu0 %1966
        %v1968 = vmul.f32 %v1965, %v574
        %v1969 = vmul.f32 %v1967, %v574
        %v1970 = vadd.f32 %v1968, 1e-05
        %v1971 = vadd.f32 %v1969, 1e-05
        %v1972 = vrsqrt.pop %v1970
        %v1973 = vrsqrt.pop %v1971
        %v1974 = vmul.f32 %v1960, %v1972
        %v1975 = vmul.f32 %v1961, %v1973
        %v1977 = vlaneseq
        %v1978 = vshrl.u32 %v1977, 7
        %v1979 = vsub.s32 0, %v1978
        %v1980 = vrot.slane %v1952, %v1979
        %v1982 = vmul.f32 %v1974, %v1980
        %v1983 = vmul.f32 %v1975, %v1980
        %v1985 = vlaneseq
        %v1986 = vshrl.u32 %v1985, 7
        %v1987 = vsub.s32 0, %v1986
        %v1988 = vrot.slane %v1953, %v1987
        %v1990 = vadd.f32 %v1982, %v1988
        %v1991 = vadd.f32 %v1983, %v1988
        %v1992 = vld [vmem:[#allocation16] sm:$0xff]
        %v1993 = vld [vmem:[#allocation16 + $0x8] sm:$0xff]
        %v1994 = vld [vmem:[#allocation16 + $0x10] sm:$0xff]
        %v1995 = vld [vmem:[#allocation16 + $0x18] sm:$0xff]
        %v1996 = vld [vmem:[#allocation16 + $0x20] sm:$0xff]
        %v1997 = vld [vmem:[#allocation16 + $0x28] sm:$0xff]
        %v1998 = vld [vmem:[#allocation16 + $0x30] sm:$0xff]
        %v1999 = vld [vmem:[#allocation16 + $0x38] sm:$0xff]
        %v2000 = vld [vmem:[#allocation16 + $0x40] sm:$0xff]
        %v2001 = vld [vmem:[#allocation16 + $0x48] sm:$0xff]
        %v2002 = vld [vmem:[#allocation16 + $0x50] sm:$0xff]
        %v2003 = vld [vmem:[#allocation16 + $0x58] sm:$0xff]
        %v2004 = vld [vmem:[#allocation16 + $0x60] sm:$0xff]
        %v2005 = vld [vmem:[#allocation16 + $0x68] sm:$0xff]
        %v2006 = vld [vmem:[#allocation16 + $0x70] sm:$0xff]
        %v2007 = vld [vmem:[#allocation16 + $0x78] sm:$0xff]
        %v2008 = vld [vmem:[#allocation16 + $0x80] sm:$0xff]
        %v2009 = vld [vmem:[#allocation16 + $0x88] sm:$0xff]
        %v2010 = vld [vmem:[#allocation16 + $0x90] sm:$0xff]
        %v2011 = vld [vmem:[#allocation16 + $0x98] sm:$0xff]
        %v2012 = vld [vmem:[#allocation16 + $0xa0] sm:$0xff]
        %v2013 = vld [vmem:[#allocation16 + $0xa8] sm:$0xff]
        %v2014 = vld [vmem:[#allocation16 + $0xb0] sm:$0xff]
        %v2015 = vld [vmem:[#allocation16 + $0xb8] sm:$0xff]
        %v2016 = vld [vmem:[#allocation16 + $0xc0] sm:$0xff]
        %v2017 = vld [vmem:[#allocation16 + $0xc8] sm:$0xff]
        %v2018 = vld [vmem:[#allocation16 + $0xd0] sm:$0xff]
        %v2019 = vld [vmem:[#allocation16 + $0xd8] sm:$0xff]
        %v2020 = vld [vmem:[#allocation16 + $0xe0] sm:$0xff]
        %v2021 = vld [vmem:[#allocation16 + $0xe8] sm:$0xff]
        %v2022 = vld [vmem:[#allocation16 + $0xf0] sm:$0xff]
        %v2023 = vld [vmem:[#allocation16 + $0xf8] sm:$0xff]
        %v2024 = vld [vmem:[#allocation18] sm:$0x3]
        %v2026 = vlaneseq
        %v2027 = vshrl.u32 %v2026, 7
        %v2028 = vsub.s32 0, %v2027
        %v2029 = vrot.slane %v2024, %v2028
        %v2030 = vlaneseq
        %v2031 = vshrl.u32 %v2030, 7
        %v2032 = vsub.s32 1, %v2031
        %v2033 = vrot.slane %v2024, %v2032
        %2036 = vmatprep.subr.mxu0 %v1993
        %2037 = vmatpush1.msra.mxu0 %v1992
        %2038 = vmatprep.subr.mxu0 %v1995
        %2039 = vmatpush1.msra.mxu0 %v1994
        %2040 = vmatprep.subr.mxu0 %v1997
        %2041 = vmatpush1.msra.mxu0 %v1996
        %2042 = vmatprep.subr.mxu0 %v1999
        %2043 = vmatpush1.msra.mxu0 %v1998
        %2044 = vmatprep.subr.mxu0 %v2001
        %2045 = vmatpush1.msra.mxu0 %v2000
        %2046 = vmatprep.subr.mxu0 %v2003
        %2047 = vmatpush1.msra.mxu0 %v2002
        %2048 = vmatprep.subr.mxu0 %v2005
        %2049 = vmatpush1.msra.mxu0 %v2004
        %2050 = vmatprep.subr.mxu0 %v2007
        %2051 = vmatpush1.msra.mxu0 %v2006
        %2052 = vmatprep.subr.mxu0 %v2009
        %2053 = vmatpush1.msra.mxu0 %v2008
        %2054 = vmatprep.subr.mxu0 %v2011
        %2055 = vmatpush1.msra.mxu0 %v2010
        %2056 = vmatprep.subr.mxu0 %v2013
        %2057 = vmatpush1.msra.mxu0 %v2012
        %2058 = vmatprep.subr.mxu0 %v2015
        %2059 = vmatpush1.msra.mxu0 %v2014
        %2060 = vmatprep.subr.mxu0 %v2017
        %2061 = vmatpush1.msra.mxu0 %v2016
        %2062 = vmatprep.subr.mxu0 %v2019
        %2063 = vmatpush1.msra.mxu0 %v2018
        %2064 = vmatprep.subr.mxu0 %v2021
        %2065 = vmatpush1.msra.mxu0 %v2020
        %2066 = vmatprep.subr.mxu0 %v2023
        %2067 = vmatpush1.msra.mxu0 %v2022
        %2068 = vmatprep.subr.mxu0 0.0
        %2069 = vmatpush1.msra.mxu0 0.0
        %2070 = vmatprep.subr.mxu0 0.0
        %2071 = vmatpush1.msra.mxu0 0.0
        %2072 = vmatprep.subr.mxu0 0.0
        %2073 = vmatpush1.msra.mxu0 0.0
        %2074 = vmatprep.subr.mxu0 0.0
        %2075 = vmatpush1.msra.mxu0 0.0
        %2076 = vmatprep.subr.mxu0 0.0
        %2077 = vmatpush1.msra.mxu0 0.0
        %2078 = vmatprep.subr.mxu0 0.0
        %2079 = vmatpush1.msra.mxu0 0.0
        %2080 = vmatprep.subr.mxu0 0.0
        %2081 = vmatpush1.msra.mxu0 0.0
        %2082 = vmatprep.subr.mxu0 0.0
        %2083 = vmatpush1.msra.mxu0 0.0
        %2084 = vmatprep.subr.mxu0 0.0
        %2085 = vmatpush1.msra.mxu0 0.0
        %2086 = vmatprep.subr.mxu0 0.0
        %2087 = vmatpush1.msra.mxu0 0.0
        %2088 = vmatprep.subr.mxu0 0.0
        %2089 = vmatpush1.msra.mxu0 0.0
        %2090 = vmatprep.subr.mxu0 0.0
        %2091 = vmatpush1.msra.mxu0 0.0
        %2092 = vmatprep.subr.mxu0 0.0
        %2093 = vmatpush1.msra.mxu0 0.0
        %2094 = vmatprep.subr.mxu0 0.0
        %2095 = vmatpush1.msra.mxu0 0.0
        %2096 = vmatprep.subr.mxu0 0.0
        %2097 = vmatpush1.msra.mxu0 0.0
        %2098 = vmatprep.subr.mxu0 0.0
        %2099 = vmatpush1.msra.mxu0 0.0
        %2100 = vmatprep.mubr.f32.mxu0 0.0
        %2101 = vmatmul.mubr.f32.gmra.mrb[0].mxu0 %v1990
        %v2102 = vpop.f32.mrb[0].mxu0
        %v2103 = vadd.f32 %v2029, %v2102
        %v2104 = vpop.f32.mrb[0].mxu0
        %v2105 = vadd.f32 %v2033, %v2104
        %2106 = vmatprep.mubr.f32.mxu0 0.0
        %2107 = vmatmul.mubr.f32.gmra.mrb[0].mxu0 %v1991
        %v2108 = vpop.f32.mrb[0].mxu0
        %v2109 = vadd.f32 %v2029, %v2108
        %v2110 = vpop.f32.mrb[0].mxu0
        %v2111 = vadd.f32 %v2033, %v2110
        %2112 = vdwg.mxu0
        %v2113 = vmul.f32 %v2103, 0.5
        %v2114 = vmul.f32 %v2105, 0.5
        %v2115 = vmul.f32 %v2109, 0.5
        %v2116 = vmul.f32 %v2111, 0.5
        %v2117 = vmul.f32 %v2103, 0.70710677
        %v2118 = vmul.f32 %v2105, 0.70710677
        %v2119 = vmul.f32 %v2109, 0.70710677
        %v2120 = vmul.f32 %v2111, 0.70710677
        %v2121 = verf.f32.pop %v2117
        %v2122 = verf.f32.pop %v2118
        %v2123 = verf.f32.pop %v2119
        %v2124 = verf.f32.pop %v2120
        %v2125 = vadd.f32 %v2121, 1.0
        %v2126 = vadd.f32 %v2122, 1.0
        %v2127 = vadd.f32 %v2123, 1.0
        %v2128 = vadd.f32 %v2124, 1.0
        %v2129 = vmul.f32 %v2113, %v2125
        %v2130 = vmul.f32 %v2114, %v2126
        %v2131 = vmul.f32 %v2115, %v2127
        %v2132 = vmul.f32 %v2116, %v2128
        %v2133 = vld [vmem:[#allocation19] sm:$0xff]
        %v2134 = vld [vmem:[#allocation19 + $0x8] sm:$0xff]
        %v2135 = vld [vmem:[#allocation19 + $0x10] sm:$0xff]
        %v2136 = vld [vmem:[#allocation19 + $0x18] sm:$0xff]
        %v2137 = vld [vmem:[#allocation19 + $0x20] sm:$0xff]
        %v2138 = vld [vmem:[#allocation19 + $0x28] sm:$0xff]
        %v2139 = vld [vmem:[#allocation19 + $0x30] sm:$0xff]
        %v2140 = vld [vmem:[#allocation19 + $0x38] sm:$0xff]
        %v2141 = vld [vmem:[#allocation19 + $0x40] sm:$0xff]
        %v2142 = vld [vmem:[#allocation19 + $0x48] sm:$0xff]
        %v2143 = vld [vmem:[#allocation19 + $0x50] sm:$0xff]
        %v2144 = vld [vmem:[#allocation19 + $0x58] sm:$0xff]
        %v2145 = vld [vmem:[#allocation19 + $0x60] sm:$0xff]
        %v2146 = vld [vmem:[#allocation19 + $0x68] sm:$0xff]
        %v2147 = vld [vmem:[#allocation19 + $0x70] sm:$0xff]
        %v2148 = vld [vmem:[#allocation19 + $0x78] sm:$0xff]
        %v2149 = vld [vmem:[#allocation19 + $0x80] sm:$0xff]
        %v2150 = vld [vmem:[#allocation19 + $0x88] sm:$0xff]
        %v2151 = vld [vmem:[#allocation19 + $0x90] sm:$0xff]
        %v2152 = vld [vmem:[#allocation19 + $0x98] sm:$0xff]
        %v2153 = vld [vmem:[#allocation19 + $0xa0] sm:$0xff]
        %v2154 = vld [vmem:[#allocation19 + $0xa8] sm:$0xff]
        %v2155 = vld [vmem:[#allocation19 + $0xb0] sm:$0xff]
        %v2156 = vld [vmem:[#allocation19 + $0xb8] sm:$0xff]
        %v2157 = vld [vmem:[#allocation19 + $0xc0] sm:$0xff]
        %v2158 = vld [vmem:[#allocation19 + $0xc8] sm:$0xff]
        %v2159 = vld [vmem:[#allocation19 + $0xd0] sm:$0xff]
        %v2160 = vld [vmem:[#allocation19 + $0xd8] sm:$0xff]
        %v2161 = vld [vmem:[#allocation19 + $0xe0] sm:$0xff]
        %v2162 = vld [vmem:[#allocation19 + $0xe8] sm:$0xff]
        %v2163 = vld [vmem:[#allocation19 + $0xf0] sm:$0xff]
        %v2164 = vld [vmem:[#allocation19 + $0xf8] sm:$0xff]
        %v2165 = vld [vmem:[#allocation21] sm:$0x1]
        %v2167 = vlaneseq
        %v2168 = vshrl.u32 %v2167, 7
        %v2169 = vsub.s32 0, %v2168
        %v2170 = vrot.slane %v2165, %v2169
        %2172 = vmatprep.subr.mxu0 0.0
        %2173 = vmatpush1.msra.mxu0 %v2133
        %2174 = vmatprep.subr.mxu0 0.0
        %2175 = vmatpush1.msra.mxu0 %v2134
        %2176 = vmatprep.subr.mxu0 0.0
        %2177 = vmatpush1.msra.mxu0 %v2135
        %2178 = vmatprep.subr.mxu0 0.0
        %2179 = vmatpush1.msra.mxu0 %v2136
        %2180 = vmatprep.subr.mxu0 0.0
        %2181 = vmatpush1.msra.mxu0 %v2137
        %2182 = vmatprep.subr.mxu0 0.0
        %2183 = vmatpush1.msra.mxu0 %v2138
        %2184 = vmatprep.subr.mxu0 0.0
        %2185 = vmatpush1.msra.mxu0 %v2139
        %2186 = vmatprep.subr.mxu0 0.0
        %2187 = vmatpush1.msra.mxu0 %v2140
        %2188 = vmatprep.subr.mxu0 0.0
        %2189 = vmatpush1.msra.mxu0 %v2141
        %2190 = vmatprep.subr.mxu0 0.0
        %2191 = vmatpush1.msra.mxu0 %v2142
        %2192 = vmatprep.subr.mxu0 0.0
        %2193 = vmatpush1.msra.mxu0 %v2143
        %2194 = vmatprep.subr.mxu0 0.0
        %2195 = vmatpush1.msra.mxu0 %v2144
        %2196 = vmatprep.subr.mxu0 0.0
        %2197 = vmatpush1.msra.mxu0 %v2145
        %2198 = vmatprep.subr.mxu0 0.0
        %2199 = vmatpush1.msra.mxu0 %v2146
        %2200 = vmatprep.subr.mxu0 0.0
        %2201 = vmatpush1.msra.mxu0 %v2147
        %2202 = vmatprep.subr.mxu0 0.0
        %2203 = vmatpush1.msra.mxu0 %v2148
        %2204 = vmatprep.subr.mxu0 0.0
        %2205 = vmatpush1.msra.mxu0 %v2149
        %2206 = vmatprep.subr.mxu0 0.0
        %2207 = vmatpush1.msra.mxu0 %v2150
        %2208 = vmatprep.subr.mxu0 0.0
        %2209 = vmatpush1.msra.mxu0 %v2151
        %2210 = vmatprep.subr.mxu0 0.0
        %2211 = vmatpush1.msra.mxu0 %v2152
        %2212 = vmatprep.subr.mxu0 0.0
        %2213 = vmatpush1.msra.mxu0 %v2153
        %2214 = vmatprep.subr.mxu0 0.0
        %2215 = vmatpush1.msra.mxu0 %v2154
        %2216 = vmatprep.subr.mxu0 0.0
        %2217 = vmatpush1.msra.mxu0 %v2155
        %2218 = vmatprep.subr.mxu0 0.0
        %2219 = vmatpush1.msra.mxu0 %v2156
        %2220 = vmatprep.subr.mxu0 0.0
        %2221 = vmatpush1.msra.mxu0 %v2157
        %2222 = vmatprep.subr.mxu0 0.0
        %2223 = vmatpush1.msra.mxu0 %v2158
        %2224 = vmatprep.subr.mxu0 0.0
        %2225 = vmatpush1.msra.mxu0 %v2159
        %2226 = vmatprep.subr.mxu0 0.0
        %2227 = vmatpush1.msra.mxu0 %v2160
        %2228 = vmatprep.subr.mxu0 0.0
        %2229 = vmatpush1.msra.mxu0 %v2161
        %2230 = vmatprep.subr.mxu0 0.0
        %2231 = vmatpush1.msra.mxu0 %v2162
        %2232 = vmatprep.subr.mxu0 0.0
        %2233 = vmatpush1.msra.mxu0 %v2163
        %2234 = vmatprep.subr.mxu0 0.0
        %2235 = vmatpush1.msra.mxu0 %v2164
        %2236 = vmatprep.mubr.f32.mxu0 %v2130
        %2237 = vmatmul.mubr.f32.gmra.mrb[0].mxu0 %v2129
        %v2238 = vpop.f32.mrb[0].mxu0
        %v2239 = vadd.f32 %v2170, %v2238
        %v2240 = vpop.f32.mrb[0].mxu0
        %2241 = vmatprep.mubr.f32.mxu0 %v2132
        %2242 = vmatmul.mubr.f32.gmra.mrb[0].mxu0 %v2131
        %v2243 = vpop.f32.mrb[0].mxu0
        %v2244 = vadd.f32 %v2170, %v2243
        %v2245 = vpop.f32.mrb[0].mxu0
        %2246 = vdwg.mxu0
        %v2247 = vmul.f32 %v2239, 0.5
        %v2248 = vmul.f32 %v2244, 0.5
        %v2249 = vmul.f32 %v2239, 0.70710677
        %v2250 = vmul.f32 %v2244, 0.70710677
        %v2251 = verf.f32.pop %v2249
        %v2252 = verf.f32.pop %v2250
        %v2253 = vadd.f32 %v2251, 1.0
        %v2254 = vadd.f32 %v2252, 1.0
        %v2255 = vmul.f32 %v2247, %v2253
        %v2256 = vmul.f32 %v2248, %v2254
        %v2257 = vadd.f32 %v2255, %v1950
        %v2258 = vadd.f32 %v2256, %v1951
        %2259 = vst [vmem:[%s565] sm:$0xff] %v2257
        %2260 = vst [vmem:[%s565 + $0x8] sm:$0xff] %v2258
        %s2261 = sand.u32 %s299, 1
        %s2262 = scalar_lea.sflag [#allocation6], %s2261
        %s2263 = sand.u32 %s299, 1
        %s2264 = smul.addr %s2263, 16
        %s2265 = scalar_lea.vmem [#allocation22], %s2264
        // Predicated region
        $region109: #{tpu_custom_call.1} parent=63 // pred_check
          %p2266 = pneg %p309
        $region110: #{tpu_custom_call.1} parent=63 // pred_check_branch
          %2268 = sbr.rel (%p2266) target = $region112
        $region111: #{tpu_custom_call.1} parent=63 // pred_region
          %s2270 = ssub.s32 256, 256
          %2271 = vsyncadd %s2262, %s2270
          %s2272 = smul.addr %s37, 2
          %s2273 = smul.addr %s2272, 128
          %s2274 = scalar_lea.hbm %s11, %s2273
          %s2275 = sshll.u32 %s2265, 4
          %s2276 = int_to_ptr.vmem [resolvable:$true] %s2275
          %2281 = dma.vmem_to_hbm [thread:$0]  %s2276, 256, %s2274, %s2262, 128, 128, 8
        $region112: #{tpu_custom_call.1} parent=63 // pred_fallthru
          _
      $region64: #{tpu_custom_call.1} parent=5 // pred_fallthru
        _
      %p2282 = scmp.le.s32.totalorder 2, %s28
      // Predicated region
      $region113: #{tpu_custom_call.1} parent=5 // pred_check
        %p2283 = pneg %p2282
      $region114: #{tpu_custom_call.1} parent=5 // pred_check_branch
        %2285 = sbr.rel (%p2283) target = $region116
      $region115: #{tpu_custom_call.1} parent=5 // pred_region
        %s2286 = ssub.s32 %s28, 2
        // Predicated region
        $region117: #{tpu_custom_call.1} parent=115 // pred_check
          %p2287 = pneg %p315
        $region118: #{tpu_custom_call.1} parent=115 // pred_check_branch
          %2289 = sbr.rel (%p2287) target = $region120
        $region119: #{tpu_custom_call.1} parent=115 // pred_region
          %s2290 = sand.u32 %s300, 1
          %s2291 = scalar_lea.sflag [#allocation6], %s2290
          %s2292 = sand.u32 %s300, 1
          %s2293 = smul.addr %s2292, 16
          %s2294 = scalar_lea.vmem [#allocation22], %s2293
          %2295 = dma.done %s2291, 256
        $region120: #{tpu_custom_call.1} parent=115 // pred_fallthru
          _
      $region116: #{tpu_custom_call.1} parent=5 // pred_fallthru
        _
    $region6: #{tpu_custom_call.1} parent=1 // loop_footer
      %s32 = sadd.s32 1, %s28
    $region7: #{tpu_custom_call.1} parent=1 // loop_footer_branch
      %27 = sbr.rel target = $region3
    $region8: #{tpu_custom_call.1} parent=1 // loop_exit
      _
    %2296 = vsyncpa [#allocation5], 1
    %s2297 = scalar_lea.sflag [#allocation5], 1
    %2298 = vsyncpa %s2297, 1
    %2299 = vsyncpa [#allocation8], 1
    %2300 = vsyncpa [#allocation11], 1
    %2301 = vsyncpa [#allocation14], 1
    %2302 = vsyncpa [#allocation17], 1
    %2303 = vsyncpa [#allocation20], 1
    %2304 = vsyncpa [#allocation6], 1
    %s2305 = scalar_lea.sflag [#allocation6], 1
    %2306 = vsyncpa %s2305, 1

// kernel: tpu_custom_call.1
$region0: #{tpu_custom_call.1}
  #allocation0 [shape = 'u32[]', space=smem, size = 0x4, offset = 0x4, fixed_abs, tag = 'smem constant byte address 0x4 - core index']
  #allocation1 [shape = 'u32[144,128]{1,0:T(1,128)}', space=vmem, size = 0x12000, scoped, tag = 'internal scratch']
  #allocation2 [shape = 'f32[8,128]{1,0:T(8,128)}', space=vmem, size = 0x1000, scoped, tag = 'scratch operand']
  #allocation3 [shape = 'f32[8,128]{1,0:T(8,128)}', space=vmem, size = 0x1000, scoped, tag = 'scratch operand']
  %s0 = inlined_call_operand.hbm [shape: f32[2,16,128], index: 0, kind: input, shape index: {}]
  %s1 = inlined_call_operand.hbm [shape: f32[1,128], index: 1, kind: input, shape index: {}]
  %s2 = inlined_call_operand.hbm [shape: f32[1,128], index: 2, kind: input, shape index: {}]
  %s3 = inlined_call_operand.hbm [shape: f32[1,128,384], index: 3, kind: input, shape index: {}]
  %s4 = inlined_call_operand.hbm [shape: f32[1,4,32,128], index: 4, kind: input, shape index: {}]
  %s5 = inlined_call_operand.hbm [shape: f32[1,128], index: 5, kind: input, shape index: {}]
  %s6 = inlined_call_operand.hbm [shape: f32[1,128], index: 6, kind: input, shape index: {}]
  %s7 = inlined_call_operand.hbm [shape: f32[128,256], index: 7, kind: input, shape index: {}]
  %s8 = inlined_call_operand.hbm [shape: f32[1,256], index: 8, kind: input, shape index: {}]
  %s9 = inlined_call_operand.hbm [shape: f32[256,128], index: 9, kind: input, shape index: {}]
  %s10 = inlined_call_operand.hbm [shape: f32[1,128], index: 10, kind: input, shape index: {}]
  %s11 = inlined_call_operand.hbm [shape: f32[2,16,128], index: 11, kind: output, shape index: {}]
  %s12 = sld [smem:[#allocation0]]
  $region121: #{tpu_custom_call.1} parent=0
    _
  %s14 = ssub.s32 1, %s12
  %s15 = scalar_select 0, %s14, %s12
  $region1: #{tpu_custom_call.1} parent=0
    #allocation4 [shape = 'u8[16384]{0}', space=vmem, size = 0x4000, scoped, tag = 'input window, operand 0']
    #allocation5 [shape = 's32[2]{0}', space=sflag, size = 0x8, scoped, tag = 'scoped memory for tpu_custom_call.1']
    #allocation6 [shape = 's32[2]{0}', space=sflag, size = 0x8, scoped, tag = 'scoped memory for tpu_custom_call.1']
    #allocation7 [shape = 'u8[512]{0}', space=vmem, size = 0x400, scoped, tag = 'input window, operand 1, single buffered']
    #allocation8 [shape = 's32[1]{0}', space=sflag, size = 0x4, scoped, tag = 'scoped memory for tpu_custom_call.1']
    #allocation9 [shape = 'u8[512]{0}', space=vmem, size = 0x400, scoped, tag = 'input window, operand 2, single buffered']
    #allocation10 [shape = 'u8[196608]{0}', space=vmem, size = 0x30000, scoped, tag = 'input window, operand 3, single buffered']
    #allocation11 [shape = 's32[1]{0}', space=sflag, size = 0x4, scoped, tag = 'scoped memory for tpu_custom_call.1']
    #allocation12 [shape = 'u8[65536]{0}', space=vmem, size = 0x10000, scoped, tag = 'input window, operand 4, single buffered']
    #allocation13 [shape = 'u8[512]{0}', space=vmem, size = 0x400, scoped, tag = 'input window, operand 5, single buffered']
    #allocation14 [shape = 's32[1]{0}', space=sflag, size = 0x4, scoped, tag = 'scoped memory for tpu_custom_call.1']
    #allocation15 [shape = 'u8[512]{0}', space=vmem, size = 0x400, scoped, tag = 'input window, operand 6, single buffered']
    #allocation16 [shape = 'u8[131072]{0}', space=vmem, size = 0x20000, scoped, tag = 'input window, operand 7, single buffered']
    #allocation17 [shape = 's32[1]{0}', space=sflag, size = 0x4, scoped, tag = 'scoped memory for tpu_custom_call.1']
    #allocation18 [shape = 'u8[1024]{0}', space=vmem, size = 0x400, scoped, tag = 'input window, operand 8, single buffered']
    #allocation19 [shape = 'u8[131072]{0}', space=vmem, size = 0x20000, scoped, tag = 'input window, operand 9, single buffered']
    #allocation20 [shape = 's32[1]{0}', space=sflag, size = 0x4, scoped, tag = 'scoped memory for tpu_custom_call.1']
    #allocation21 [shape = 'u8[512]{0}', space=vmem, size = 0x400, scoped, tag = 'input window, operand 10, single buffered']
    #allocation22 [shape = 'u8[16384]{0}', space=vmem, size = 0x4000, scoped, tag = 'output window, operand 0']
    %16 = vsyncpa [#allocation5], 0
    %s17 = scalar_lea.sflag [#allocation5], 1
    %18 = vsyncpa %s17, 0
    %19 = vsyncpa [#allocation8], 0
    %20 = vsyncpa [#allocation11], 0
    %21 = vsyncpa [#allocation14], 0
    %22 = vsyncpa [#allocation17], 0
    %23 = vsyncpa [#allocation20], 0
    %24 = vsyncpa [#allocation6], 0
    %s25 = scalar_lea.sflag [#allocation6], 1
    %26 = vsyncpa %s25, 0
    loop: start=0, step=1, limit=4
    $region2: #{tpu_custom_call.1} parent=1 // loop_pre_header
      _
    $region3: #{tpu_custom_call.1} parent=1 // loop_header
      %s28 = sphi 0, %s32
      %p29 = scmp.ge.s32.totalorder %s28, 4
      %s35 = sphi 0, %s47
      %s36 = sphi 0, %s43
      %s37 = sphi 0, %s35
      %s38 = sphi 0, %s36
      %s39 = sphi 0, %s37
      %s40 = sphi 0, %s38
      %s50 = sphi 0, %s52
      %s53 = sphi 0, %s50
      %s54 = sphi 0, %s53
      %s70 = sphi 0, %s54
      %s74 = sphi 0, %s74
      %s76 = sphi 0, %s74
      %s77 = sphi 0, %s76
      %s91 = sphi 0, %s77
      %s95 = sphi 0, %s95
      %s97 = sphi 0, %s95
      %s98 = sphi 0, %s97
      %s112 = sphi 0, %s98
      %s118 = sphi 0, %s120
      %s121 = sphi 0, %s118
      %s122 = sphi 0, %s121
      %s138 = sphi 0, %s122
      %s144 = sphi 0, %s146
      %s147 = sphi 0, %s144
      %s148 = sphi 0, %s147
      %s164 = sphi 0, %s148
      %s168 = sphi 0, %s168
      %s170 = sphi 0, %s168
      %s171 = sphi 0, %s170
      %s185 = sphi 0, %s171
      %s189 = sphi 0, %s189
      %s191 = sphi 0, %s189
      %s192 = sphi 0, %s191
      %s206 = sphi 0, %s192
      %s210 = sphi 0, %s210
      %s212 = sphi 0, %s210
      %s213 = sphi 0, %s212
      %s227 = sphi 0, %s213
      %s231 = sphi 0, %s231
      %s233 = sphi 0, %s231
      %s234 = sphi 0, %s233
      %s248 = sphi 0, %s234
      %s252 = sphi 0, %s252
      %s254 = sphi 0, %s252
      %s255 = sphi 0, %s254
      %s269 = sphi 0, %s255
      %s273 = sphi 0, %s273
      %s275 = sphi 0, %s273
      %s276 = sphi 0, %s275
      %s290 = sphi 0, %s276
      %s296 = sphi 0, %s298
      %s299 = sphi 0, %s296
      %s300 = sphi 0, %s299
      %s316 = sphi 0, %s300
    $region4: #{tpu_custom_call.1} parent=1 // loop_header_branch
      %31 = sbr.rel (%p29) target = $region8
    $region5: #{tpu_custom_call.1} parent=1 // loop_body
      %s33 = ssub.s32 %s28, 1
      %s34 = ssub.s32 %s28, 2
      %s41 = sadd.s32 1, %s36
      %p42 = scmp.ge.s32.totalorder %s41, 1
      %s43 = scalar_select %p42, 0, %s41
      %s44 = sadd.s32 1, %s35
      %s45 = scalar_select %p42, %s44, %s35
      %p46 = scmp.ge.s32.totalorder %s45, 2
      %s47 = scalar_select %p46, 0, %s45
      %s48 = ssub.s32 %s35, %s47
      %p49 = scmp.eq.s32.totalorder %s48, 0
      %s51 = sadd.s32 %s50, 1
      %s52 = scalar_select %p49, %s50, %s51
      %p55 = pneg %p49
      %p56 = scmp.eq.s32.totalorder %s28, 1
      %p57 = por %p55, %p56
      %p58 = scmp.ne.s32.totalorder %s50, %s53
      %p59 = scmp.eq.s32.totalorder %s28, 0
      %p60 = por %p58, %p59
      %p61 = scmp.ne.s32.totalorder %s50, %s53
      %p62 = scmp.eq.s32.totalorder %s33, 1
      %p63 = por %p61, %p62
      %p64 = scmp.ne.s32.totalorder %s53, %s54
      %p65 = scmp.eq.s32.totalorder %s33, 0
      %p66 = por %p64, %p65
      %p67 = scmp.ne.s32.totalorder %s53, %s54
      %p68 = scmp.eq.s32.totalorder %s34, 1
      %p69 = por %p67, %p68
      %p71 = scmp.ne.s32.totalorder %s54, %s70
      %p72 = scmp.eq.s32.totalorder %s34, 0
      %p73 = por %p71, %p72
      %s75 = sadd.s32 %s74, 1
      %p78 = scmp.eq.s32.totalorder %s28, 1
      %p79 = scmp.ne.s32.totalorder %s74, %s76
      %p80 = scmp.eq.s32.totalorder %s28, 0
      %p81 = por %p79, %p80
      %p82 = scmp.ne.s32.totalorder %s74, %s76
      %p83 = scmp.eq.s32.totalorder %s33, 1
      %p84 = por %p82, %p83
      %p85 = scmp.ne.s32.totalorder %s76, %s77
      %p86 = scmp.eq.s32.totalorder %s33, 0
      %p87 = por %p85, %p86
      %p88 = scmp.ne.s32.totalorder %s76, %s77
      %p89 = scmp.eq.s32.totalorder %s34, 1
      %p90 = por %p88, %p89
      %p92 = scmp.ne.s32.totalorder %s77, %s91
      %p93 = scmp.eq.s32.totalorder %s34, 0
      %p94 = por %p92, %p93
      %s96 = sadd.s32 %s95, 1
      %p99 = scmp.eq.s32.totalorder %s28, 1
      %p100 = scmp.ne.s32.totalorder %s95, %s97
      %p101 = scmp.eq.s32.totalorder %s28, 0
      %p102 = por %p100, %p101
      %p103 = scmp.ne.s32.totalorder %s95, %s97
      %p104 = scmp.eq.s32.totalorder %s33, 1
      %p105 = por %p103, %p104
      %p106 = scmp.ne.s32.totalorder %s97, %s98
      %p107 = scmp.eq.s32.totalorder %s33, 0
      %p108 = por %p106, %p107
      %p109 = scmp.ne.s32.totalorder %s97, %s98
      %p110 = scmp.eq.s32.totalorder %s34, 1
      %p111 = por %p109, %p110
      %p113 = scmp.ne.s32.totalorder %s98, %s112
      %p114 = scmp.eq.s32.totalorder %s34, 0
      %p115 = por %p113, %p114
      %s116 = ssub.s32 %s36, %s43
      %p117 = scmp.eq.s32.totalorder %s116, 0
      %s119 = sadd.s32 %s118, 1
      %s120 = scalar_select %p117, %s118, %s119
      %p123 = pneg %p117
      %p124 = scmp.eq.s32.totalorder %s28, 1
      %p125 = por %p123, %p124
      %p126 = scmp.ne.s32.totalorder %s118, %s121
      %p127 = scmp.eq.s32.totalorder %s28, 0
      %p128 = por %p126, %p127
      %p129 = scmp.ne.s32.totalorder %s118, %s121
      %p130 = scmp.eq.s32.totalorder %s33, 1
      %p131 = por %p129, %p130
      %p132 = scmp.ne.s32.totalorder %s121, %s122
      %p133 = scmp.eq.s32.totalorder %s33, 0
      %p134 = por %p132, %p133
      %p135 = scmp.ne.s32.totalorder %s121, %s122
      %p136 = scmp.eq.s32.totalorder %s34, 1
      %p137 = por %p135, %p136
      %p139 = scmp.ne.s32.totalorder %s122, %s138
      %p140 = scmp.eq.s32.totalorder %s34, 0
      %p141 = por %p139, %p140
      %s142 = ssub.s32 %s36, %s43
      %p143 = scmp.eq.s32.totalorder %s142, 0
      %s145 = sadd.s32 %s144, 1
      %s146 = scalar_select %p143, %s144, %s145
      %p149 = pneg %p143
      %p150 = scmp.eq.s32.totalorder %s28, 1
      %p151 = por %p149, %p150
      %p152 = scmp.ne.s32.totalorder %s144, %s147
      %p153 = scmp.eq.s32.totalorder %s28, 0
      %p154 = por %p152, %p153
      %p155 = scmp.ne.s32.totalorder %s144, %s147
      %p156 = scmp.eq.s32.totalorder %s33, 1
      %p157 = por %p155, %p156
      %p158 = scmp.ne.s32.totalorder %s147, %s148
      %p159 = scmp.eq.s32.totalorder %s33, 0
      %p160 = por %p158, %p159
      %p161 = scmp.ne.s32.totalorder %s147, %s148
      %p162 = scmp.eq.s32.totalorder %s34, 1
      %p163 = por %p161, %p162
      %p165 = scmp.ne.s32.totalorder %s148, %s164
      %p166 = scmp.eq.s32.totalorder %s34, 0
      %p167 = por %p165, %p166
      %s169 = sadd.s32 %s168, 1
      %p172 = scmp.eq.s32.totalorder %s28, 1
      %p173 = scmp.ne.s32.totalorder %s168, %s170
      %p174 = scmp.eq.s32.totalorder %s28, 0
      %p175 = por %p173, %p174
      %p176 = scmp.ne.s32.totalorder %s168, %s170
      %p177 = scmp.eq.s32.totalorder %s33, 1
      %p178 = por %p176, %p177
      %p179 = scmp.ne.s32.totalorder %s170, %s171
      %p180 = scmp.eq.s32.totalorder %s33, 0
      %p181 = por %p179, %p180
      %p182 = scmp.ne.s32.totalorder %s170, %s171
      %p183 = scmp.eq.s32.totalorder %s34, 1
      %p184 = por %p182, %p183
      %p186 = scmp.ne.s32.totalorder %s171, %s185
      %p187 = scmp.eq.s32.totalorder %s34, 0
      %p188 = por %p186, %p187
      %s190 = sadd.s32 %s189, 1
      %p193 = scmp.eq.s32.totalorder %s28, 1
      %p194 = scmp.ne.s32.totalorder %s189, %s191
      %p195 = scmp.eq.s32.totalorder %s28, 0
      %p196 = por %p194, %p195
      %p197 = scmp.ne.s32.totalorder %s189, %s191
      %p198 = scmp.eq.s32.totalorder %s33, 1
      %p199 = por %p197, %p198
      %p200 = scmp.ne.s32.totalorder %s191, %s192
      %p201 = scmp.eq.s32.totalorder %s33, 0
      %p202 = por %p200, %p201
      %p203 = scmp.ne.s32.totalorder %s191, %s192
      %p204 = scmp.eq.s32.totalorder %s34, 1
      %p205 = por %p203, %p204
      %p207 = scmp.ne.s32.totalorder %s192, %s206
      %p208 = scmp.eq.s32.totalorder %s34, 0
      %p209 = por %p207, %p208
      %s211 = sadd.s32 %s210, 1
      %p214 = scmp.eq.s32.totalorder %s28, 1
      %p215 = scmp.ne.s32.totalorder %s210, %s212
      %p216 = scmp.eq.s32.totalorder %s28, 0
      %p217 = por %p215, %p216
      %p218 = scmp.ne.s32.totalorder %s210, %s212
      %p219 = scmp.eq.s32.totalorder %s33, 1
      %p220 = por %p218, %p219
      %p221 = scmp.ne.s32.totalorder %s212, %s213
      %p222 = scmp.eq.s32.totalorder %s33, 0
      %p223 = por %p221, %p222
      %p224 = scmp.ne.s32.totalorder %s212, %s213
      %p225 = scmp.eq.s32.totalorder %s34, 1
      %p226 = por %p224, %p225
      %p228 = scmp.ne.s32.totalorder %s213, %s227
      %p229 = scmp.eq.s32.totalorder %s34, 0
      %p230 = por %p228, %p229
      %s232 = sadd.s32 %s231, 1
      %p235 = scmp.eq.s32.totalorder %s28, 1
      %p236 = scmp.ne.s32.totalorder %s231, %s233
      %p237 = scmp.eq.s32.totalorder %s28, 0
      %p238 = por %p236, %p237
      %p239 = scmp.ne.s32.totalorder %s231, %s233
      %p240 = scmp.eq.s32.totalorder %s33, 1
      %p241 = por %p239, %p240
      %p242 = scmp.ne.s32.totalorder %s233, %s234
      %p243 = scmp.eq.s32.totalorder %s33, 0
      %p244 = por %p242, %p243
      %p245 = scmp.ne.s32.totalorder %s233, %s234
      %p246 = scmp.eq.s32.totalorder %s34, 1
      %p247 = por %p245, %p246
      %p249 = scmp.ne.s32.totalorder %s234, %s248
      %p250 = scmp.eq.s32.totalorder %s34, 0
      %p251 = por %p249, %p250
      %s253 = sadd.s32 %s252, 1
      %p256 = scmp.eq.s32.totalorder %s28, 1
      %p257 = scmp.ne.s32.totalorder %s252, %s254
      %p258 = scmp.eq.s32.totalorder %s28, 0
      %p259 = por %p257, %p258
      %p260 = scmp.ne.s32.totalorder %s252, %s254
      %p261 = scmp.eq.s32.totalorder %s33, 1
      %p262 = por %p260, %p261
      %p263 = scmp.ne.s32.totalorder %s254, %s255
      %p264 = scmp.eq.s32.totalorder %s33, 0
      %p265 = por %p263, %p264
      %p266 = scmp.ne.s32.totalorder %s254, %s255
      %p267 = scmp.eq.s32.totalorder %s34, 1
      %p268 = por %p266, %p267
      %p270 = scmp.ne.s32.totalorder %s255, %s269
      %p271 = scmp.eq.s32.totalorder %s34, 0
      %p272 = por %p270, %p271
      %s274 = sadd.s32 %s273, 1
      %p277 = scmp.eq.s32.totalorder %s28, 1
      %p278 = scmp.ne.s32.totalorder %s273, %s275
      %p279 = scmp.eq.s32.totalorder %s28, 0
      %p280 = por %p278, %p279
      %p281 = scmp.ne.s32.totalorder %s273, %s275
      %p282 = scmp.eq.s32.totalorder %s33, 1
      %p283 = por %p281, %p282
      %p284 = scmp.ne.s32.totalorder %s275, %s276
      %p285 = scmp.eq.s32.totalorder %s33, 0
      %p286 = por %p284, %p285
      %p287 = scmp.ne.s32.totalorder %s275, %s276
      %p288 = scmp.eq.s32.totalorder %s34, 1
      %p289 = por %p287, %p288
      %p291 = scmp.ne.s32.totalorder %s276, %s290
      %p292 = scmp.eq.s32.totalorder %s34, 0
      %p293 = por %p291, %p292
      %s294 = ssub.s32 %s35, %s47
      %p295 = scmp.eq.s32.totalorder %s294, 0
      %s297 = sadd.s32 %s296, 1
      %s298 = scalar_select %p295, %s296, %s297
      %p301 = pneg %p295
      %p302 = scmp.eq.s32.totalorder %s28, 1
      %p303 = por %p301, %p302
      %p304 = scmp.ne.s32.totalorder %s296, %s299
      %p305 = scmp.eq.s32.totalorder %s28, 0
      %p306 = por %p304, %p305
      %p307 = scmp.ne.s32.totalorder %s296, %s299
      %p308 = scmp.eq.s32.totalorder %s33, 1
      %p309 = por %p307, %p308
      %p310 = scmp.ne.s32.totalorder %s299, %s300
      %p311 = scmp.eq.s32.totalorder %s33, 0
      %p312 = por %p310, %p311
      %p313 = scmp.ne.s32.totalorder %s299, %s300
      %p314 = scmp.eq.s32.totalorder %s34, 1
      %p315 = por %p313, %p314
      %p317 = scmp.ne.s32.totalorder %s300, %s316
      %p318 = scmp.eq.s32.totalorder %s34, 0
      %p319 = por %p317, %p318
      %p320 = scmp.le.s32.totalorder 1, %s28
      %p321 = scmp.lt.s32.totalorder %s28, 3
      %p322 = pnand %p320, %p321
      %p323 = pneg %p322
      // Predicated region
      $region9: #{tpu_custom_call.1} parent=5 // pred_check
        _
      $region10: #{tpu_custom_call.1} parent=5 // pred_check_branch
        %325 = sbr.rel (%p322) target = $region12
      $region11: #{tpu_custom_call.1} parent=5 // pred_region
        %s326 = ssub.s32 %s28, 1
        // Predicated region
        $region13: #{tpu_custom_call.1} parent=11 // pred_check
          %p327 = pneg %p87
        $region14: #{tpu_custom_call.1} parent=11 // pred_check_branch
          %329 = sbr.rel (%p327) target = $region16
        $region15: #{tpu_custom_call.1} parent=11 // pred_region
          %s331 = ssub.s32 16, 16
          %332 = vsyncadd [#allocation8], %s331
          %s334 = sshll.u32 [#allocation7], 4
          %s335 = int_to_ptr.vmem [resolvable:$true] %s334
          %337 = dma.hbm_to_vmem [thread:$0]  %s1, 16, %s335, [#allocation8]
        $region16: #{tpu_custom_call.1} parent=11 // pred_fallthru
          _
        // Predicated region
        $region17: #{tpu_custom_call.1} parent=11 // pred_check
          %p338 = pneg %p108
        $region18: #{tpu_custom_call.1} parent=11 // pred_check_branch
          %340 = sbr.rel (%p338) target = $region20
        $region19: #{tpu_custom_call.1} parent=11 // pred_region
          %s342 = ssub.s32 16, 16
          %343 = vsyncadd [#allocation8], %s342
          %s345 = sshll.u32 [#allocation9], 4
          %s346 = int_to_ptr.vmem [resolvable:$true] %s345
          %348 = dma.hbm_to_vmem [thread:$0]  %s2, 16, %s346, [#allocation8]
        $region20: #{tpu_custom_call.1} parent=11 // pred_fallthru
          _
        // Predicated region
        $region21: #{tpu_custom_call.1} parent=11 // pred_check
          %p349 = pneg %p134
        $region22: #{tpu_custom_call.1} parent=11 // pred_check_branch
          %351 = sbr.rel (%p349) target = $region24
        $region23: #{tpu_custom_call.1} parent=11 // pred_region
          %s353 = ssub.s32 6144, 6144
          %354 = vsyncadd [#allocation11], %s353
          %s355 = smul.addr %s38, 48
          %s356 = smul.addr %s355, 128
          %s357 = scalar_lea.hbm %s3, %s356
          %s358 = sshll.u32 [#allocation10], 4
          %s359 = int_to_ptr.vmem [resolvable:$true] %s358
          %364 = dma.hbm_to_vmem [thread:$0]  %s357, 6144, %s359, [#allocation11], 384, 384, 24
        $region24: #{tpu_custom_call.1} parent=11 // pred_fallthru
          _
        // Predicated region
        $region25: #{tpu_custom_call.1} parent=11 // pred_check
          %p365 = pneg %p160
        $region26: #{tpu_custom_call.1} parent=11 // pred_check_branch
          %367 = sbr.rel (%p365) target = $region28
        $region27: #{tpu_custom_call.1} parent=11 // pred_region
          %s369 = ssub.s32 2048, 2048
          %370 = vsyncadd [#allocation11], %s369
          %s371 = smul.addr %s38, 16
          %s372 = smul.addr %s371, 128
          %s373 = scalar_lea.hbm %s4, %s372
          %s374 = sshll.u32 [#allocation12], 4
          %s375 = int_to_ptr.vmem [resolvable:$true] %s374
          %380 = dma.hbm_to_vmem [thread:$0]  %s373, 2048, %s375, [#allocation11], 128, 128, 8
        $region28: #{tpu_custom_call.1} parent=11 // pred_fallthru
          _
        // Predicated region
        $region29: #{tpu_custom_call.1} parent=11 // pred_check
          %p381 = pneg %p181
        $region30: #{tpu_custom_call.1} parent=11 // pred_check_branch
          %383 = sbr.rel (%p381) target = $region32
        $region31: #{tpu_custom_call.1} parent=11 // pred_region
          %s385 = ssub.s32 16, 16
          %386 = vsyncadd [#allocation14], %s385
          %s388 = sshll.u32 [#allocation13], 4
          %s389 = int_to_ptr.vmem [resolvable:$true] %s388
          %391 = dma.hbm_to_vmem [thread:$0]  %s5, 16, %s389, [#allocation14]
        $region32: #{tpu_custom_call.1} parent=11 // pred_fallthru
          _
        // Predicated region
        $region33: #{tpu_custom_call.1} parent=11 // pred_check
          %p392 = pneg %p202
        $region34: #{tpu_custom_call.1} parent=11 // pred_check_branch
          %394 = sbr.rel (%p392) target = $region36
        $region35: #{tpu_custom_call.1} parent=11 // pred_region
          %s396 = ssub.s32 16, 16
          %397 = vsyncadd [#allocation14], %s396
          %s399 = sshll.u32 [#allocation15], 4
          %s400 = int_to_ptr.vmem [resolvable:$true] %s399
          %402 = dma.hbm_to_vmem [thread:$0]  %s6, 16, %s400, [#allocation14]
        $region36: #{tpu_custom_call.1} parent=11 // pred_fallthru
          _
        // Predicated region
        $region37: #{tpu_custom_call.1} parent=11 // pred_check
          %p403 = pneg %p223
        $region38: #{tpu_custom_call.1} parent=11 // pred_check_branch
          %405 = sbr.rel (%p403) target = $region40
        $region39: #{tpu_custom_call.1} parent=11 // pred_region
          %s407 = ssub.s32 4096, 4096
          %408 = vsyncadd [#allocation17], %s407
          %s409 = sshll.u32 [#allocation16], 4
          %s410 = int_to_ptr.vmem [resolvable:$true] %s409
          %415 = dma.hbm_to_vmem [thread:$0]  %s7, 4096, %s410, [#allocation17], 256, 256, 16
        $region40: #{tpu_custom_call.1} parent=11 // pred_fallthru
          _
        // Predicated region
        $region41: #{tpu_custom_call.1} parent=11 // pred_check
          %p416 = pneg %p244
        $region42: #{tpu_custom_call.1} parent=11 // pred_check_branch
          %418 = sbr.rel (%p416) target = $region44
        $region43: #{tpu_custom_call.1} parent=11 // pred_region
          %s420 = ssub.s32 32, 32
          %421 = vsyncadd [#allocation17], %s420
          %s423 = sshll.u32 [#allocation18], 4
          %s424 = int_to_ptr.vmem [resolvable:$true] %s423
          %426 = dma.hbm_to_vmem [thread:$0]  %s8, 32, %s424, [#allocation17]
        $region44: #{tpu_custom_call.1} parent=11 // pred_fallthru
          _
        // Predicated region
        $region45: #{tpu_custom_call.1} parent=11 // pred_check
          %p427 = pneg %p265
        $region46: #{tpu_custom_call.1} parent=11 // pred_check_branch
          %429 = sbr.rel (%p427) target = $region48
        $region47: #{tpu_custom_call.1} parent=11 // pred_region
          %s431 = ssub.s32 4096, 4096
          %432 = vsyncadd [#allocation20], %s431
          %s433 = sshll.u32 [#allocation19], 4
          %s434 = int_to_ptr.vmem [resolvable:$true] %s433
          %439 = dma.hbm_to_vmem [thread:$0]  %s9, 4096, %s434, [#allocation20], 128, 128, 8
        $region48: #{tpu_custom_call.1} parent=11 // pred_fallthru
          _
        // Predicated region
        $region49: #{tpu_custom_call.1} parent=11 // pred_check
          %p440 = pneg %p286
        $region50: #{tpu_custom_call.1} parent=11 // pred_check_branch
          %442 = sbr.rel (%p440) target = $region52
        $region51: #{tpu_custom_call.1} parent=11 // pred_region
          %s444 = ssub.s32 16, 16
          %445 = vsyncadd [#allocation20], %s444
          %s447 = sshll.u32 [#allocation21], 4
          %s448 = int_to_ptr.vmem [resolvable:$true] %s447
          %450 = dma.hbm_to_vmem [thread:$0]  %s10, 16, %s448, [#allocation20]
        $region52: #{tpu_custom_call.1} parent=11 // pred_fallthru
          _
      $region12: #{tpu_custom_call.1} parent=5 // pred_fallthru
        _
      %p451 = scmp.lt.s32.totalorder %s28, 2
      // Predicated region
      $region53: #{tpu_custom_call.1} parent=5 // pred_check
        %p452 = pneg %p451
      $region54: #{tpu_custom_call.1} parent=5 // pred_check_branch
        %454 = sbr.rel (%p452) target = $region56
      $region55: #{tpu_custom_call.1} parent=5 // pred_region
        // Predicated region
        $region57: #{tpu_custom_call.1} parent=55 // pred_check
          %p455 = pneg %p60
        $region58: #{tpu_custom_call.1} parent=55 // pred_check_branch
          %457 = sbr.rel (%p455) target = $region60
        $region59: #{tpu_custom_call.1} parent=55 // pred_region
          %s458 = sand.u32 %s50, 1
          %s459 = scalar_lea.sflag [#allocation5], %s458
          %s460 = sand.u32 %s50, 1
          %s461 = smul.addr %s460, 16
          %s462 = scalar_lea.vmem [#allocation4], %s461
          %s464 = ssub.s32 256, 256
          %465 = vsyncadd %s459, %s464
          %s466 = smul.addr %s35, 2
          %s467 = smul.addr %s466, 128
          %s468 = scalar_lea.hbm %s0, %s467
          %s469 = sshll.u32 %s462, 4
          %s470 = int_to_ptr.vmem [resolvable:$true] %s469
          %475 = dma.hbm_to_vmem [thread:$0]  %s468, 256, %s470, %s459, 128, 128, 8
        $region60: #{tpu_custom_call.1} parent=55 // pred_fallthru
          _
      $region56: #{tpu_custom_call.1} parent=5 // pred_fallthru
        _
      %p476 = scmp.le.s32.totalorder 1, %s28
      %p477 = scmp.lt.s32.totalorder %s28, 3
      %p478 = pnand %p476, %p477
      %p479 = pneg %p478
      // Predicated region
      $region61: #{tpu_custom_call.1} parent=5 // pred_check
        _
      $region62: #{tpu_custom_call.1} parent=5 // pred_check_branch
        %481 = sbr.rel (%p478) target = $region64
      $region63: #{tpu_custom_call.1} parent=5 // pred_region
        %s482 = ssub.s32 %s28, 1
        %s483 = sand.u32 %s53, 1
        %s484 = scalar_lea.sflag [#allocation5], %s483
        %s485 = sand.u32 %s53, 1
        %s486 = smul.addr %s485, 16
        %s487 = scalar_lea.vmem [#allocation4], %s486
        // Predicated region
        $region65: #{tpu_custom_call.1} parent=63 // pred_check
          %p488 = pneg %p66
        $region66: #{tpu_custom_call.1} parent=63 // pred_check_branch
          %490 = sbr.rel (%p488) target = $region68
        $region67: #{tpu_custom_call.1} parent=63 // pred_region
          %491 = dma.done %s484, 256
        $region68: #{tpu_custom_call.1} parent=63 // pred_fallthru
          _
        // Predicated region
        $region69: #{tpu_custom_call.1} parent=63 // pred_check
          %p492 = pneg %p87
        $region70: #{tpu_custom_call.1} parent=63 // pred_check_branch
          %494 = sbr.rel (%p492) target = $region72
        $region71: #{tpu_custom_call.1} parent=63 // pred_region
          %495 = dma.done [#allocation8], 16
        $region72: #{tpu_custom_call.1} parent=63 // pred_fallthru
          _
        // Predicated region
        $region73: #{tpu_custom_call.1} parent=63 // pred_check
          %p496 = pneg %p108
        $region74: #{tpu_custom_call.1} parent=63 // pred_check_branch
          %498 = sbr.rel (%p496) target = $region76
        $region75: #{tpu_custom_call.1} parent=63 // pred_region
          %499 = dma.done [#allocation8], 16
        $region76: #{tpu_custom_call.1} parent=63 // pred_fallthru
          _
        // Predicated region
        $region77: #{tpu_custom_call.1} parent=63 // pred_check
          %p500 = pneg %p134
        $region78: #{tpu_custom_call.1} parent=63 // pred_check_branch
          %502 = sbr.rel (%p500) target = $region80
        $region79: #{tpu_custom_call.1} parent=63 // pred_region
          %503 = dma.done [#allocation11], 6144
        $region80: #{tpu_custom_call.1} parent=63 // pred_fallthru
          _
        // Predicated region
        $region81: #{tpu_custom_call.1} parent=63 // pred_check
          %p504 = pneg %p160
        $region82: #{tpu_custom_call.1} parent=63 // pred_check_branch
          %506 = sbr.rel (%p504) target = $region84
        $region83: #{tpu_custom_call.1} parent=63 // pred_region
          %507 = dma.done [#allocation11], 2048
        $region84: #{tpu_custom_call.1} parent=63 // pred_fallthru
          _
        // Predicated region
        $region85: #{tpu_custom_call.1} parent=63 // pred_check
          %p508 = pneg %p181
        $region86: #{tpu_custom_call.1} parent=63 // pred_check_branch
          %510 = sbr.rel (%p508) target = $region88
        $region87: #{tpu_custom_call.1} parent=63 // pred_region
          %511 = dma.done [#allocation14], 16
        $region88: #{tpu_custom_call.1} parent=63 // pred_fallthru
          _
        // Predicated region
        $region89: #{tpu_custom_call.1} parent=63 // pred_check
          %p512 = pneg %p202
        $region90: #{tpu_custom_call.1} parent=63 // pred_check_branch
          %514 = sbr.rel (%p512) target = $region92
        $region91: #{tpu_custom_call.1} parent=63 // pred_region
          %515 = dma.done [#allocation14], 16
        $region92: #{tpu_custom_call.1} parent=63 // pred_fallthru
          _
        // Predicated region
        $region93: #{tpu_custom_call.1} parent=63 // pred_check
          %p516 = pneg %p223
        $region94: #{tpu_custom_call.1} parent=63 // pred_check_branch
          %518 = sbr.rel (%p516) target = $region96
        $region95: #{tpu_custom_call.1} parent=63 // pred_region
          %519 = dma.done [#allocation17], 4096
        $region96: #{tpu_custom_call.1} parent=63 // pred_fallthru
          _
        // Predicated region
        $region97: #{tpu_custom_call.1} parent=63 // pred_check
          %p520 = pneg %p244
        $region98: #{tpu_custom_call.1} parent=63 // pred_check_branch
          %522 = sbr.rel (%p520) target = $region100
        $region99: #{tpu_custom_call.1} parent=63 // pred_region
          %523 = dma.done [#allocation17], 32
        $region100: #{tpu_custom_call.1} parent=63 // pred_fallthru
          _
        // Predicated region
        $region101: #{tpu_custom_call.1} parent=63 // pred_check
          %p524 = pneg %p265
        $region102: #{tpu_custom_call.1} parent=63 // pred_check_branch
          %526 = sbr.rel (%p524) target = $region104
        $region103: #{tpu_custom_call.1} parent=63 // pred_region
          %527 = dma.done [#allocation20], 4096
        $region104: #{tpu_custom_call.1} parent=63 // pred_fallthru
          _
        // Predicated region
        $region105: #{tpu_custom_call.1} parent=63 // pred_check
          %p528 = pneg %p286
        $region106: #{tpu_custom_call.1} parent=63 // pred_check_branch
          %530 = sbr.rel (%p528) target = $region108
        $region107: #{tpu_custom_call.1} parent=63 // pred_region
          %531 = dma.done [#allocation20], 16
        $region108: #{tpu_custom_call.1} parent=63 // pred_fallthru
          _
        %s532 = sand.u32 %s53, 1
        %s533 = scalar_lea.sflag [#allocation5], %s532
        %s534 = sand.u32 %s53, 1
        %s535 = smul.addr %s534, 16
        %s536 = scalar_lea.vmem [#allocation4], %s535
        %p537 = pneg %p66
        %p538 = pneg %p63
        %p539 = pneg %p87
        %p540 = pneg %p84
        %p541 = pneg %p108
        %p542 = pneg %p105
        %p543 = pneg %p134
        %p544 = pneg %p131
        %p545 = pneg %p160
        %p546 = pneg %p157
        %p547 = pneg %p181
        %p548 = pneg %p178
        %p549 = pneg %p202
        %p550 = pneg %p199
        %p551 = pneg %p223
        %p552 = pneg %p220
        %p553 = pneg %p244
        %p554 = pneg %p241
        %p555 = pneg %p265
        %p556 = pneg %p262
        %p557 = pneg %p286
        %p558 = pneg %p283
        %p559 = pneg %p312
        %p560 = pneg %p309
        %s561 = sand.u32 %s299, 1
        %s562 = scalar_lea.sflag [#allocation6], %s561
        %s563 = sand.u32 %s299, 1
        %s564 = smul.addr %s563, 16
        %s565 = scalar_lea.vmem [#allocation22], %s564
        %v566 = vld [vmem:[%s487] sm:$0xff]
        %v567 = vld [vmem:[%s487 + $0x8] sm:$0xff]
        %v568 = vld [vmem:[#allocation7] sm:$0x1]
        %v569 = vld [vmem:[#allocation9] sm:$0x1]
        %570 = vadd.xlane.f32.xlu0 %v566
        %v571 = vpop.xlane.xlu0 %570
        %572 = vadd.xlane.f32.xlu0 %v567
        %v573 = vpop.xlane.xlu0 %572
        %v574 = vrcp.pop 128.0
        %v575 = vmul.f32 %v571, %v574
        %v576 = vmul.f32 %v573, %v574
        %v577 = vsub.f32 %v566, %v575
        %v578 = vsub.f32 %v567, %v576
        %v579 = vmul.f32 %v577, %v577
        %v580 = vmul.f32 %v578, %v578
        %581 = vadd.xlane.f32.xlu0 %v579
        %v582 = vpop.xlane.xlu0 %581
        %583 = vadd.xlane.f32.xlu0 %v580
        %v584 = vpop.xlane.xlu0 %583
        %v585 = vmul.f32 %v582, %v574
        %v586 = vmul.f32 %v584, %v574
        %v587 = vadd.f32 %v585, 1e-05
        %v588 = vadd.f32 %v586, 1e-05
        %v589 = vrsqrt.pop %v587
        %v590 = vrsqrt.pop %v588
        %v591 = vmul.f32 %v577, %v589
        %v592 = vmul.f32 %v578, %v590
        %v594 = vlaneseq
        %v595 = vshrl.u32 %v594, 7
        %v596 = vsub.s32 0, %v595
        %v597 = vrot.slane %v568, %v596
        %v599 = vmul.f32 %v591, %v597
        %v600 = vmul.f32 %v592, %v597
        %v602 = vlaneseq
        %v603 = vshrl.u32 %v602, 7
        %v604 = vsub.s32 0, %v603
        %v605 = vrot.slane %v569, %v604
        %v607 = vadd.f32 %v599, %v605
        %v608 = vadd.f32 %v600, %v605
        %v609 = vld [vmem:[#allocation10] sm:$0xff]
        %v610 = vld [vmem:[#allocation10 + $0x8] sm:$0xff]
        %v611 = vld [vmem:[#allocation10 + $0x10] sm:$0xff]
        %v612 = vld [vmem:[#allocation10 + $0x18] sm:$0xff]
        %v613 = vld [vmem:[#allocation10 + $0x20] sm:$0xff]
        %v614 = vld [vmem:[#allocation10 + $0x28] sm:$0xff]
        %v615 = vld [vmem:[#allocation10 + $0x30] sm:$0xff]
        %v616 = vld [vmem:[#allocation10 + $0x38] sm:$0xff]
        %v617 = vld [vmem:[#allocation10 + $0x40] sm:$0xff]
        %v618 = vld [vmem:[#allocation10 + $0x48] sm:$0xff]
        %v619 = vld [vmem:[#allocation10 + $0x50] sm:$0xff]
        %v620 = vld [vmem:[#allocation10 + $0x58] sm:$0xff]
        %v621 = vld [vmem:[#allocation10 + $0x60] sm:$0xff]
        %v622 = vld [vmem:[#allocation10 + $0x68] sm:$0xff]
        %v623 = vld [vmem:[#allocation10 + $0x70] sm:$0xff]
        %v624 = vld [vmem:[#allocation10 + $0x78] sm:$0xff]
        %v625 = vld [vmem:[#allocation10 + $0x80] sm:$0xff]
        %v626 = vld [vmem:[#allocation10 + $0x88] sm:$0xff]
        %v627 = vld [vmem:[#allocation10 + $0x90] sm:$0xff]
        %v628 = vld [vmem:[#allocation10 + $0x98] sm:$0xff]
        %v629 = vld [vmem:[#allocation10 + $0xa0] sm:$0xff]
        %v630 = vld [vmem:[#allocation10 + $0xa8] sm:$0xff]
        %v631 = vld [vmem:[#allocation10 + $0xb0] sm:$0xff]
        %v632 = vld [vmem:[#allocation10 + $0xb8] sm:$0xff]
        %v633 = vld [vmem:[#allocation10 + $0xc0] sm:$0xff]
        %v634 = vld [vmem:[#allocation10 + $0xc8] sm:$0xff]
        %v635 = vld [vmem:[#allocation10 + $0xd0] sm:$0xff]
        %v636 = vld [vmem:[#allocation10 + $0xd8] sm:$0xff]
        %v637 = vld [vmem:[#allocation10 + $0xe0] sm:$0xff]
        %v638 = vld [vmem:[#allocation10 + $0xe8] sm:$0xff]
        %v639 = vld [vmem:[#allocation10 + $0xf0] sm:$0xff]
        %v640 = vld [vmem:[#allocation10 + $0xf8] sm:$0xff]
        %v641 = vld [vmem:[#allocation10 + $0x100] sm:$0xff]
        %v642 = vld [vmem:[#allocation10 + $0x108] sm:$0xff]
        %v643 = vld [vmem:[#allocation10 + $0x110] sm:$0xff]
        %v644 = vld [vmem:[#allocation10 + $0x118] sm:$0xff]
        %v645 = vld [vmem:[#allocation10 + $0x120] sm:$0xff]
        %v646 = vld [vmem:[#allocation10 + $0x128] sm:$0xff]
        %v647 = vld [vmem:[#allocation10 + $0x130] sm:$0xff]
        %v648 = vld [vmem:[#allocation10 + $0x138] sm:$0xff]
        %v649 = vld [vmem:[#allocation10 + $0x140] sm:$0xff]
        %v650 = vld [vmem:[#allocation10 + $0x148] sm:$0xff]
        %v651 = vld [vmem:[#allocation10 + $0x150] sm:$0xff]
        %v652 = vld [vmem:[#allocation10 + $0x158] sm:$0xff]
        %v653 = vld [vmem:[#allocation10 + $0x160] sm:$0xff]
        %v654 = vld [vmem:[#allocation10 + $0x168] sm:$0xff]
        %v655 = vld [vmem:[#allocation10 + $0x170] sm:$0xff]
        %v656 = vld [vmem:[#allocation10 + $0x178] sm:$0xff]
        %657 = vmatprep.subr.mxu0 %v610
        %658 = vmatpush1.msra.mxu0 %v609
        %659 = vmatprep.subr.mxu0 %v613
        %660 = vmatpush1.msra.mxu0 %v612
        %661 = vmatprep.subr.mxu0 %v616
        %662 = vmatpush1.msra.mxu0 %v615
        %663 = vmatprep.subr.mxu0 %v619
        %664 = vmatpush1.msra.mxu0 %v618
        %665 = vmatprep.subr.mxu0 %v622
        %666 = vmatpush1.msra.mxu0 %v621
        %667 = vmatprep.subr.mxu0 %v625
        %668 = vmatpush1.msra.mxu0 %v624
        %669 = vmatprep.subr.mxu0 %v628
        %670 = vmatpush1.msra.mxu0 %v627
        %671 = vmatprep.subr.mxu0 %v631
        %672 = vmatpush1.msra.mxu0 %v630
        %673 = vmatprep.subr.mxu0 %v634
        %674 = vmatpush1.msra.mxu0 %v633
        %675 = vmatprep.subr.mxu0 %v637
        %676 = vmatpush1.msra.mxu0 %v636
        %677 = vmatprep.subr.mxu0 %v640
        %678 = vmatpush1.msra.mxu0 %v639
        %679 = vmatprep.subr.mxu0 %v643
        %680 = vmatpush1.msra.mxu0 %v642
        %681 = vmatprep.subr.mxu0 %v646
        %682 = vmatpush1.msra.mxu0 %v645
        %683 = vmatprep.subr.mxu0 %v649
        %684 = vmatpush1.msra.mxu0 %v648
        %685 = vmatprep.subr.mxu0 %v652
        %686 = vmatpush1.msra.mxu0 %v651
        %687 = vmatprep.subr.mxu0 %v655
        %688 = vmatpush1.msra.mxu0 %v654
        %689 = vmatprep.subr.mxu0 0.0
        %690 = vmatpush1.msra.mxu0 0.0
        %691 = vmatprep.subr.mxu0 0.0
        %692 = vmatpush1.msra.mxu0 0.0
        %693 = vmatprep.subr.mxu0 0.0
        %694 = vmatpush1.msra.mxu0 0.0
        %695 = vmatprep.subr.mxu0 0.0
        %696 = vmatpush1.msra.mxu0 0.0
        %697 = vmatprep.subr.mxu0 0.0
        %698 = vmatpush1.msra.mxu0 0.0
        %699 = vmatprep.subr.mxu0 0.0
        %700 = vmatpush1.msra.mxu0 0.0
        %701 = vmatprep.subr.mxu0 0.0
        %702 = vmatpush1.msra.mxu0 0.0
        %703 = vmatprep.subr.mxu0 0.0
        %704 = vmatpush1.msra.mxu0 0.0
        %705 = vmatprep.subr.mxu0 0.0
        %706 = vmatpush1.msra.mxu0 0.0
        %707 = vmatprep.subr.mxu0 0.0
        %708 = vmatpush1.msra.mxu0 0.0
        %709 = vmatprep.subr.mxu0 0.0
        %710 = vmatpush1.msra.mxu0 0.0
        %711 = vmatprep.subr.mxu0 0.0
        %712 = vmatpush1.msra.mxu0 0.0
        %713 = vmatprep.subr.mxu0 0.0
        %714 = vmatpush1.msra.mxu0 0.0
        %715 = vmatprep.subr.mxu0 0.0
        %716 = vmatpush1.msra.mxu0 0.0
        %717 = vmatprep.subr.mxu0 0.0
        %718 = vmatpush1.msra.mxu0 0.0
        %719 = vmatprep.subr.mxu0 0.0
        %720 = vmatpush1.msra.mxu0 0.0
        %721 = vmatprep.mubr.f32.mxu0 0.0
        %722 = vmatmul.mubr.f32.gmra.mrb[0].mxu0 %v607
        %v723 = vpop.f32.mrb[0].mxu0
        %v724 = vadd.f32 0.0, %v723
        %v725 = vpop.f32.mrb[0].mxu0
        %v726 = vadd.f32 0.0, %v725
        %727 = vmatprep.mubr.f32.mxu0 0.0
        %728 = vmatmul.mubr.f32.gmra.mrb[0].mxu0 %v608
        %v729 = vpop.f32.mrb[0].mxu0
        %v730 = vadd.f32 0.0, %v729
        %v731 = vpop.f32.mrb[0].mxu0
        %v732 = vadd.f32 0.0, %v731
        %733 = vdwg.mxu0
        %734 = vmatprep.subr.mxu0 0.0
        %735 = vmatpush1.msra.mxu0 %v611
        %736 = vmatprep.subr.mxu0 0.0
        %737 = vmatpush1.msra.mxu0 %v614
        %738 = vmatprep.subr.mxu0 0.0
        %739 = vmatpush1.msra.mxu0 %v617
        %740 = vmatprep.subr.mxu0 0.0
        %741 = vmatpush1.msra.mxu0 %v620
        %742 = vmatprep.subr.mxu0 0.0
        %743 = vmatpush1.msra.mxu0 %v623
        %744 = vmatprep.subr.mxu0 0.0
        %745 = vmatpush1.msra.mxu0 %v626
        %746 = vmatprep.subr.mxu0 0.0
        %747 = vmatpush1.msra.mxu0 %v629
        %748 = vmatprep.subr.mxu0 0.0
        %749 = vmatpush1.msra.mxu0 %v632
        %750 = vmatprep.subr.mxu0 0.0
        %751 = vmatpush1.msra.mxu0 %v635
        %752 = vmatprep.subr.mxu0 0.0
        %753 = vmatpush1.msra.mxu0 %v638
        %754 = vmatprep.subr.mxu0 0.0
        %755 = vmatpush1.msra.mxu0 %v641
        %756 = vmatprep.subr.mxu0 0.0
        %757 = vmatpush1.msra.mxu0 %v644
        %758 = vmatprep.subr.mxu0 0.0
        %759 = vmatpush1.msra.mxu0 %v647
        %760 = vmatprep.subr.mxu0 0.0
        %761 = vmatpush1.msra.mxu0 %v650
        %762 = vmatprep.subr.mxu0 0.0
        %763 = vmatpush1.msra.mxu0 %v653
        %764 = vmatprep.subr.mxu0 0.0
        %765 = vmatpush1.msra.mxu0 %v656
        %766 = vmatprep.subr.mxu0 0.0
        %767 = vmatpush1.msra.mxu0 0.0
        %768 = vmatprep.subr.mxu0 0.0
        %769 = vmatpush1.msra.mxu0 0.0
        %770 = vmatprep.subr.mxu0 0.0
        %771 = vmatpush1.msra.mxu0 0.0
        %772 = vmatprep.subr.mxu0 0.0
        %773 = vmatpush1.msra.mxu0 0.0
        %774 = vmatprep.subr.mxu0 0.0
        %775 = vmatpush1.msra.mxu0 0.0
        %776 = vmatprep.subr.mxu0 0.0
        %777 = vmatpush1.msra.mxu0 0.0
        %778 = vmatprep.subr.mxu0 0.0
        %779 = vmatpush1.msra.mxu0 0.0
        %780 = vmatprep.subr.mxu0 0.0
        %781 = vmatpush1.msra.mxu0 0.0
        %782 = vmatprep.subr.mxu0 0.0
        %783 = vmatpush1.msra.mxu0 0.0
        %784 = vmatprep.subr.mxu0 0.0
        %785 = vmatpush1.msra.mxu0 0.0
        %786 = vmatprep.subr.mxu0 0.0
        %787 = vmatpush1.msra.mxu0 0.0
        %788 = vmatprep.subr.mxu0 0.0
        %789 = vmatpush1.msra.mxu0 0.0
        %790 = vmatprep.subr.mxu0 0.0
        %791 = vmatpush1.msra.mxu0 0.0
        %792 = vmatprep.subr.mxu0 0.0
        %793 = vmatpush1.msra.mxu0 0.0
        %794 = vmatprep.subr.mxu0 0.0
        %795 = vmatpush1.msra.mxu0 0.0
        %796 = vmatprep.subr.mxu0 0.0
        %797 = vmatpush1.msra.mxu0 0.0
        %798 = vmatprep.mubr.f32.mxu0 0.0
        %799 = vmatmul.mubr.f32.gmra.mrb[0].mxu0 %v607
        %v800 = vpop.f32.mrb[0].mxu0
        %v801 = vadd.f32 0.0, %v800
        %v802 = vpop.f32.mrb[0].mxu0
        %803 = vmatprep.mubr.f32.mxu0 0.0
        %804 = vmatmul.mubr.f32.gmra.mrb[0].mxu0 %v608
        %v805 = vpop.f32.mrb[0].mxu0
        %v806 = vadd.f32 0.0, %v805
        %v807 = vpop.f32.mrb[0].mxu0
        %808 = vdwg.mxu0
        %811 = vrot.lane.b32.xlu0 %v724, 96
        %v812 = vpop.permute.xlu0 %811
        %813 = vrot.lane.b32.xlu0 %v730, 96
        %v814 = vpop.permute.xlu0 %813
        %vm815 = vcmask 261120
        %v816 = vsel %vm815, %v724, 0
        %v818 = vsel %vm815, %v730, 0
        %v820 = vsel %vm815, %v812, 0
        %v822 = vsel %vm815, %v814, 0
        %824 = vmatprep.subr.mxu0 0.0
        %825 = vmatpush1.xpose.msra.mxu0 %v820
        %826 = vmatprep.subr.mxu0 0.0
        %827 = vmatpush1.xpose.msra.mxu0 %v822
        %828 = vmatprep.subr.mxu0 0.0
        %829 = vmatpush1.xpose.msra.mxu0 0.0
        %830 = vmatprep.subr.mxu0 0.0
        %831 = vmatpush1.xpose.msra.mxu0 0.0
        %832 = vmatprep.subr.mxu0 0.0
        %833 = vmatpush1.xpose.msra.mxu0 0.0
        %834 = vmatprep.subr.mxu0 0.0
        %835 = vmatpush1.xpose.msra.mxu0 0.0
        %836 = vmatprep.subr.mxu0 0.0
        %837 = vmatpush1.xpose.msra.mxu0 0.0
        %838 = vmatprep.subr.mxu0 0.0
        %839 = vmatpush1.xpose.msra.mxu0 0.0
        %840 = vmatprep.subr.mxu0 0.0
        %841 = vmatpush1.xpose.msra.mxu0 0.0
        %842 = vmatprep.subr.mxu0 0.0
        %843 = vmatpush1.xpose.msra.mxu0 0.0
        %844 = vmatprep.subr.mxu0 0.0
        %845 = vmatpush1.xpose.msra.mxu0 0.0
        %846 = vmatprep.subr.mxu0 0.0
        %847 = vmatpush1.xpose.msra.mxu0 0.0
        %848 = vmatprep.subr.mxu0 0.0
        %849 = vmatpush1.xpose.msra.mxu0 0.0
        %850 = vmatprep.subr.mxu0 0.0
        %851 = vmatpush1.xpose.msra.mxu0 0.0
        %852 = vmatprep.subr.mxu0 0.0
        %853 = vmatpush1.xpose.msra.mxu0 0.0
        %854 = vmatprep.subr.mxu0 0.0
        %855 = vmatpush1.xpose.msra.mxu0 0.0
        %856 = vmatprep.subr.mxu0 0.0
        %857 = vmatpush1.xpose.msra.mxu0 0.0
        %858 = vmatprep.subr.mxu0 0.0
        %859 = vmatpush1.xpose.msra.mxu0 0.0
        %860 = vmatprep.subr.mxu0 0.0
        %861 = vmatpush1.xpose.msra.mxu0 0.0
        %862 = vmatprep.subr.mxu0 0.0
        %863 = vmatpush1.xpose.msra.mxu0 0.0
        %864 = vmatprep.subr.mxu0 0.0
        %865 = vmatpush1.xpose.msra.mxu0 0.0
        %866 = vmatprep.subr.mxu0 0.0
        %867 = vmatpush1.xpose.msra.mxu0 0.0
        %868 = vmatprep.subr.mxu0 0.0
        %869 = vmatpush1.xpose.msra.mxu0 0.0
        %870 = vmatprep.subr.mxu0 0.0
        %871 = vmatpush1.xpose.msra.mxu0 0.0
        %872 = vmatprep.subr.mxu0 0.0
        %873 = vmatpush1.xpose.msra.mxu0 0.0
        %874 = vmatprep.subr.mxu0 0.0
        %875 = vmatpush1.xpose.msra.mxu0 0.0
        %876 = vmatprep.subr.mxu0 0.0
        %877 = vmatpush1.xpose.msra.mxu0 0.0
        %878 = vmatprep.subr.mxu0 0.0
        %879 = vmatpush1.xpose.msra.mxu0 0.0
        %880 = vmatprep.subr.mxu0 0.0
        %881 = vmatpush1.xpose.msra.mxu0 0.0
        %882 = vmatprep.subr.mxu0 0.0
        %883 = vmatpush1.xpose.msra.mxu0 0.0
        %884 = vmatprep.subr.mxu0 0.0
        %885 = vmatpush1.xpose.msra.mxu0 0.0
        %886 = vmatprep.subr.mxu0 0.0
        %887 = vmatpush1.xpose.msra.mxu0 0.0
        %888 = vmatprep.mubr.f32.mxu0 0.0
        %889 = vmatmul.mubr.f32.gmra.mrb[0].mxu0 %v816
        %v890 = vpop.f32.mrb[0].mxu0
        %v891 = vadd.f32 0.0, %v890
        %v892 = vpop.f32.mrb[0].mxu0
        %893 = vmatprep.mubr.f32.mxu0 0.0
        %894 = vmatmul.mubr.f32.gmra.mrb[0].mxu0 %v818
        %v895 = vpop.f32.mrb[0].mxu0
        %v896 = vadd.f32 0.0, %v895
        %v897 = vpop.f32.mrb[0].mxu0
        %898 = vdwg.mxu0
        %vm899 = vcmask 130048
        %v900 = vsel %vm899, %v891, -inf
        %901 = vmax.xlane.f32.xlu0 %v900
        %v902 = vpop.xlane.xlu0 %901
        %v903 = vsel %vm899, %v896, -inf
        %904 = vmax.xlane.f32.xlu0 %v903
        %v905 = vpop.xlane.xlu0 %904
        %v906 = vsub.f32 %v891, %v902
        %v907 = vsub.f32 %v896, %v905
        %v908 = vmul.f32 %v906, 1.442695
        %v909 = vpow.pop %v908
        %v910 = vmul.f32 %v907, 1.442695
        %v911 = vpow.pop %v910
        %v912 = vsel %vm899, %v909, 0.0
        %913 = vadd.xlane.f32.xlu0 %v912
        %v914 = vpop.xlane.xlu0 %913
        %v915 = vsel %vm899, %v911, 0.0
        %916 = vadd.xlane.f32.xlu0 %v915
        %v917 = vpop.xlane.xlu0 %916
        %918 = vrot.lane.b32.xlu0 %v724, 64
        %v919 = vpop.permute.xlu0 %918
        %920 = vrot.lane.b32.xlu0 %v730, 64
        %v921 = vpop.permute.xlu0 %920
        %v925 = vsel %vm899, %v909, 0
        %v928 = vsel %vm899, %v911, 0
        %930 = vmatprep.subr.mxu0 0.0
        %931 = vmatpush1.msra.mxu0 %v919
        %932 = vmatprep.subr.mxu0 0.0
        %933 = vmatpush1.msra.mxu0 %v921
        %934 = vmatprep.subr.mxu0 0.0
        %935 = vmatpush1.msra.mxu0 0.0
        %936 = vmatprep.subr.mxu0 0.0
        %937 = vmatpush1.msra.mxu0 0.0
        %938 = vmatprep.subr.mxu0 0.0
        %939 = vmatpush1.msra.mxu0 0.0
        %940 = vmatprep.subr.mxu0 0.0
        %941 = vmatpush1.msra.mxu0 0.0
        %942 = vmatprep.subr.mxu0 0.0
        %943 = vmatpush1.msra.mxu0 0.0
        %944 = vmatprep.subr.mxu0 0.0
        %945 = vmatpush1.msra.mxu0 0.0
        %946 = vmatprep.subr.mxu0 0.0
        %947 = vmatpush1.msra.mxu0 0.0
        %948 = vmatprep.subr.mxu0 0.0
        %949 = vmatpush1.msra.mxu0 0.0
        %950 = vmatprep.subr.mxu0 0.0
        %951 = vmatpush1.msra.mxu0 0.0
        %952 = vmatprep.subr.mxu0 0.0
        %953 = vmatpush1.msra.mxu0 0.0
        %954 = vmatprep.subr.mxu0 0.0
        %955 = vmatpush1.msra.mxu0 0.0
        %956 = vmatprep.subr.mxu0 0.0
        %957 = vmatpush1.msra.mxu0 0.0
        %958 = vmatprep.subr.mxu0 0.0
        %959 = vmatpush1.msra.mxu0 0.0
        %960 = vmatprep.subr.mxu0 0.0
        %961 = vmatpush1.msra.mxu0 0.0
        %962 = vmatprep.subr.mxu0 0.0
        %963 = vmatpush1.msra.mxu0 0.0
        %964 = vmatprep.subr.mxu0 0.0
        %965 = vmatpush1.msra.mxu0 0.0
        %966 = vmatprep.subr.mxu0 0.0
        %967 = vmatpush1.msra.mxu0 0.0
        %968 = vmatprep.subr.mxu0 0.0
        %969 = vmatpush1.msra.mxu0 0.0
        %970 = vmatprep.subr.mxu0 0.0
        %971 = vmatpush1.msra.mxu0 0.0
        %972 = vmatprep.subr.mxu0 0.0
        %973 = vmatpush1.msra.mxu0 0.0
        %974 = vmatprep.subr.mxu0 0.0
        %975 = vmatpush1.msra.mxu0 0.0
        %976 = vmatprep.subr.mxu0 0.0
        %977 = vmatpush1.msra.mxu0 0.0
        %978 = vmatprep.subr.mxu0 0.0
        %979 = vmatpush1.msra.mxu0 0.0
        %980 = vmatprep.subr.mxu0 0.0
        %981 = vmatpush1.msra.mxu0 0.0
        %982 = vmatprep.subr.mxu0 0.0
        %983 = vmatpush1.msra.mxu0 0.0
        %984 = vmatprep.subr.mxu0 0.0
        %985 = vmatpush1.msra.mxu0 0.0
        %986 = vmatprep.subr.mxu0 0.0
        %987 = vmatpush1.msra.mxu0 0.0
        %988 = vmatprep.subr.mxu0 0.0
        %989 = vmatpush1.msra.mxu0 0.0
        %990 = vmatprep.subr.mxu0 0.0
        %991 = vmatpush1.msra.mxu0 0.0
        %992 = vmatprep.subr.mxu0 0.0
        %993 = vmatpush1.msra.mxu0 0.0
        %994 = vmatprep.mubr.f32.mxu0 0.0
        %995 = vmatmul.mubr.f32.gmra.mrb[0].mxu0 %v925
        %v996 = vpop.f32.mrb[0].mxu0
        %v997 = vadd.f32 0.0, %v996
        %v998 = vpop.f32.mrb[0].mxu0
        %999 = vmatprep.mubr.f32.mxu0 0.0
        %1000 = vmatmul.mubr.f32.gmra.mrb[0].mxu0 %v928
        %v1001 = vpop.f32.mrb[0].mxu0
        %v1002 = vadd.f32 0.0, %v1001
        %v1003 = vpop.f32.mrb[0].mxu0
        %1004 = vdwg.mxu0
        %v1005 = vrcp.pop %v914
        %v1006 = vmul.f32 %v997, %v1005
        %v1007 = vrcp.pop %v917
        %v1008 = vmul.f32 %v1002, %v1007
        %v1009 = vld [vmem:[#allocation12] sm:$0xff]
        %v1010 = vld [vmem:[#allocation12 + $0x8] sm:$0xff]
        %v1011 = vld [vmem:[#allocation12 + $0x10] sm:$0xff]
        %v1012 = vld [vmem:[#allocation12 + $0x18] sm:$0xff]
        %1013 = vrot.lane.b32.xlu0 %v724, 32
        %v1014 = vpop.permute.xlu0 %1013
        %1015 = vrot.lane.b32.xlu0 %v730, 32
        %v1016 = vpop.permute.xlu0 %1015
        %v1017 = vsel %vm815, %v1014, 0
        %v1019 = vsel %vm815, %v1016, 0
        %v1022 = vsel %vm815, %v726, 0
        %v1025 = vsel %vm815, %v732, 0
        %1027 = vmatprep.subr.mxu0 0.0
        %1028 = vmatpush1.xpose.msra.mxu0 %v1022
        %1029 = vmatprep.subr.mxu0 0.0
        %1030 = vmatpush1.xpose.msra.mxu0 %v1025
        %1031 = vmatprep.subr.mxu0 0.0
        %1032 = vmatpush1.xpose.msra.mxu0 0.0
        %1033 = vmatprep.subr.mxu0 0.0
        %1034 = vmatpush1.xpose.msra.mxu0 0.0
        %1035 = vmatprep.subr.mxu0 0.0
        %1036 = vmatpush1.xpose.msra.mxu0 0.0
        %1037 = vmatprep.subr.mxu0 0.0
        %1038 = vmatpush1.xpose.msra.mxu0 0.0
        %1039 = vmatprep.subr.mxu0 0.0
        %1040 = vmatpush1.xpose.msra.mxu0 0.0
        %1041 = vmatprep.subr.mxu0 0.0
        %1042 = vmatpush1.xpose.msra.mxu0 0.0
        %1043 = vmatprep.subr.mxu0 0.0
        %1044 = vmatpush1.xpose.msra.mxu0 0.0
        %1045 = vmatprep.subr.mxu0 0.0
        %1046 = vmatpush1.xpose.msra.mxu0 0.0
        %1047 = vmatprep.subr.mxu0 0.0
        %1048 = vmatpush1.xpose.msra.mxu0 0.0
        %1049 = vmatprep.subr.mxu0 0.0
        %1050 = vmatpush1.xpose.msra.mxu0 0.0
        %1051 = vmatprep.subr.mxu0 0.0
        %1052 = vmatpush1.xpose.msra.mxu0 0.0
        %1053 = vmatprep.subr.mxu0 0.0
        %1054 = vmatpush1.xpose.msra.mxu0 0.0
        %1055 = vmatprep.subr.mxu0 0.0
        %1056 = vmatpush1.xpose.msra.mxu0 0.0
        %1057 = vmatprep.subr.mxu0 0.0
        %1058 = vmatpush1.xpose.msra.mxu0 0.0
        %1059 = vmatprep.subr.mxu0 0.0
        %1060 = vmatpush1.xpose.msra.mxu0 0.0
        %1061 = vmatprep.subr.mxu0 0.0
        %1062 = vmatpush1.xpose.msra.mxu0 0.0
        %1063 = vmatprep.subr.mxu0 0.0
        %1064 = vmatpush1.xpose.msra.mxu0 0.0
        %1065 = vmatprep.subr.mxu0 0.0
        %1066 = vmatpush1.xpose.msra.mxu0 0.0
        %1067 = vmatprep.subr.mxu0 0.0
        %1068 = vmatpush1.xpose.msra.mxu0 0.0
        %1069 = vmatprep.subr.mxu0 0.0
        %1070 = vmatpush1.xpose.msra.mxu0 0.0
        %1071 = vmatprep.subr.mxu0 0.0
        %1072 = vmatpush1.xpose.msra.mxu0 0.0
        %1073 = vmatprep.subr.mxu0 0.0
        %1074 = vmatpush1.xpose.msra.mxu0 0.0
        %1075 = vmatprep.subr.mxu0 0.0
        %1076 = vmatpush1.xpose.msra.mxu0 0.0
        %1077 = vmatprep.subr.mxu0 0.0
        %1078 = vmatpush1.xpose.msra.mxu0 0.0
        %1079 = vmatprep.subr.mxu0 0.0
        %1080 = vmatpush1.xpose.msra.mxu0 0.0
        %1081 = vmatprep.subr.mxu0 0.0
        %1082 = vmatpush1.xpose.msra.mxu0 0.0
        %1083 = vmatprep.subr.mxu0 0.0
        %1084 = vmatpush1.xpose.msra.mxu0 0.0
        %1085 = vmatprep.subr.mxu0 0.0
        %1086 = vmatpush1.xpose.msra.mxu0 0.0
        %1087 = vmatprep.subr.mxu0 0.0
        %1088 = vmatpush1.xpose.msra.mxu0 0.0
        %1089 = vmatprep.subr.mxu0 0.0
        %1090 = vmatpush1.xpose.msra.mxu0 0.0
        %1091 = vmatprep.mubr.f32.mxu0 0.0
        %1092 = vmatmul.mubr.f32.gmra.mrb[0].mxu0 %v1017
        %v1093 = vpop.f32.mrb[0].mxu0
        %v1094 = vadd.f32 0.0, %v1093
        %v1095 = vpop.f32.mrb[0].mxu0
        %1096 = vmatprep.mubr.f32.mxu0 0.0
        %1097 = vmatmul.mubr.f32.gmra.mrb[0].mxu0 %v1019
        %v1098 = vpop.f32.mrb[0].mxu0
        %v1099 = vadd.f32 0.0, %v1098
        %v1100 = vpop.f32.mrb[0].mxu0
        %1101 = vdwg.mxu0
        %v1102 = vsel %vm899, %v1094, -inf
        %1103 = vmax.xlane.f32.xlu0 %v1102
        %v1104 = vpop.xlane.xlu0 %1103
        %v1105 = vsel %vm899, %v1099, -inf
        %1106 = vmax.xlane.f32.xlu0 %v1105
        %v1107 = vpop.xlane.xlu0 %1106
        %v1108 = vsub.f32 %v1094, %v1104
        %v1109 = vsub.f32 %v1099, %v1107
        %v1110 = vmul.f32 %v1108, 1.442695
        %v1111 = vpow.pop %v1110
        %v1112 = vmul.f32 %v1109, 1.442695
        %v1113 = vpow.pop %v1112
        %v1114 = vsel %vm899, %v1111, 0.0
        %1115 = vadd.xlane.f32.xlu0 %v1114
        %v1116 = vpop.xlane.xlu0 %1115
        %v1117 = vsel %vm899, %v1113, 0.0
        %1118 = vadd.xlane.f32.xlu0 %v1117
        %v1119 = vpop.xlane.xlu0 %1118
        %1120 = vrot.lane.b32.xlu0 %v726, 96
        %v1121 = vpop.permute.xlu0 %1120
        %1122 = vrot.lane.b32.xlu0 %v732, 96
        %v1123 = vpop.permute.xlu0 %1122
        %v1127 = vsel %vm899, %v1111, 0
        %v1130 = vsel %vm899, %v1113, 0
        %1132 = vmatprep.subr.mxu0 0.0
        %1133 = vmatpush1.msra.mxu0 %v1121
        %1134 = vmatprep.subr.mxu0 0.0
        %1135 = vmatpush1.msra.mxu0 %v1123
        %1136 = vmatprep.subr.mxu0 0.0
        %1137 = vmatpush1.msra.mxu0 0.0
        %1138 = vmatprep.subr.mxu0 0.0
        %1139 = vmatpush1.msra.mxu0 0.0
        %1140 = vmatprep.subr.mxu0 0.0
        %1141 = vmatpush1.msra.mxu0 0.0
        %1142 = vmatprep.subr.mxu0 0.0
        %1143 = vmatpush1.msra.mxu0 0.0
        %1144 = vmatprep.subr.mxu0 0.0
        %1145 = vmatpush1.msra.mxu0 0.0
        %1146 = vmatprep.subr.mxu0 0.0
        %1147 = vmatpush1.msra.mxu0 0.0
        %1148 = vmatprep.subr.mxu0 0.0
        %1149 = vmatpush1.msra.mxu0 0.0
        %1150 = vmatprep.subr.mxu0 0.0
        %1151 = vmatpush1.msra.mxu0 0.0
        %1152 = vmatprep.subr.mxu0 0.0
        %1153 = vmatpush1.msra.mxu0 0.0
        %1154 = vmatprep.subr.mxu0 0.0
        %1155 = vmatpush1.msra.mxu0 0.0
        %1156 = vmatprep.subr.mxu0 0.0
        %1157 = vmatpush1.msra.mxu0 0.0
        %1158 = vmatprep.subr.mxu0 0.0
        %1159 = vmatpush1.msra.mxu0 0.0
        %1160 = vmatprep.subr.mxu0 0.0
        %1161 = vmatpush1.msra.mxu0 0.0
        %1162 = vmatprep.subr.mxu0 0.0
        %1163 = vmatpush1.msra.mxu0 0.0
        %1164 = vmatprep.subr.mxu0 0.0
        %1165 = vmatpush1.msra.mxu0 0.0
        %1166 = vmatprep.subr.mxu0 0.0
        %1167 = vmatpush1.msra.mxu0 0.0
        %1168 = vmatprep.subr.mxu0 0.0
        %1169 = vmatpush1.msra.mxu0 0.0
        %1170 = vmatprep.subr.mxu0 0.0
        %1171 = vmatpush1.msra.mxu0 0.0
        %1172 = vmatprep.subr.mxu0 0.0
        %1173 = vmatpush1.msra.mxu0 0.0
        %1174 = vmatprep.subr.mxu0 0.0
        %1175 = vmatpush1.msra.mxu0 0.0
        %1176 = vmatprep.subr.mxu0 0.0
        %1177 = vmatpush1.msra.mxu0 0.0
        %1178 = vmatprep.subr.mxu0 0.0
        %1179 = vmatpush1.msra.mxu0 0.0
        %1180 = vmatprep.subr.mxu0 0.0
        %1181 = vmatpush1.msra.mxu0 0.0
        %1182 = vmatprep.subr.mxu0 0.0
        %1183 = vmatpush1.msra.mxu0 0.0
        %1184 = vmatprep.subr.mxu0 0.0
        %1185 = vmatpush1.msra.mxu0 0.0
        %1186 = vmatprep.subr.mxu0 0.0
        %1187 = vmatpush1.msra.mxu0 0.0
        %1188 = vmatprep.subr.mxu0 0.0
        %1189 = vmatpush1.msra.mxu0 0.0
        %1190 = vmatprep.subr.mxu0 0.0
        %1191 = vmatpush1.msra.mxu0 0.0
        %1192 = vmatprep.subr.mxu0 0.0
        %1193 = vmatpush1.msra.mxu0 0.0
        %1194 = vmatprep.subr.mxu0 0.0
        %1195 = vmatpush1.msra.mxu0 0.0
        %1196 = vmatprep.mubr.f32.mxu0 0.0
        %1197 = vmatmul.mubr.f32.gmra.mrb[0].mxu0 %v1127
        %v1198 = vpop.f32.mrb[0].mxu0
        %v1199 = vadd.f32 0.0, %v1198
        %v1200 = vpop.f32.mrb[0].mxu0
        %1201 = vmatprep.mubr.f32.mxu0 0.0
        %1202 = vmatmul.mubr.f32.gmra.mrb[0].mxu0 %v1130
        %v1203 = vpop.f32.mrb[0].mxu0
        %v1204 = vadd.f32 0.0, %v1203
        %v1205 = vpop.f32.mrb[0].mxu0
        %1206 = vdwg.mxu0
        %v1207 = vrcp.pop %v1116
        %v1208 = vmul.f32 %v1199, %v1207
        %v1209 = vrcp.pop %v1119
        %v1210 = vmul.f32 %v1204, %v1209
        %s1211 = scalar_lea.vmem [#allocation12], 32
        %v1212 = vld [vmem:[%s1211] sm:$0xff]
        %v1213 = vld [vmem:[%s1211 + $0x8] sm:$0xff]
        %v1214 = vld [vmem:[%s1211 + $0x10] sm:$0xff]
        %v1215 = vld [vmem:[%s1211 + $0x18] sm:$0xff]
        %v1217 = vsel %vm815, %v1208, 0
        %v1220 = vsel %vm815, %v1210, 0
        %1222 = vmatprep.subr.mxu0 0.0
        %1223 = vmatpush1.msra.mxu0 %v1212
        %1224 = vmatprep.subr.mxu0 0.0
        %1225 = vmatpush1.msra.mxu0 %v1213
        %1226 = vmatprep.subr.mxu0 0.0
        %1227 = vmatpush1.msra.mxu0 %v1214
        %1228 = vmatprep.subr.mxu0 0.0
        %1229 = vmatpush1.msra.mxu0 %v1215
        %1230 = vmatprep.subr.mxu0 0.0
        %1231 = vmatpush1.msra.mxu0 0.0
        %1232 = vmatprep.subr.mxu0 0.0
        %1233 = vmatpush1.msra.mxu0 0.0
        %1234 = vmatprep.subr.mxu0 0.0
        %1235 = vmatpush1.msra.mxu0 0.0
        %1236 = vmatprep.subr.mxu0 0.0
        %1237 = vmatpush1.msra.mxu0 0.0
        %1238 = vmatprep.subr.mxu0 0.0
        %1239 = vmatpush1.msra.mxu0 0.0
        %1240 = vmatprep.subr.mxu0 0.0
        %1241 = vmatpush1.msra.mxu0 0.0
        %1242 = vmatprep.subr.mxu0 0.0
        %1243 = vmatpush1.msra.mxu0 0.0
        %1244 = vmatprep.subr.mxu0 0.0
        %1245 = vmatpush1.msra.mxu0 0.0
        %1246 = vmatprep.subr.mxu0 0.0
        %1247 = vmatpush1.msra.mxu0 0.0
        %1248 = vmatprep.subr.mxu0 0.0
        %1249 = vmatpush1.msra.mxu0 0.0
        %1250 = vmatprep.subr.mxu0 0.0
        %1251 = vmatpush1.msra.mxu0 0.0
        %1252 = vmatprep.subr.mxu0 0.0
        %1253 = vmatpush1.msra.mxu0 0.0
        %1254 = vmatprep.subr.mxu0 0.0
        %1255 = vmatpush1.msra.mxu0 0.0
        %1256 = vmatprep.subr.mxu0 0.0
        %1257 = vmatpush1.msra.mxu0 0.0
        %1258 = vmatprep.subr.mxu0 0.0
        %1259 = vmatpush1.msra.mxu0 0.0
        %1260 = vmatprep.subr.mxu0 0.0
        %1261 = vmatpush1.msra.mxu0 0.0
        %1262 = vmatprep.subr.mxu0 0.0
        %1263 = vmatpush1.msra.mxu0 0.0
        %1264 = vmatprep.subr.mxu0 0.0
        %1265 = vmatpush1.msra.mxu0 0.0
        %1266 = vmatprep.subr.mxu0 0.0
        %1267 = vmatpush1.msra.mxu0 0.0
        %1268 = vmatprep.subr.mxu0 0.0
        %1269 = vmatpush1.msra.mxu0 0.0
        %1270 = vmatprep.subr.mxu0 0.0
        %1271 = vmatpush1.msra.mxu0 0.0
        %1272 = vmatprep.subr.mxu0 0.0
        %1273 = vmatpush1.msra.mxu0 0.0
        %1274 = vmatprep.subr.mxu0 0.0
        %1275 = vmatpush1.msra.mxu0 0.0
        %1276 = vmatprep.subr.mxu0 0.0
        %1277 = vmatpush1.msra.mxu0 0.0
        %1278 = vmatprep.subr.mxu0 0.0
        %1279 = vmatpush1.msra.mxu0 0.0
        %1280 = vmatprep.subr.mxu0 0.0
        %1281 = vmatpush1.msra.mxu0 0.0
        %1282 = vmatprep.subr.mxu0 0.0
        %1283 = vmatpush1.msra.mxu0 0.0
        %1284 = vmatprep.subr.mxu0 0.0
        %1285 = vmatpush1.msra.mxu0 0.0
        %1286 = vmatprep.mubr.f32.mxu0 0.0
        %1287 = vmatmul.mubr.f32.gmra.mrb[0].mxu0 %v1217
        %v1288 = vpop.f32.mrb[0].mxu0
        %v1289 = vadd.f32 0.0, %v1288
        %v1290 = vpop.f32.mrb[0].mxu0
        %1291 = vmatprep.mubr.f32.mxu0 0.0
        %1292 = vmatmul.mubr.f32.gmra.mrb[0].mxu0 %v1220
        %v1293 = vpop.f32.mrb[0].mxu0
        %v1294 = vadd.f32 0.0, %v1293
        %v1295 = vpop.f32.mrb[0].mxu0
        %1296 = vdwg.mxu0
        %v1298 = vsel %vm815, %v1006, 0
        %v1301 = vsel %vm815, %v1008, 0
        %1303 = vmatprep.subr.mxu0 0.0
        %1304 = vmatpush1.msra.mxu0 %v1009
        %1305 = vmatprep.subr.mxu0 0.0
        %1306 = vmatpush1.msra.mxu0 %v1010
        %1307 = vmatprep.subr.mxu0 0.0
        %1308 = vmatpush1.msra.mxu0 %v1011
        %1309 = vmatprep.subr.mxu0 0.0
        %1310 = vmatpush1.msra.mxu0 %v1012
        %1311 = vmatprep.subr.mxu0 0.0
        %1312 = vmatpush1.msra.mxu0 0.0
        %1313 = vmatprep.subr.mxu0 0.0
        %1314 = vmatpush1.msra.mxu0 0.0
        %1315 = vmatprep.subr.mxu0 0.0
        %1316 = vmatpush1.msra.mxu0 0.0
        %1317 = vmatprep.subr.mxu0 0.0
        %1318 = vmatpush1.msra.mxu0 0.0
        %1319 = vmatprep.subr.mxu0 0.0
        %1320 = vmatpush1.msra.mxu0 0.0
        %1321 = vmatprep.subr.mxu0 0.0
        %1322 = vmatpush1.msra.mxu0 0.0
        %1323 = vmatprep.subr.mxu0 0.0
        %1324 = vmatpush1.msra.mxu0 0.0
        %1325 = vmatprep.subr.mxu0 0.0
        %1326 = vmatpush1.msra.mxu0 0.0
        %1327 = vmatprep.subr.mxu0 0.0
        %1328 = vmatpush1.msra.mxu0 0.0
        %1329 = vmatprep.subr.mxu0 0.0
        %1330 = vmatpush1.msra.mxu0 0.0
        %1331 = vmatprep.subr.mxu0 0.0
        %1332 = vmatpush1.msra.mxu0 0.0
        %1333 = vmatprep.subr.mxu0 0.0
        %1334 = vmatpush1.msra.mxu0 0.0
        %1335 = vmatprep.subr.mxu0 0.0
        %1336 = vmatpush1.msra.mxu0 0.0
        %1337 = vmatprep.subr.mxu0 0.0
        %1338 = vmatpush1.msra.mxu0 0.0
        %1339 = vmatprep.subr.mxu0 0.0
        %1340 = vmatpush1.msra.mxu0 0.0
        %1341 = vmatprep.subr.mxu0 0.0
        %1342 = vmatpush1.msra.mxu0 0.0
        %1343 = vmatprep.subr.mxu0 0.0
        %1344 = vmatpush1.msra.mxu0 0.0
        %1345 = vmatprep.subr.mxu0 0.0
        %1346 = vmatpush1.msra.mxu0 0.0
        %1347 = vmatprep.subr.mxu0 0.0
        %1348 = vmatpush1.msra.mxu0 0.0
        %1349 = vmatprep.subr.mxu0 0.0
        %1350 = vmatpush1.msra.mxu0 0.0
        %1351 = vmatprep.subr.mxu0 0.0
        %1352 = vmatpush1.msra.mxu0 0.0
        %1353 = vmatprep.subr.mxu0 0.0
        %1354 = vmatpush1.msra.mxu0 0.0
        %1355 = vmatprep.subr.mxu0 0.0
        %1356 = vmatpush1.msra.mxu0 0.0
        %1357 = vmatprep.subr.mxu0 0.0
        %1358 = vmatpush1.msra.mxu0 0.0
        %1359 = vmatprep.subr.mxu0 0.0
        %1360 = vmatpush1.msra.mxu0 0.0
        %1361 = vmatprep.subr.mxu0 0.0
        %1362 = vmatpush1.msra.mxu0 0.0
        %1363 = vmatprep.subr.mxu0 0.0
        %1364 = vmatpush1.msra.mxu0 0.0
        %1365 = vmatprep.subr.mxu0 0.0
        %1366 = vmatpush1.msra.mxu0 0.0
        %1367 = vmatprep.mubr.f32.mxu0 0.0
        %1368 = vmatmul.mubr.f32.gmra.mrb[0].mxu0 %v1298
        %v1369 = vpop.f32.mrb[0].mxu0
        %v1370 = vadd.f32 %v1289, %v1369
        %v1371 = vpop.f32.mrb[0].mxu0
        %1372 = vmatprep.mubr.f32.mxu0 0.0
        %1373 = vmatmul.mubr.f32.gmra.mrb[0].mxu0 %v1301
        %v1374 = vpop.f32.mrb[0].mxu0
        %v1375 = vadd.f32 %v1294, %v1374
        %v1376 = vpop.f32.mrb[0].mxu0
        %1377 = vdwg.mxu0
        %1378 = vrot.lane.b32.xlu0 %v726, 64
        %v1379 = vpop.permute.xlu0 %1378
        %1380 = vrot.lane.b32.xlu0 %v732, 64
        %v1381 = vpop.permute.xlu0 %1380
        %1382 = vrot.lane.b32.xlu0 %v726, 32
        %v1383 = vpop.permute.xlu0 %1382
        %1384 = vrot.lane.b32.xlu0 %v732, 32
        %v1385 = vpop.permute.xlu0 %1384
        %v1386 = vsel %vm815, %v1379, 0
        %v1388 = vsel %vm815, %v1381, 0
        %v1390 = vsel %vm815, %v1383, 0
        %v1392 = vsel %vm815, %v1385, 0
        %1394 = vmatprep.subr.mxu0 0.0
        %1395 = vmatpush1.xpose.msra.mxu0 %v1390
        %1396 = vmatprep.subr.mxu0 0.0
        %1397 = vmatpush1.xpose.msra.mxu0 %v1392
        %1398 = vmatprep.subr.mxu0 0.0
        %1399 = vmatpush1.xpose.msra.mxu0 0.0
        %1400 = vmatprep.subr.mxu0 0.0
        %1401 = vmatpush1.xpose.msra.mxu0 0.0
        %1402 = vmatprep.subr.mxu0 0.0
        %1403 = vmatpush1.xpose.msra.mxu0 0.0
        %1404 = vmatprep.subr.mxu0 0.0
        %1405 = vmatpush1.xpose.msra.mxu0 0.0
        %1406 = vmatprep.subr.mxu0 0.0
        %1407 = vmatpush1.xpose.msra.mxu0 0.0
        %1408 = vmatprep.subr.mxu0 0.0
        %1409 = vmatpush1.xpose.msra.mxu0 0.0
        %1410 = vmatprep.subr.mxu0 0.0
        %1411 = vmatpush1.xpose.msra.mxu0 0.0
        %1412 = vmatprep.subr.mxu0 0.0
        %1413 = vmatpush1.xpose.msra.mxu0 0.0
        %1414 = vmatprep.subr.mxu0 0.0
        %1415 = vmatpush1.xpose.msra.mxu0 0.0
        %1416 = vmatprep.subr.mxu0 0.0
        %1417 = vmatpush1.xpose.msra.mxu0 0.0
        %1418 = vmatprep.subr.mxu0 0.0
        %1419 = vmatpush1.xpose.msra.mxu0 0.0
        %1420 = vmatprep.subr.mxu0 0.0
        %1421 = vmatpush1.xpose.msra.mxu0 0.0
        %1422 = vmatprep.subr.mxu0 0.0
        %1423 = vmatpush1.xpose.msra.mxu0 0.0
        %1424 = vmatprep.subr.mxu0 0.0
        %1425 = vmatpush1.xpose.msra.mxu0 0.0
        %1426 = vmatprep.subr.mxu0 0.0
        %1427 = vmatpush1.xpose.msra.mxu0 0.0
        %1428 = vmatprep.subr.mxu0 0.0
        %1429 = vmatpush1.xpose.msra.mxu0 0.0
        %1430 = vmatprep.subr.mxu0 0.0
        %1431 = vmatpush1.xpose.msra.mxu0 0.0
        %1432 = vmatprep.subr.mxu0 0.0
        %1433 = vmatpush1.xpose.msra.mxu0 0.0
        %1434 = vmatprep.subr.mxu0 0.0
        %1435 = vmatpush1.xpose.msra.mxu0 0.0
        %1436 = vmatprep.subr.mxu0 0.0
        %1437 = vmatpush1.xpose.msra.mxu0 0.0
        %1438 = vmatprep.subr.mxu0 0.0
        %1439 = vmatpush1.xpose.msra.mxu0 0.0
        %1440 = vmatprep.subr.mxu0 0.0
        %1441 = vmatpush1.xpose.msra.mxu0 0.0
        %1442 = vmatprep.subr.mxu0 0.0
        %1443 = vmatpush1.xpose.msra.mxu0 0.0
        %1444 = vmatprep.subr.mxu0 0.0
        %1445 = vmatpush1.xpose.msra.mxu0 0.0
        %1446 = vmatprep.subr.mxu0 0.0
        %1447 = vmatpush1.xpose.msra.mxu0 0.0
        %1448 = vmatprep.subr.mxu0 0.0
        %1449 = vmatpush1.xpose.msra.mxu0 0.0
        %1450 = vmatprep.subr.mxu0 0.0
        %1451 = vmatpush1.xpose.msra.mxu0 0.0
        %1452 = vmatprep.subr.mxu0 0.0
        %1453 = vmatpush1.xpose.msra.mxu0 0.0
        %1454 = vmatprep.subr.mxu0 0.0
        %1455 = vmatpush1.xpose.msra.mxu0 0.0
        %1456 = vmatprep.subr.mxu0 0.0
        %1457 = vmatpush1.xpose.msra.mxu0 0.0
        %1458 = vmatprep.mubr.f32.mxu0 0.0
        %1459 = vmatmul.mubr.f32.gmra.mrb[0].mxu0 %v1386
        %v1460 = vpop.f32.mrb[0].mxu0
        %v1461 = vadd.f32 0.0, %v1460
        %v1462 = vpop.f32.mrb[0].mxu0
        %1463 = vmatprep.mubr.f32.mxu0 0.0
        %1464 = vmatmul.mubr.f32.gmra.mrb[0].mxu0 %v1388
        %v1465 = vpop.f32.mrb[0].mxu0
        %v1466 = vadd.f32 0.0, %v1465
        %v1467 = vpop.f32.mrb[0].mxu0
        %1468 = vdwg.mxu0
        %v1469 = vsel %vm899, %v1461, -inf
        %1470 = vmax.xlane.f32.xlu0 %v1469
        %v1471 = vpop.xlane.xlu0 %1470
        %v1472 = vsel %vm899, %v1466, -inf
        %1473 = vmax.xlane.f32.xlu0 %v1472
        %v1474 = vpop.xlane.xlu0 %1473
        %v1475 = vsub.f32 %v1461, %v1471
        %v1476 = vsub.f32 %v1466, %v1474
        %v1477 = vmul.f32 %v1475, 1.442695
        %v1478 = vpow.pop %v1477
        %v1479 = vmul.f32 %v1476, 1.442695
        %v1480 = vpow.pop %v1479
        %v1481 = vsel %vm899, %v1478, 0.0
        %1482 = vadd.xlane.f32.xlu0 %v1481
        %v1483 = vpop.xlane.xlu0 %1482
        %v1484 = vsel %vm899, %v1480, 0.0
        %1485 = vadd.xlane.f32.xlu0 %v1484
        %v1486 = vpop.xlane.xlu0 %1485
        %v1488 = vsel %vm899, %v1478, 0
        %v1491 = vsel %vm899, %v1480, 0
        %1493 = vmatprep.subr.mxu0 0.0
        %1494 = vmatpush1.msra.mxu0 %v801
        %1495 = vmatprep.subr.mxu0 0.0
        %1496 = vmatpush1.msra.mxu0 %v806
        %1497 = vmatprep.subr.mxu0 0.0
        %1498 = vmatpush1.msra.mxu0 0.0
        %1499 = vmatprep.subr.mxu0 0.0
        %1500 = vmatpush1.msra.mxu0 0.0
        %1501 = vmatprep.subr.mxu0 0.0
        %1502 = vmatpush1.msra.mxu0 0.0
        %1503 = vmatprep.subr.mxu0 0.0
        %1504 = vmatpush1.msra.mxu0 0.0
        %1505 = vmatprep.subr.mxu0 0.0
        %1506 = vmatpush1.msra.mxu0 0.0
        %1507 = vmatprep.subr.mxu0 0.0
        %1508 = vmatpush1.msra.mxu0 0.0
        %1509 = vmatprep.subr.mxu0 0.0
        %1510 = vmatpush1.msra.mxu0 0.0
        %1511 = vmatprep.subr.mxu0 0.0
        %1512 = vmatpush1.msra.mxu0 0.0
        %1513 = vmatprep.subr.mxu0 0.0
        %1514 = vmatpush1.msra.mxu0 0.0
        %1515 = vmatprep.subr.mxu0 0.0
        %1516 = vmatpush1.msra.mxu0 0.0
        %1517 = vmatprep.subr.mxu0 0.0
        %1518 = vmatpush1.msra.mxu0 0.0
        %1519 = vmatprep.subr.mxu0 0.0
        %1520 = vmatpush1.msra.mxu0 0.0
        %1521 = vmatprep.subr.mxu0 0.0
        %1522 = vmatpush1.msra.mxu0 0.0
        %1523 = vmatprep.subr.mxu0 0.0
        %1524 = vmatpush1.msra.mxu0 0.0
        %1525 = vmatprep.subr.mxu0 0.0
        %1526 = vmatpush1.msra.mxu0 0.0
        %1527 = vmatprep.subr.mxu0 0.0
        %1528 = vmatpush1.msra.mxu0 0.0
        %1529 = vmatprep.subr.mxu0 0.0
        %1530 = vmatpush1.msra.mxu0 0.0
        %1531 = vmatprep.subr.mxu0 0.0
        %1532 = vmatpush1.msra.mxu0 0.0
        %1533 = vmatprep.subr.mxu0 0.0
        %1534 = vmatpush1.msra.mxu0 0.0
        %1535 = vmatprep.subr.mxu0 0.0
        %1536 = vmatpush1.msra.mxu0 0.0
        %1537 = vmatprep.subr.mxu0 0.0
        %1538 = vmatpush1.msra.mxu0 0.0
        %1539 = vmatprep.subr.mxu0 0.0
        %1540 = vmatpush1.msra.mxu0 0.0
        %1541 = vmatprep.subr.mxu0 0.0
        %1542 = vmatpush1.msra.mxu0 0.0
        %1543 = vmatprep.subr.mxu0 0.0
        %1544 = vmatpush1.msra.mxu0 0.0
        %1545 = vmatprep.subr.mxu0 0.0
        %1546 = vmatpush1.msra.mxu0 0.0
        %1547 = vmatprep.subr.mxu0 0.0
        %1548 = vmatpush1.msra.mxu0 0.0
        %1549 = vmatprep.subr.mxu0 0.0
        %1550 = vmatpush1.msra.mxu0 0.0
        %1551 = vmatprep.subr.mxu0 0.0
        %1552 = vmatpush1.msra.mxu0 0.0
        %1553 = vmatprep.subr.mxu0 0.0
        %1554 = vmatpush1.msra.mxu0 0.0
        %1555 = vmatprep.subr.mxu0 0.0
        %1556 = vmatpush1.msra.mxu0 0.0
        %1557 = vmatprep.mubr.f32.mxu0 0.0
        %1558 = vmatmul.mubr.f32.gmra.mrb[0].mxu0 %v1488
        %v1559 = vpop.f32.mrb[0].mxu0
        %v1560 = vadd.f32 0.0, %v1559
        %v1561 = vpop.f32.mrb[0].mxu0
        %1562 = vmatprep.mubr.f32.mxu0 0.0
        %1563 = vmatmul.mubr.f32.gmra.mrb[0].mxu0 %v1491
        %v1564 = vpop.f32.mrb[0].mxu0
        %v1565 = vadd.f32 0.0, %v1564
        %v1566 = vpop.f32.mrb[0].mxu0
        %1567 = vdwg.mxu0
        %v1568 = vrcp.pop %v1483
        %v1569 = vmul.f32 %v1560, %v1568
        %v1570 = vrcp.pop %v1486
        %v1571 = vmul.f32 %v1565, %v1570
        %s1572 = scalar_lea.vmem [#allocation12], 64
        %v1573 = vld [vmem:[%s1572] sm:$0xff]
        %v1574 = vld [vmem:[%s1572 + $0x8] sm:$0xff]
        %v1575 = vld [vmem:[%s1572 + $0x10] sm:$0xff]
        %v1576 = vld [vmem:[%s1572 + $0x18] sm:$0xff]
        %v1578 = vsel %vm815, %v1569, 0
        %v1581 = vsel %vm815, %v1571, 0
        %1583 = vmatprep.subr.mxu0 0.0
        %1584 = vmatpush1.msra.mxu0 %v1573
        %1585 = vmatprep.subr.mxu0 0.0
        %1586 = vmatpush1.msra.mxu0 %v1574
        %1587 = vmatprep.subr.mxu0 0.0
        %1588 = vmatpush1.msra.mxu0 %v1575
        %1589 = vmatprep.subr.mxu0 0.0
        %1590 = vmatpush1.msra.mxu0 %v1576
        %1591 = vmatprep.subr.mxu0 0.0
        %1592 = vmatpush1.msra.mxu0 0.0
        %1593 = vmatprep.subr.mxu0 0.0
        %1594 = vmatpush1.msra.mxu0 0.0
        %1595 = vmatprep.subr.mxu0 0.0
        %1596 = vmatpush1.msra.mxu0 0.0
        %1597 = vmatprep.subr.mxu0 0.0
        %1598 = vmatpush1.msra.mxu0 0.0
        %1599 = vmatprep.subr.mxu0 0.0
        %1600 = vmatpush1.msra.mxu0 0.0
        %1601 = vmatprep.subr.mxu0 0.0
        %1602 = vmatpush1.msra.mxu0 0.0
        %1603 = vmatprep.subr.mxu0 0.0
        %1604 = vmatpush1.msra.mxu0 0.0
        %1605 = vmatprep.subr.mxu0 0.0
        %1606 = vmatpush1.msra.mxu0 0.0
        %1607 = vmatprep.subr.mxu0 0.0
        %1608 = vmatpush1.msra.mxu0 0.0
        %1609 = vmatprep.subr.mxu0 0.0
        %1610 = vmatpush1.msra.mxu0 0.0
        %1611 = vmatprep.subr.mxu0 0.0
        %1612 = vmatpush1.msra.mxu0 0.0
        %1613 = vmatprep.subr.mxu0 0.0
        %1614 = vmatpush1.msra.mxu0 0.0
        %1615 = vmatprep.subr.mxu0 0.0
        %1616 = vmatpush1.msra.mxu0 0.0
        %1617 = vmatprep.subr.mxu0 0.0
        %1618 = vmatpush1.msra.mxu0 0.0
        %1619 = vmatprep.subr.mxu0 0.0
        %1620 = vmatpush1.msra.mxu0 0.0
        %1621 = vmatprep.subr.mxu0 0.0
        %1622 = vmatpush1.msra.mxu0 0.0
        %1623 = vmatprep.subr.mxu0 0.0
        %1624 = vmatpush1.msra.mxu0 0.0
        %1625 = vmatprep.subr.mxu0 0.0
        %1626 = vmatpush1.msra.mxu0 0.0
        %1627 = vmatprep.subr.mxu0 0.0
        %1628 = vmatpush1.msra.mxu0 0.0
        %1629 = vmatprep.subr.mxu0 0.0
        %1630 = vmatpush1.msra.mxu0 0.0
        %1631 = vmatprep.subr.mxu0 0.0
        %1632 = vmatpush1.msra.mxu0 0.0
        %1633 = vmatprep.subr.mxu0 0.0
        %1634 = vmatpush1.msra.mxu0 0.0
        %1635 = vmatprep.subr.mxu0 0.0
        %1636 = vmatpush1.msra.mxu0 0.0
        %1637 = vmatprep.subr.mxu0 0.0
        %1638 = vmatpush1.msra.mxu0 0.0
        %1639 = vmatprep.subr.mxu0 0.0
        %1640 = vmatpush1.msra.mxu0 0.0
        %1641 = vmatprep.subr.mxu0 0.0
        %1642 = vmatpush1.msra.mxu0 0.0
        %1643 = vmatprep.subr.mxu0 0.0
        %1644 = vmatpush1.msra.mxu0 0.0
        %1645 = vmatprep.subr.mxu0 0.0
        %1646 = vmatpush1.msra.mxu0 0.0
        %1647 = vmatprep.mubr.f32.mxu0 0.0
        %1648 = vmatmul.mubr.f32.gmra.mrb[0].mxu0 %v1578
        %v1649 = vpop.f32.mrb[0].mxu0
        %v1650 = vadd.f32 0.0, %v1649
        %v1651 = vpop.f32.mrb[0].mxu0
        %1652 = vmatprep.mubr.f32.mxu0 0.0
        %1653 = vmatmul.mubr.f32.gmra.mrb[0].mxu0 %v1581
        %v1654 = vpop.f32.mrb[0].mxu0
        %v1655 = vadd.f32 0.0, %v1654
        %v1656 = vpop.f32.mrb[0].mxu0
        %1657 = vdwg.mxu0
        %v1658 = vadd.f32 %v1370, %v1650
        %v1659 = vadd.f32 %v1375, %v1655
        %1662 = vrot.lane.b32.xlu0 %v801, 96
        %v1663 = vpop.permute.xlu0 %1662
        %1664 = vrot.lane.b32.xlu0 %v806, 96
        %v1665 = vpop.permute.xlu0 %1664
        %1666 = vrot.lane.b32.xlu0 %v801, 64
        %v1667 = vpop.permute.xlu0 %1666
        %1668 = vrot.lane.b32.xlu0 %v806, 64
        %v1669 = vpop.permute.xlu0 %1668
        %v1670 = vsel %vm815, %v1663, 0
        %v1672 = vsel %vm815, %v1665, 0
        %v1674 = vsel %vm815, %v1667, 0
        %v1676 = vsel %vm815, %v1669, 0
        %1678 = vmatprep.subr.mxu0 0.0
        %1679 = vmatpush1.xpose.msra.mxu0 %v1674
        %1680 = vmatprep.subr.mxu0 0.0
        %1681 = vmatpush1.xpose.msra.mxu0 %v1676
        %1682 = vmatprep.subr.mxu0 0.0
        %1683 = vmatpush1.xpose.msra.mxu0 0.0
        %1684 = vmatprep.subr.mxu0 0.0
        %1685 = vmatpush1.xpose.msra.mxu0 0.0
        %1686 = vmatprep.subr.mxu0 0.0
        %1687 = vmatpush1.xpose.msra.mxu0 0.0
        %1688 = vmatprep.subr.mxu0 0.0
        %1689 = vmatpush1.xpose.msra.mxu0 0.0
        %1690 = vmatprep.subr.mxu0 0.0
        %1691 = vmatpush1.xpose.msra.mxu0 0.0
        %1692 = vmatprep.subr.mxu0 0.0
        %1693 = vmatpush1.xpose.msra.mxu0 0.0
        %1694 = vmatprep.subr.mxu0 0.0
        %1695 = vmatpush1.xpose.msra.mxu0 0.0
        %1696 = vmatprep.subr.mxu0 0.0
        %1697 = vmatpush1.xpose.msra.mxu0 0.0
        %1698 = vmatprep.subr.mxu0 0.0
        %1699 = vmatpush1.xpose.msra.mxu0 0.0
        %1700 = vmatprep.subr.mxu0 0.0
        %1701 = vmatpush1.xpose.msra.mxu0 0.0
        %1702 = vmatprep.subr.mxu0 0.0
        %1703 = vmatpush1.xpose.msra.mxu0 0.0
        %1704 = vmatprep.subr.mxu0 0.0
        %1705 = vmatpush1.xpose.msra.mxu0 0.0
        %1706 = vmatprep.subr.mxu0 0.0
        %1707 = vmatpush1.xpose.msra.mxu0 0.0
        %1708 = vmatprep.subr.mxu0 0.0
        %1709 = vmatpush1.xpose.msra.mxu0 0.0
        %1710 = vmatprep.subr.mxu0 0.0
        %1711 = vmatpush1.xpose.msra.mxu0 0.0
        %1712 = vmatprep.subr.mxu0 0.0
        %1713 = vmatpush1.xpose.msra.mxu0 0.0
        %1714 = vmatprep.subr.mxu0 0.0
        %1715 = vmatpush1.xpose.msra.mxu0 0.0
        %1716 = vmatprep.subr.mxu0 0.0
        %1717 = vmatpush1.xpose.msra.mxu0 0.0
        %1718 = vmatprep.subr.mxu0 0.0
        %1719 = vmatpush1.xpose.msra.mxu0 0.0
        %1720 = vmatprep.subr.mxu0 0.0
        %1721 = vmatpush1.xpose.msra.mxu0 0.0
        %1722 = vmatprep.subr.mxu0 0.0
        %1723 = vmatpush1.xpose.msra.mxu0 0.0
        %1724 = vmatprep.subr.mxu0 0.0
        %1725 = vmatpush1.xpose.msra.mxu0 0.0
        %1726 = vmatprep.subr.mxu0 0.0
        %1727 = vmatpush1.xpose.msra.mxu0 0.0
        %1728 = vmatprep.subr.mxu0 0.0
        %1729 = vmatpush1.xpose.msra.mxu0 0.0
        %1730 = vmatprep.subr.mxu0 0.0
        %1731 = vmatpush1.xpose.msra.mxu0 0.0
        %1732 = vmatprep.subr.mxu0 0.0
        %1733 = vmatpush1.xpose.msra.mxu0 0.0
        %1734 = vmatprep.subr.mxu0 0.0
        %1735 = vmatpush1.xpose.msra.mxu0 0.0
        %1736 = vmatprep.subr.mxu0 0.0
        %1737 = vmatpush1.xpose.msra.mxu0 0.0
        %1738 = vmatprep.subr.mxu0 0.0
        %1739 = vmatpush1.xpose.msra.mxu0 0.0
        %1740 = vmatprep.subr.mxu0 0.0
        %1741 = vmatpush1.xpose.msra.mxu0 0.0
        %1742 = vmatprep.mubr.f32.mxu0 0.0
        %1743 = vmatmul.mubr.f32.gmra.mrb[0].mxu0 %v1670
        %v1744 = vpop.f32.mrb[0].mxu0
        %v1745 = vadd.f32 0.0, %v1744
        %v1746 = vpop.f32.mrb[0].mxu0
        %1747 = vmatprep.mubr.f32.mxu0 0.0
        %1748 = vmatmul.mubr.f32.gmra.mrb[0].mxu0 %v1672
        %v1749 = vpop.f32.mrb[0].mxu0
        %v1750 = vadd.f32 0.0, %v1749
        %v1751 = vpop.f32.mrb[0].mxu0
        %1752 = vdwg.mxu0
        %v1753 = vsel %vm899, %v1745, -inf
        %1754 = vmax.xlane.f32.xlu0 %v1753
        %v1755 = vpop.xlane.xlu0 %1754
        %v1756 = vsel %vm899, %v1750, -inf
        %1757 = vmax.xlane.f32.xlu0 %v1756
        %v1758 = vpop.xlane.xlu0 %1757
        %v1759 = vsub.f32 %v1745, %v1755
        %v1760 = vsub.f32 %v1750, %v1758
        %v1761 = vmul.f32 %v1759, 1.442695
        %v1762 = vpow.pop %v1761
        %v1763 = vmul.f32 %v1760, 1.442695
        %v1764 = vpow.pop %v1763
        %v1765 = vsel %vm899, %v1762, 0.0
        %1766 = vadd.xlane.f32.xlu0 %v1765
        %v1767 = vpop.xlane.xlu0 %1766
        %v1768 = vsel %vm899, %v1764, 0.0
        %1769 = vadd.xlane.f32.xlu0 %v1768
        %v1770 = vpop.xlane.xlu0 %1769
        %1771 = vrot.lane.b32.xlu0 %v801, 32
        %v1772 = vpop.permute.xlu0 %1771
        %1773 = vrot.lane.b32.xlu0 %v806, 32
        %v1774 = vpop.permute.xlu0 %1773
        %v1778 = vsel %vm899, %v1762, 0
        %v1781 = vsel %vm899, %v1764, 0
        %1783 = vmatprep.subr.mxu0 0.0
        %1784 = vmatpush1.msra.mxu0 %v1772
        %1785 = vmatprep.subr.mxu0 0.0
        %1786 = vmatpush1.msra.mxu0 %v1774
        %1787 = vmatprep.subr.mxu0 0.0
        %1788 = vmatpush1.msra.mxu0 0.0
        %1789 = vmatprep.subr.mxu0 0.0
        %1790 = vmatpush1.msra.mxu0 0.0
        %1791 = vmatprep.subr.mxu0 0.0
        %1792 = vmatpush1.msra.mxu0 0.0
        %1793 = vmatprep.subr.mxu0 0.0
        %1794 = vmatpush1.msra.mxu0 0.0
        %1795 = vmatprep.subr.mxu0 0.0
        %1796 = vmatpush1.msra.mxu0 0.0
        %1797 = vmatprep.subr.mxu0 0.0
        %1798 = vmatpush1.msra.mxu0 0.0
        %1799 = vmatprep.subr.mxu0 0.0
        %1800 = vmatpush1.msra.mxu0 0.0
        %1801 = vmatprep.subr.mxu0 0.0
        %1802 = vmatpush1.msra.mxu0 0.0
        %1803 = vmatprep.subr.mxu0 0.0
        %1804 = vmatpush1.msra.mxu0 0.0
        %1805 = vmatprep.subr.mxu0 0.0
        %1806 = vmatpush1.msra.mxu0 0.0
        %1807 = vmatprep.subr.mxu0 0.0
        %1808 = vmatpush1.msra.mxu0 0.0
        %1809 = vmatprep.subr.mxu0 0.0
        %1810 = vmatpush1.msra.mxu0 0.0
        %1811 = vmatprep.subr.mxu0 0.0
        %1812 = vmatpush1.msra.mxu0 0.0
        %1813 = vmatprep.subr.mxu0 0.0
        %1814 = vmatpush1.msra.mxu0 0.0
        %1815 = vmatprep.subr.mxu0 0.0
        %1816 = vmatpush1.msra.mxu0 0.0
        %1817 = vmatprep.subr.mxu0 0.0
        %1818 = vmatpush1.msra.mxu0 0.0
        %1819 = vmatprep.subr.mxu0 0.0
        %1820 = vmatpush1.msra.mxu0 0.0
        %1821 = vmatprep.subr.mxu0 0.0
        %1822 = vmatpush1.msra.mxu0 0.0
        %1823 = vmatprep.subr.mxu0 0.0
        %1824 = vmatpush1.msra.mxu0 0.0
        %1825 = vmatprep.subr.mxu0 0.0
        %1826 = vmatpush1.msra.mxu0 0.0
        %1827 = vmatprep.subr.mxu0 0.0
        %1828 = vmatpush1.msra.mxu0 0.0
        %1829 = vmatprep.subr.mxu0 0.0
        %1830 = vmatpush1.msra.mxu0 0.0
        %1831 = vmatprep.subr.mxu0 0.0
        %1832 = vmatpush1.msra.mxu0 0.0
        %1833 = vmatprep.subr.mxu0 0.0
        %1834 = vmatpush1.msra.mxu0 0.0
        %1835 = vmatprep.subr.mxu0 0.0
        %1836 = vmatpush1.msra.mxu0 0.0
        %1837 = vmatprep.subr.mxu0 0.0
        %1838 = vmatpush1.msra.mxu0 0.0
        %1839 = vmatprep.subr.mxu0 0.0
        %1840 = vmatpush1.msra.mxu0 0.0
        %1841 = vmatprep.subr.mxu0 0.0
        %1842 = vmatpush1.msra.mxu0 0.0
        %1843 = vmatprep.subr.mxu0 0.0
        %1844 = vmatpush1.msra.mxu0 0.0
        %1845 = vmatprep.subr.mxu0 0.0
        %1846 = vmatpush1.msra.mxu0 0.0
        %1847 = vmatprep.mubr.f32.mxu0 0.0
        %1848 = vmatmul.mubr.f32.gmra.mrb[0].mxu0 %v1778
        %v1849 = vpop.f32.mrb[0].mxu0
        %v1850 = vadd.f32 0.0, %v1849
        %v1851 = vpop.f32.mrb[0].mxu0
        %1852 = vmatprep.mubr.f32.mxu0 0.0
        %1853 = vmatmul.mubr.f32.gmra.mrb[0].mxu0 %v1781
        %v1854 = vpop.f32.mrb[0].mxu0
        %v1855 = vadd.f32 0.0, %v1854
        %v1856 = vpop.f32.mrb[0].mxu0
        %1857 = vdwg.mxu0
        %v1858 = vrcp.pop %v1767
        %v1859 = vmul.f32 %v1850, %v1858
        %v1860 = vrcp.pop %v1770
        %v1861 = vmul.f32 %v1855, %v1860
        %s1862 = scalar_lea.vmem [#allocation12], 96
        %v1863 = vld [vmem:[%s1862] sm:$0xff]
        %v1864 = vld [vmem:[%s1862 + $0x8] sm:$0xff]
        %v1865 = vld [vmem:[%s1862 + $0x10] sm:$0xff]
        %v1866 = vld [vmem:[%s1862 + $0x18] sm:$0xff]
        %v1868 = vsel %vm815, %v1859, 0
        %v1871 = vsel %vm815, %v1861, 0
        %1873 = vmatprep.subr.mxu0 0.0
        %1874 = vmatpush1.msra.mxu0 %v1863
        %1875 = vmatprep.subr.mxu0 0.0
        %1876 = vmatpush1.msra.mxu0 %v1864
        %1877 = vmatprep.subr.mxu0 0.0
        %1878 = vmatpush1.msra.mxu0 %v1865
        %1879 = vmatprep.subr.mxu0 0.0
        %1880 = vmatpush1.msra.mxu0 %v1866
        %1881 = vmatprep.subr.mxu0 0.0
        %1882 = vmatpush1.msra.mxu0 0.0
        %1883 = vmatprep.subr.mxu0 0.0
        %1884 = vmatpush1.msra.mxu0 0.0
        %1885 = vmatprep.subr.mxu0 0.0
        %1886 = vmatpush1.msra.mxu0 0.0
        %1887 = vmatprep.subr.mxu0 0.0
        %1888 = vmatpush1.msra.mxu0 0.0
        %1889 = vmatprep.subr.mxu0 0.0
        %1890 = vmatpush1.msra.mxu0 0.0
        %1891 = vmatprep.subr.mxu0 0.0
        %1892 = vmatpush1.msra.mxu0 0.0
        %1893 = vmatprep.subr.mxu0 0.0
        %1894 = vmatpush1.msra.mxu0 0.0
        %1895 = vmatprep.subr.mxu0 0.0
        %1896 = vmatpush1.msra.mxu0 0.0
        %1897 = vmatprep.subr.mxu0 0.0
        %1898 = vmatpush1.msra.mxu0 0.0
        %1899 = vmatprep.subr.mxu0 0.0
        %1900 = vmatpush1.msra.mxu0 0.0
        %1901 = vmatprep.subr.mxu0 0.0
        %1902 = vmatpush1.msra.mxu0 0.0
        %1903 = vmatprep.subr.mxu0 0.0
        %1904 = vmatpush1.msra.mxu0 0.0
        %1905 = vmatprep.subr.mxu0 0.0
        %1906 = vmatpush1.msra.mxu0 0.0
        %1907 = vmatprep.subr.mxu0 0.0
        %1908 = vmatpush1.msra.mxu0 0.0
        %1909 = vmatprep.subr.mxu0 0.0
        %1910 = vmatpush1.msra.mxu0 0.0
        %1911 = vmatprep.subr.mxu0 0.0
        %1912 = vmatpush1.msra.mxu0 0.0
        %1913 = vmatprep.subr.mxu0 0.0
        %1914 = vmatpush1.msra.mxu0 0.0
        %1915 = vmatprep.subr.mxu0 0.0
        %1916 = vmatpush1.msra.mxu0 0.0
        %1917 = vmatprep.subr.mxu0 0.0
        %1918 = vmatpush1.msra.mxu0 0.0
        %1919 = vmatprep.subr.mxu0 0.0
        %1920 = vmatpush1.msra.mxu0 0.0
        %1921 = vmatprep.subr.mxu0 0.0
        %1922 = vmatpush1.msra.mxu0 0.0
        %1923 = vmatprep.subr.mxu0 0.0
        %1924 = vmatpush1.msra.mxu0 0.0
        %1925 = vmatprep.subr.mxu0 0.0
        %1926 = vmatpush1.msra.mxu0 0.0
        %1927 = vmatprep.subr.mxu0 0.0
        %1928 = vmatpush1.msra.mxu0 0.0
        %1929 = vmatprep.subr.mxu0 0.0
        %1930 = vmatpush1.msra.mxu0 0.0
        %1931 = vmatprep.subr.mxu0 0.0
        %1932 = vmatpush1.msra.mxu0 0.0
        %1933 = vmatprep.subr.mxu0 0.0
        %1934 = vmatpush1.msra.mxu0 0.0
        %1935 = vmatprep.subr.mxu0 0.0
        %1936 = vmatpush1.msra.mxu0 0.0
        %1937 = vmatprep.mubr.f32.mxu0 0.0
        %1938 = vmatmul.mubr.f32.gmra.mrb[0].mxu0 %v1868
        %v1939 = vpop.f32.mrb[0].mxu0
        %v1940 = vadd.f32 0.0, %v1939
        %v1941 = vpop.f32.mrb[0].mxu0
        %1942 = vmatprep.mubr.f32.mxu0 0.0
        %1943 = vmatmul.mubr.f32.gmra.mrb[0].mxu0 %v1871
        %v1944 = vpop.f32.mrb[0].mxu0
        %v1945 = vadd.f32 0.0, %v1944
        %v1946 = vpop.f32.mrb[0].mxu0
        %1947 = vdwg.mxu0
        %v1948 = vadd.f32 %v1658, %v1940
        %v1949 = vadd.f32 %v1659, %v1945
        %v1950 = vadd.f32 %v1948, %v566
        %v1951 = vadd.f32 %v1949, %v567
        %v1952 = vld [vmem:[#allocation13] sm:$0x1]
        %v1953 = vld [vmem:[#allocation15] sm:$0x1]
        %1954 = vadd.xlane.f32.xlu0 %v1950
        %v1955 = vpop.xlane.xlu0 %1954
        %1956 = vadd.xlane.f32.xlu0 %v1951
        %v1957 = vpop.xlane.xlu0 %1956
        %v1958 = vmul.f32 %v1955, %v574
        %v1959 = vmul.f32 %v1957, %v574
        %v1960 = vsub.f32 %v1950, %v1958
        %v1961 = vsub.f32 %v1951, %v1959
        %v1962 = vmul.f32 %v1960, %v1960
        %v1963 = vmul.f32 %v1961, %v1961
        %1964 = vadd.xlane.f32.xlu0 %v1962
        %v1965 = vpop.xlane.xlu0 %1964
        %1966 = vadd.xlane.f32.xlu0 %v1963
        %v1967 = vpop.xlane.xlu0 %1966
        %v1968 = vmul.f32 %v1965, %v574
        %v1969 = vmul.f32 %v1967, %v574
        %v1970 = vadd.f32 %v1968, 1e-05
        %v1971 = vadd.f32 %v1969, 1e-05
        %v1972 = vrsqrt.pop %v1970
        %v1973 = vrsqrt.pop %v1971
        %v1974 = vmul.f32 %v1960, %v1972
        %v1975 = vmul.f32 %v1961, %v1973
        %v1977 = vlaneseq
        %v1978 = vshrl.u32 %v1977, 7
        %v1979 = vsub.s32 0, %v1978
        %v1980 = vrot.slane %v1952, %v1979
        %v1982 = vmul.f32 %v1974, %v1980
        %v1983 = vmul.f32 %v1975, %v1980
        %v1985 = vlaneseq
        %v1986 = vshrl.u32 %v1985, 7
        %v1987 = vsub.s32 0, %v1986
        %v1988 = vrot.slane %v1953, %v1987
        %v1990 = vadd.f32 %v1982, %v1988
        %v1991 = vadd.f32 %v1983, %v1988
        %v1992 = vld [vmem:[#allocation16] sm:$0xff]
        %v1993 = vld [vmem:[#allocation16 + $0x8] sm:$0xff]
        %v1994 = vld [vmem:[#allocation16 + $0x10] sm:$0xff]
        %v1995 = vld [vmem:[#allocation16 + $0x18] sm:$0xff]
        %v1996 = vld [vmem:[#allocation16 + $0x20] sm:$0xff]
        %v1997 = vld [vmem:[#allocation16 + $0x28] sm:$0xff]
        %v1998 = vld [vmem:[#allocation16 + $0x30] sm:$0xff]
        %v1999 = vld [vmem:[#allocation16 + $0x38] sm:$0xff]
        %v2000 = vld [vmem:[#allocation16 + $0x40] sm:$0xff]
        %v2001 = vld [vmem:[#allocation16 + $0x48] sm:$0xff]
        %v2002 = vld [vmem:[#allocation16 + $0x50] sm:$0xff]
        %v2003 = vld [vmem:[#allocation16 + $0x58] sm:$0xff]
        %v2004 = vld [vmem:[#allocation16 + $0x60] sm:$0xff]
        %v2005 = vld [vmem:[#allocation16 + $0x68] sm:$0xff]
        %v2006 = vld [vmem:[#allocation16 + $0x70] sm:$0xff]
        %v2007 = vld [vmem:[#allocation16 + $0x78] sm:$0xff]
        %v2008 = vld [vmem:[#allocation16 + $0x80] sm:$0xff]
        %v2009 = vld [vmem:[#allocation16 + $0x88] sm:$0xff]
        %v2010 = vld [vmem:[#allocation16 + $0x90] sm:$0xff]
        %v2011 = vld [vmem:[#allocation16 + $0x98] sm:$0xff]
        %v2012 = vld [vmem:[#allocation16 + $0xa0] sm:$0xff]
        %v2013 = vld [vmem:[#allocation16 + $0xa8] sm:$0xff]
        %v2014 = vld [vmem:[#allocation16 + $0xb0] sm:$0xff]
        %v2015 = vld [vmem:[#allocation16 + $0xb8] sm:$0xff]
        %v2016 = vld [vmem:[#allocation16 + $0xc0] sm:$0xff]
        %v2017 = vld [vmem:[#allocation16 + $0xc8] sm:$0xff]
        %v2018 = vld [vmem:[#allocation16 + $0xd0] sm:$0xff]
        %v2019 = vld [vmem:[#allocation16 + $0xd8] sm:$0xff]
        %v2020 = vld [vmem:[#allocation16 + $0xe0] sm:$0xff]
        %v2021 = vld [vmem:[#allocation16 + $0xe8] sm:$0xff]
        %v2022 = vld [vmem:[#allocation16 + $0xf0] sm:$0xff]
        %v2023 = vld [vmem:[#allocation16 + $0xf8] sm:$0xff]
        %v2024 = vld [vmem:[#allocation18] sm:$0x3]
        %v2026 = vlaneseq
        %v2027 = vshrl.u32 %v2026, 7
        %v2028 = vsub.s32 0, %v2027
        %v2029 = vrot.slane %v2024, %v2028
        %v2030 = vlaneseq
        %v2031 = vshrl.u32 %v2030, 7
        %v2032 = vsub.s32 1, %v2031
        %v2033 = vrot.slane %v2024, %v2032
        %2036 = vmatprep.subr.mxu0 %v1993
        %2037 = vmatpush1.msra.mxu0 %v1992
        %2038 = vmatprep.subr.mxu0 %v1995
        %2039 = vmatpush1.msra.mxu0 %v1994
        %2040 = vmatprep.subr.mxu0 %v1997
        %2041 = vmatpush1.msra.mxu0 %v1996
        %2042 = vmatprep.subr.mxu0 %v1999
        %2043 = vmatpush1.msra.mxu0 %v1998
        %2044 = vmatprep.subr.mxu0 %v2001
        %2045 = vmatpush1.msra.mxu0 %v2000
        %2046 = vmatprep.subr.mxu0 %v2003
        %2047 = vmatpush1.msra.mxu0 %v2002
        %2048 = vmatprep.subr.mxu0 %v2005
        %2049 = vmatpush1.msra.mxu0 %v2004
        %2050 = vmatprep.subr.mxu0 %v2007
        %2051 = vmatpush1.msra.mxu0 %v2006
        %2052 = vmatprep.subr.mxu0 %v2009
        %2053 = vmatpush1.msra.mxu0 %v2008
        %2054 = vmatprep.subr.mxu0 %v2011
        %2055 = vmatpush1.msra.mxu0 %v2010
        %2056 = vmatprep.subr.mxu0 %v2013
        %2057 = vmatpush1.msra.mxu0 %v2012
        %2058 = vmatprep.subr.mxu0 %v2015
        %2059 = vmatpush1.msra.mxu0 %v2014
        %2060 = vmatprep.subr.mxu0 %v2017
        %2061 = vmatpush1.msra.mxu0 %v2016
        %2062 = vmatprep.subr.mxu0 %v2019
        %2063 = vmatpush1.msra.mxu0 %v2018
        %2064 = vmatprep.subr.mxu0 %v2021
        %2065 = vmatpush1.msra.mxu0 %v2020
        %2066 = vmatprep.subr.mxu0 %v2023
        %2067 = vmatpush1.msra.mxu0 %v2022
        %2068 = vmatprep.subr.mxu0 0.0
        %2069 = vmatpush1.msra.mxu0 0.0
        %2070 = vmatprep.subr.mxu0 0.0
        %2071 = vmatpush1.msra.mxu0 0.0
        %2072 = vmatprep.subr.mxu0 0.0
        %2073 = vmatpush1.msra.mxu0 0.0
        %2074 = vmatprep.subr.mxu0 0.0
        %2075 = vmatpush1.msra.mxu0 0.0
        %2076 = vmatprep.subr.mxu0 0.0
        %2077 = vmatpush1.msra.mxu0 0.0
        %2078 = vmatprep.subr.mxu0 0.0
        %2079 = vmatpush1.msra.mxu0 0.0
        %2080 = vmatprep.subr.mxu0 0.0
        %2081 = vmatpush1.msra.mxu0 0.0
        %2082 = vmatprep.subr.mxu0 0.0
        %2083 = vmatpush1.msra.mxu0 0.0
        %2084 = vmatprep.subr.mxu0 0.0
        %2085 = vmatpush1.msra.mxu0 0.0
        %2086 = vmatprep.subr.mxu0 0.0
        %2087 = vmatpush1.msra.mxu0 0.0
        %2088 = vmatprep.subr.mxu0 0.0
        %2089 = vmatpush1.msra.mxu0 0.0
        %2090 = vmatprep.subr.mxu0 0.0
        %2091 = vmatpush1.msra.mxu0 0.0
        %2092 = vmatprep.subr.mxu0 0.0
        %2093 = vmatpush1.msra.mxu0 0.0
        %2094 = vmatprep.subr.mxu0 0.0
        %2095 = vmatpush1.msra.mxu0 0.0
        %2096 = vmatprep.subr.mxu0 0.0
        %2097 = vmatpush1.msra.mxu0 0.0
        %2098 = vmatprep.subr.mxu0 0.0
        %2099 = vmatpush1.msra.mxu0 0.0
        %2100 = vmatprep.mubr.f32.mxu0 0.0
        %2101 = vmatmul.mubr.f32.gmra.mrb[0].mxu0 %v1990
        %v2102 = vpop.f32.mrb[0].mxu0
        %v2103 = vadd.f32 %v2029, %v2102
        %v2104 = vpop.f32.mrb[0].mxu0
        %v2105 = vadd.f32 %v2033, %v2104
        %2106 = vmatprep.mubr.f32.mxu0 0.0
        %2107 = vmatmul.mubr.f32.gmra.mrb[0].mxu0 %v1991
        %v2108 = vpop.f32.mrb[0].mxu0
        %v2109 = vadd.f32 %v2029, %v2108
        %v2110 = vpop.f32.mrb[0].mxu0
        %v2111 = vadd.f32 %v2033, %v2110
        %2112 = vdwg.mxu0
        %v2113 = vmul.f32 %v2103, 0.5
        %v2114 = vmul.f32 %v2105, 0.5
        %v2115 = vmul.f32 %v2109, 0.5
        %v2116 = vmul.f32 %v2111, 0.5
        %v2117 = vmul.f32 %v2103, 0.70710677
        %v2118 = vmul.f32 %v2105, 0.70710677
        %v2119 = vmul.f32 %v2109, 0.70710677
        %v2120 = vmul.f32 %v2111, 0.70710677
        %v2121 = verf.f32.pop %v2117
        %v2122 = verf.f32.pop %v2118
        %v2123 = verf.f32.pop %v2119
        %v2124 = verf.f32.pop %v2120
        %v2125 = vadd.f32 %v2121, 1.0
        %v2126 = vadd.f32 %v2122, 1.0
        %v2127 = vadd.f32 %v2123, 1.0
        %v2128 = vadd.f32 %v2124, 1.0
        %v2129 = vmul.f32 %v2113, %v2125
        %v2130 = vmul.f32 %v2114, %v2126
        %v2131 = vmul.f32 %v2115, %v2127
        %v2132 = vmul.f32 %v2116, %v2128
        %v2133 = vld [vmem:[#allocation19] sm:$0xff]
        %v2134 = vld [vmem:[#allocation19 + $0x8] sm:$0xff]
        %v2135 = vld [vmem:[#allocation19 + $0x10] sm:$0xff]
        %v2136 = vld [vmem:[#allocation19 + $0x18] sm:$0xff]
        %v2137 = vld [vmem:[#allocation19 + $0x20] sm:$0xff]
        %v2138 = vld [vmem:[#allocation19 + $0x28] sm:$0xff]
        %v2139 = vld [vmem:[#allocation19 + $0x30] sm:$0xff]
        %v2140 = vld [vmem:[#allocation19 + $0x38] sm:$0xff]
        %v2141 = vld [vmem:[#allocation19 + $0x40] sm:$0xff]
        %v2142 = vld [vmem:[#allocation19 + $0x48] sm:$0xff]
        %v2143 = vld [vmem:[#allocation19 + $0x50] sm:$0xff]
        %v2144 = vld [vmem:[#allocation19 + $0x58] sm:$0xff]
        %v2145 = vld [vmem:[#allocation19 + $0x60] sm:$0xff]
        %v2146 = vld [vmem:[#allocation19 + $0x68] sm:$0xff]
        %v2147 = vld [vmem:[#allocation19 + $0x70] sm:$0xff]
        %v2148 = vld [vmem:[#allocation19 + $0x78] sm:$0xff]
        %v2149 = vld [vmem:[#allocation19 + $0x80] sm:$0xff]
        %v2150 = vld [vmem:[#allocation19 + $0x88] sm:$0xff]
        %v2151 = vld [vmem:[#allocation19 + $0x90] sm:$0xff]
        %v2152 = vld [vmem:[#allocation19 + $0x98] sm:$0xff]
        %v2153 = vld [vmem:[#allocation19 + $0xa0] sm:$0xff]
        %v2154 = vld [vmem:[#allocation19 + $0xa8] sm:$0xff]
        %v2155 = vld [vmem:[#allocation19 + $0xb0] sm:$0xff]
        %v2156 = vld [vmem:[#allocation19 + $0xb8] sm:$0xff]
        %v2157 = vld [vmem:[#allocation19 + $0xc0] sm:$0xff]
        %v2158 = vld [vmem:[#allocation19 + $0xc8] sm:$0xff]
        %v2159 = vld [vmem:[#allocation19 + $0xd0] sm:$0xff]
        %v2160 = vld [vmem:[#allocation19 + $0xd8] sm:$0xff]
        %v2161 = vld [vmem:[#allocation19 + $0xe0] sm:$0xff]
        %v2162 = vld [vmem:[#allocation19 + $0xe8] sm:$0xff]
        %v2163 = vld [vmem:[#allocation19 + $0xf0] sm:$0xff]
        %v2164 = vld [vmem:[#allocation19 + $0xf8] sm:$0xff]
        %v2165 = vld [vmem:[#allocation21] sm:$0x1]
        %v2167 = vlaneseq
        %v2168 = vshrl.u32 %v2167, 7
        %v2169 = vsub.s32 0, %v2168
        %v2170 = vrot.slane %v2165, %v2169
        %2172 = vmatprep.subr.mxu0 0.0
        %2173 = vmatpush1.msra.mxu0 %v2133
        %2174 = vmatprep.subr.mxu0 0.0
        %2175 = vmatpush1.msra.mxu0 %v2134
        %2176 = vmatprep.subr.mxu0 0.0
        %2177 = vmatpush1.msra.mxu0 %v2135
        %2178 = vmatprep.subr.mxu0 0.0
        %2179 = vmatpush1.msra.mxu0 %v2136
        %2180 = vmatprep.subr.mxu0 0.0
        %2181 = vmatpush1.msra.mxu0 %v2137
        %2182 = vmatprep.subr.mxu0 0.0
        %2183 = vmatpush1.msra.mxu0 %v2138
        %2184 = vmatprep.subr.mxu0 0.0
        %2185 = vmatpush1.msra.mxu0 %v2139
        %2186 = vmatprep.subr.mxu0 0.0
        %2187 = vmatpush1.msra.mxu0 %v2140
        %2188 = vmatprep.subr.mxu0 0.0
        %2189 = vmatpush1.msra.mxu0 %v2141
        %2190 = vmatprep.subr.mxu0 0.0
        %2191 = vmatpush1.msra.mxu0 %v2142
        %2192 = vmatprep.subr.mxu0 0.0
        %2193 = vmatpush1.msra.mxu0 %v2143
        %2194 = vmatprep.subr.mxu0 0.0
        %2195 = vmatpush1.msra.mxu0 %v2144
        %2196 = vmatprep.subr.mxu0 0.0
        %2197 = vmatpush1.msra.mxu0 %v2145
        %2198 = vmatprep.subr.mxu0 0.0
        %2199 = vmatpush1.msra.mxu0 %v2146
        %2200 = vmatprep.subr.mxu0 0.0
        %2201 = vmatpush1.msra.mxu0 %v2147
        %2202 = vmatprep.subr.mxu0 0.0
        %2203 = vmatpush1.msra.mxu0 %v2148
        %2204 = vmatprep.subr.mxu0 0.0
        %2205 = vmatpush1.msra.mxu0 %v2149
        %2206 = vmatprep.subr.mxu0 0.0
        %2207 = vmatpush1.msra.mxu0 %v2150
        %2208 = vmatprep.subr.mxu0 0.0
        %2209 = vmatpush1.msra.mxu0 %v2151
        %2210 = vmatprep.subr.mxu0 0.0
        %2211 = vmatpush1.msra.mxu0 %v2152
        %2212 = vmatprep.subr.mxu0 0.0
        %2213 = vmatpush1.msra.mxu0 %v2153
        %2214 = vmatprep.subr.mxu0 0.0
        %2215 = vmatpush1.msra.mxu0 %v2154
        %2216 = vmatprep.subr.mxu0 0.0
        %2217 = vmatpush1.msra.mxu0 %v2155
        %2218 = vmatprep.subr.mxu0 0.0
        %2219 = vmatpush1.msra.mxu0 %v2156
        %2220 = vmatprep.subr.mxu0 0.0
        %2221 = vmatpush1.msra.mxu0 %v2157
        %2222 = vmatprep.subr.mxu0 0.0
        %2223 = vmatpush1.msra.mxu0 %v2158
        %2224 = vmatprep.subr.mxu0 0.0
        %2225 = vmatpush1.msra.mxu0 %v2159
        %2226 = vmatprep.subr.mxu0 0.0
        %2227 = vmatpush1.msra.mxu0 %v2160
        %2228 = vmatprep.subr.mxu0 0.0
        %2229 = vmatpush1.msra.mxu0 %v2161
        %2230 = vmatprep.subr.mxu0 0.0
        %2231 = vmatpush1.msra.mxu0 %v2162
        %2232 = vmatprep.subr.mxu0 0.0
        %2233 = vmatpush1.msra.mxu0 %v2163
        %2234 = vmatprep.subr.mxu0 0.0
        %2235 = vmatpush1.msra.mxu0 %v2164
        %2236 = vmatprep.mubr.f32.mxu0 %v2130
        %2237 = vmatmul.mubr.f32.gmra.mrb[0].mxu0 %v2129
        %v2238 = vpop.f32.mrb[0].mxu0
        %v2239 = vadd.f32 %v2170, %v2238
        %v2240 = vpop.f32.mrb[0].mxu0
        %2241 = vmatprep.mubr.f32.mxu0 %v2132
        %2242 = vmatmul.mubr.f32.gmra.mrb[0].mxu0 %v2131
        %v2243 = vpop.f32.mrb[0].mxu0
        %v2244 = vadd.f32 %v2170, %v2243
        %v2245 = vpop.f32.mrb[0].mxu0
        %2246 = vdwg.mxu0
        %v2247 = vmul.f32 %v2239, 0.5
        %v2248 = vmul.f32 %v2244, 0.5
        %v2249 = vmul.f32 %v2239, 0.70710677
        %v2250 = vmul.f32 %v2244, 0.70710677
        %v2251 = verf.f32.pop %v2249
        %v2252 = verf.f32.pop %v2250
        %v2253 = vadd.f32 %v2251, 1.0
        %v2254 = vadd.f32 %v2252, 1.0
        %v2255 = vmul.f32 %v2247, %v2253
        %v2256 = vmul.f32 %v2248, %v2254
        %v2257 = vadd.f32 %v2255, %v1950
        %v2258 = vadd.f32 %v2256, %v1951
        %2259 = vst [vmem:[%s565] sm:$0xff] %v2257
        %2260 = vst [vmem:[%s565 + $0x8] sm:$0xff] %v2258
        %s2261 = sand.u32 %s299, 1
        %s2262 = scalar_lea.sflag [#allocation6], %s2261
        %s2263 = sand.u32 %s299, 1
        %s2264 = smul.addr %s2263, 16
        %s2265 = scalar_lea.vmem [#allocation22], %s2264
        // Predicated region
        $region109: #{tpu_custom_call.1} parent=63 // pred_check
          %p2266 = pneg %p309
        $region110: #{tpu_custom_call.1} parent=63 // pred_check_branch
          %2268 = sbr.rel (%p2266) target = $region112
        $region111: #{tpu_custom_call.1} parent=63 // pred_region
          %s2270 = ssub.s32 256, 256
          %2271 = vsyncadd %s2262, %s2270
          %s2272 = smul.addr %s37, 2
          %s2273 = smul.addr %s2272, 128
          %s2274 = scalar_lea.hbm %s11, %s2273
          %s2275 = sshll.u32 %s2265, 4
          %s2276 = int_to_ptr.vmem [resolvable:$true] %s2275
          %2281 = dma.vmem_to_hbm [thread:$0]  %s2276, 256, %s2274, %s2262, 128, 128, 8
        $region112: #{tpu_custom_call.1} parent=63 // pred_fallthru
          _
      $region64: #{tpu_custom_call.1} parent=5 // pred_fallthru
        _
      %p2282 = scmp.le.s32.totalorder 2, %s28
      // Predicated region
      $region113: #{tpu_custom_call.1} parent=5 // pred_check
        %p2283 = pneg %p2282
      $region114: #{tpu_custom_call.1} parent=5 // pred_check_branch
        %2285 = sbr.rel (%p2283) target = $region116
      $region115: #{tpu_custom_call.1} parent=5 // pred_region
        %s2286 = ssub.s32 %s28, 2
        // Predicated region
        $region117: #{tpu_custom_call.1} parent=115 // pred_check
          %p2287 = pneg %p315
        $region118: #{tpu_custom_call.1} parent=115 // pred_check_branch
          %2289 = sbr.rel (%p2287) target = $region120
        $region119: #{tpu_custom_call.1} parent=115 // pred_region
          %s2290 = sand.u32 %s300, 1
          %s2291 = scalar_lea.sflag [#allocation6], %s2290
          %s2292 = sand.u32 %s300, 1
          %s2293 = smul.addr %s2292, 16
          %s2294 = scalar_lea.vmem [#allocation22], %s2293
          %2295 = dma.done %s2291, 256
        $region120: #{tpu_custom_call.1} parent=115 // pred_fallthru
          _
      $region116: #{tpu_custom_call.1} parent=5 // pred_fallthru
        _
    $region6: #{tpu_custom_call.1} parent=1 // loop_footer
      %s32 = sadd.s32 1, %s28
    $region7: #{tpu_custom_call.1} parent=1 // loop_footer_branch
      %27 = sbr.rel target = $region3
    $region8: #{tpu_custom_call.1} parent=1 // loop_exit
      _
    %2296 = vsyncpa [#allocation5], 1
    %s2297 = scalar_lea.sflag [#allocation5], 1
    %2298 = vsyncpa %s2297, 1
    %2299 = vsyncpa [#allocation8], 1
    %2300 = vsyncpa [#allocation11], 1
    %2301 = vsyncpa [#allocation14], 1
    %2302 = vsyncpa [#allocation17], 1
    %2303 = vsyncpa [#allocation20], 1
    %2304 = vsyncpa [#allocation6], 1
    %s2305 = scalar_lea.sflag [#allocation6], 1
    %2306 = vsyncpa %s2305, 1

</llo_original>
